<compile_context>
chip_gen: v7x
topology: tpu7x:2x2x1
jax: 0.10.0
libtpu: 0.0.40
codegen_flags: <defaults>
</compile_context>

<pallas_src>
import math
import functools

import jax
import jax.numpy as jnp
from jax.experimental import pallas as pl
from jax.experimental.pallas import tpu as pltpu


# --------------------------- in-kernel helpers ------------------------------

def _layernorm(x, g, b, eps=1e-5):
    mean = jnp.mean(x, axis=-1, keepdims=True)
    xc = x - mean
    var = jnp.mean(xc * xc, axis=-1, keepdims=True)      # biased var (torch LayerNorm)
    return xc * jax.lax.rsqrt(var + eps) * g + b


def _erf(x):
    # TODO(synk): switch to lax.erf once its Mosaic lowering is guaranteed; this
    # A&S 7.1.26 polynomial (|err| < 1.5e-7) keeps nn.GELU's exact-erf semantics
    # while routing the transcendental (exp) to the EUP slot.
    p = 0.3275911
    a1, a2, a3, a4, a5 = 0.254829592, -0.284496736, 1.421413741, -1.453152027, 1.061405429
    ax = jnp.abs(x)
    t = 1.0 / (1.0 + p * ax)
    poly = ((((a5 * t + a4) * t + a3) * t + a2) * t + a1) * t
    y = 1.0 - poly * jnp.exp(-ax * ax)
    return jnp.where(x >= 0, y, -y)


def _gelu(x):
    return 0.5 * x * (1.0 + _erf(x * 0.7071067811865476))


def _mha(xq_b16, xkv_b16, wq, bq, wk, bk, wv, bv, wo, bo, bias_fn, num_heads, scale):
    """Multi-head attention on VMEM values; bf16 matmul operands, f32 accumulation.

    Fused Q/K/V and output projections (full H-wide MXU matmuls); only the
    per-head score and P.V matmuls live inside the (statically unrolled) head loop.
    """
    q = jnp.dot(xq_b16, wq, preferred_element_type=jnp.float32) + bq
    k = jnp.dot(xkv_b16, wk, preferred_element_type=jnp.float32) + bk
    v = jnp.dot(xkv_b16, wv, preferred_element_type=jnp.float32) + bv
    qb = (q * scale).astype(jnp.bfloat16)
    kb = k.astype(jnp.bfloat16)
    vb = v.astype(jnp.bfloat16)
    d = wq.shape[1] // num_heads
    heads_out = []
    for h in range(num_heads):                            # heads unrolled (static)
        sl = slice(h * d, (h + 1) * d)
        s = jax.lax.dot_general(qb[:, sl], kb[:, sl], (((1,), (1,)), ((), ())),
                                preferred_element_type=jnp.float32)
        if bias_fn is not None:
            s = s + bias_fn(h)
        m = jnp.max(s, axis=-1, keepdims=True)
        e = jnp.exp(s - m)
        attn = e * pl.reciprocal(jnp.sum(e, axis=-1, keepdims=True), approx=True)
        heads_out.append(jnp.dot(attn.astype(jnp.bfloat16), vb[:, sl],
                                 preferred_element_type=jnp.float32))
    ctx = jnp.concatenate(heads_out, axis=-1).astype(jnp.bfloat16)
    return jnp.dot(ctx, wo, preferred_element_type=jnp.float32) + bo


# ------------------------------ fused kernel --------------------------------

def _gt_fused_kernel(
        x_ref, biasT_ref, c_ref, wbias_sm, bbias_sm,
        enc_w, enc_b, gtok,
        ln1_g, ln1_b,
        lwq, lbq, lwk, lbk, lwv, lbv, lwo, lbo,
        gwq, gbq, gwk, gbk, gwv, gbv, gwo, gbo,
        ln2_gx, ln2_bx, ln2_gg, ln2_bg,
        w1x, w1g, b1, w2, b2,
        fin_g, fin_b, head_w, head_b,
        o_ref, acc_ref,
        *, num_heads, scale, hidden, bias_dim, n_nodes, n_layers):
    l = pl.program_id(1)

    # --- l == 0: node encoder + graph-token append into the resident activation
    @pl.when(l == 0)
    def _():
        feats = (jnp.dot(x_ref[...].astype(jnp.bfloat16), enc_w[...],
                         preferred_element_type=jnp.float32) + enc_b[...])
        acc_ref[0:n_nodes, :] = feats
        acc_ref[n_nodes:, :] = gtok[...]

    x = acc_ref[...]                                      # (S, H) f32

    # --- LN1 + local self-attention (Db->heads bias projection folded in) ----
    y = _layernorm(x, ln1_g[...], ln1_b[...]).astype(jnp.bfloat16)

    def local_bias(h):
        # linear_bias(attn_bias) for head h:  sum_db wbias[l,db,h]*biasT[db] + bbias[l,h]
        # bias slabs are read from VMEM per head (not hoisted across the head loop).
        b = wbias_sm[(l * bias_dim) * num_heads + h] * biasT_ref[0]
        for db in range(1, bias_dim):
            b = b + wbias_sm[(l * bias_dim + db) * num_heads + h] * biasT_ref[db]
        return b + bbias_sm[l * num_heads + h]

    y_att = _mha(y, y, lwq[...], lbq[...], lwk[...], lbk[...], lwv[...], lbv[...],
                 lwo[...], lbo[...], local_bias, num_heads, scale)
    x1 = x + y_att

    # --- global attention against centroids (bias-free); query = local output -
    g_att = _mha(y_att.astype(jnp.bfloat16), c_ref[...],
                 gwq[...], gbq[...], gwk[...], gbk[...], gwv[...], gbv[...],
                 gwo[...], gbo[...], None, num_heads, scale)
    g1 = x1 + g_att

    # --- LayerNorm over concat([x1, g1], -1) without materializing the concat -
    inv2h = 1.0 / (2.0 * hidden)
    mean = (jnp.sum(x1, axis=-1, keepdims=True)
            + jnp.sum(g1, axis=-1, keepdims=True)) * inv2h
    xc = x1 - mean
    gc = g1 - mean
    var = (jnp.sum(xc * xc, axis=-1, keepdims=True)
           + jnp.sum(gc * gc, axis=-1, keepdims=True)) * inv2h
    inv = jax.lax.rsqrt(var + 1e-5)
    xn = (xc * inv * ln2_gx[...] + ln2_bx[...]).astype(jnp.bfloat16)
    gn = (gc * inv * ln2_gg[...] + ln2_bg[...]).astype(jnp.bfloat16)

    # --- FFN (layer1 split across the two concat halves) + GELU + residual ----
    hmid = (jnp.dot(xn, w1x[...], preferred_element_type=jnp.float32)
            + jnp.dot(gn, w1g[...], preferred_element_type=jnp.float32) + b1[...])
    hmid = _gelu(hmid).astype(jnp.bfloat16)
    hout = jnp.dot(hmid, w2[...], preferred_element_type=jnp.float32) + b2[...]
    new_x = x1 + hout
    acc_ref[...] = new_x

    # --- last layer: final LN on CLS row + projection + log_softmax -----------
    @pl.when(l == n_layers - 1)
    def _():
        cls = _layernorm(new_x[0:1, :], fin_g[...], fin_b[...]).astype(jnp.bfloat16)
        z = (jnp.dot(cls, head_w[...], preferred_element_type=jnp.float32)
             + head_b[...])                               # padding lanes biased to -1e30
        m = jnp.max(z, axis=-1, keepdims=True)
        sh = z - m
        lse = jnp.log(jnp.sum(jnp.exp(sh), axis=-1, keepdims=True))
        o_ref[...] = sh - lse


# ------------------------------ forward --------------------------------------

def gt_forward(params, x, attn_bias, cfg):
    heads = cfg["num_heads"]
    Ng = cfg["num_global_node"]
    Db = cfg["attn_bias_dim"]
    H = cfg["hidden_dim"]
    L = cfg["n_layers"]
    out_dim = cfg["output_dim"]
    G, N, Din = x.shape
    S = N + Ng
    Nc = params["vq_k"].shape[0]
    F = params["layers"]["w1x"].shape[2]
    scale = (H // heads) ** (-0.5)
    out_pad = ((out_dim + 127) // 128) * 128

    # Augmented attention bias, transposed to (G, Db, S, S) and cast to bf16 (it is
    # the largest per-graph stream); the Db->heads projection folds into SMEM FMAs.
    vd_t = params["virtual_dist"].T                                    # (Db, Ng)
    gab = jnp.transpose(attn_bias, (0, 3, 1, 2))                       # (G, Db, N, N)
    gab = jnp.concatenate(
        [gab, jnp.broadcast_to(vd_t[None, :, :, None], (G, Db, Ng, N))], axis=2)
    gab = jnp.concatenate(
        [gab, jnp.broadcast_to(vd_t[None, :, None, :], (G, Db, S, Ng))], axis=3)
    gab = gab.astype(jnp.bfloat16)

    c = params["vq_k"].astype(jnp.bfloat16)               # VQ centroids (Nc, H)

    # Lane-dense classification head: pad the projection to a 128-lane multiple;
    # padding lanes get a -1e30 bias so log_softmax ignores them (sliced off below).
    head_w = jnp.zeros((H, out_pad), jnp.bfloat16).at[:, :out_dim].set(params["out_w"])
    head_b = jnp.full((1, out_pad), -1e30, jnp.float32).at[:, :out_dim].set(params["out_b"])

    lp = params["layers"]
    layer_args = (
        lp["ln1_g"], lp["ln1_b"],
        lp["lwq"], lp["lbq"], lp["lwk"], lp["lbk"], lp["lwv"], lp["lbv"],
        lp["lwo"], lp["lbo"],
        lp["gwq"], lp["gbq"], lp["gwk"], lp["gbk"], lp["gwv"], lp["gbv"],
        lp["gwo"], lp["gbo"],
        lp["ln2_gx"], lp["ln2_bx"], lp["ln2_gg"], lp["ln2_bg"],
        lp["w1x"], lp["w1g"], lp["b1"], lp["w2"], lp["b2"],
    )
    head_args = (params["final_g"], params["final_b"], head_w, head_b)

    smem = pl.BlockSpec(memory_space=pltpu.MemorySpace.SMEM)

    def inv(a):        # grid-invariant full-array block (DMA'd once, reused)
        zeros = (0,) * a.ndim
        return pl.BlockSpec(a.shape, lambda g, l, _z=zeros: _z)

    def per_layer(a):  # (L, ...) stacked param: one layer slab per inner grid step
        zeros = (0,) * (a.ndim - 1)
        return pl.BlockSpec((None,) + a.shape[1:], lambda g, l, _z=zeros: (l,) + _z)

    kern = functools.partial(_gt_fused_kernel, num_heads=heads, scale=scale,
                             hidden=H, bias_dim=Db, n_nodes=N, n_layers=L)

    # Explicit VMEM budget (v7x physical VMEM is 64 MiB): double-buffered streamed
    # blocks + bf16 per-layer weights + resident activation + in-flight temporaries.
    lw_bytes = (8 * H * H + 3 * H * F) * 2 + (13 * H + F) * 4
    est = (2 * N * Din * 4 + 2 * Db * S * S * 2 + 2 * lw_bytes
           + 7 * S * H * 4 + 3 * S * max(S, 128) * 4
           + 2 * (Nc * H * 2 + Din * H * 2 + (H * 2 + 4) * out_pad))
    vmem_limit = int(min(64 << 20, max(32 << 20, 2 * est)))

    # TODO(synk): for S >~ 1k, tile the local-attention Skv axis (flash-style online
    # softmax) and stream biasT column blocks; on v5e consider pl.Buffered(3) on the
    # x / biasT in_specs if the per-graph DMA shows up exposed.
    out = pl.pallas_call(
        kern,
        out_shape=jax.ShapeDtypeStruct((G, 1, out_pad), jnp.float32),
        grid=(G, L),
        in_specs=[
            pl.BlockSpec((None, N, Din), lambda g, l: (g, 0, 0)),        # x (per graph)
            pl.BlockSpec((None, Db, S, S), lambda g, l: (g, 0, 0, 0)),   # bias (per graph)
            inv(c),                                                      # centroids
            smem, smem,                                                  # wbias, bbias
            inv(params["enc_w"]), inv(params["enc_b"]), inv(params["graph_token"]),
        ] + [per_layer(a) for a in layer_args] + [inv(a) for a in head_args],
        out_specs=pl.BlockSpec((None, 1, out_pad), lambda g, l: (g, 0, 0)),
        scratch_shapes=[pltpu.VMEM((S, H), jnp.float32)],     # layer-resident activation
        compiler_params=pltpu.CompilerParams(
            dimension_semantics=("parallel", "arbitrary"),
            vmem_limit_bytes=vmem_limit),
    )(x, gab, c, params["wbias"], params["bbias"],
      params["enc_w"], params["enc_b"], params["graph_token"],
      *layer_args, *head_args)

    return out[:, 0, :out_dim]


# ----------------------- deterministic parameter init ------------------------

def init_gt_params(key, cfg):
    L = cfg["n_layers"]
    H, Din, Dout = cfg["hidden_dim"], cfg["input_dim"], cfg["output_dim"]
    Db, F, heads = cfg["attn_bias_dim"], cfg["ffn_dim"], cfg["num_heads"]
    Ng, Nc = cfg["num_global_node"], cfg["num_centroids"]
    std = 0.02 / math.sqrt(L)
    keys = iter(jax.random.split(key, 256))

    def w(shape):                               # bf16 matmul weight (f32 accumulate)
        return (std * jax.random.normal(next(keys), shape, jnp.float32)).astype(jnp.bfloat16)

    def wstack(shape):                          # per-layer stacked bf16 weight
        return jnp.stack([w(shape) for _ in range(L)])

    zeros = lambda shape: jnp.zeros(shape, jnp.float32)
    ones = lambda shape: jnp.ones(shape, jnp.float32)

    layers = dict(
        ln1_g=ones((L, 1, H)), ln1_b=zeros((L, 1, H)),
        lwq=wstack((H, H)), lbq=zeros((L, 1, H)),
        lwk=wstack((H, H)), lbk=zeros((L, 1, H)),
        lwv=wstack((H, H)), lbv=zeros((L, 1, H)),
        lwo=wstack((H, H)), lbo=zeros((L, 1, H)),
        gwq=wstack((H, H)), gbq=zeros((L, 1, H)),
        gwk=wstack((H, H)), gbk=zeros((L, 1, H)),
        gwv=wstack((H, H)), gbv=zeros((L, 1, H)),
        gwo=wstack((H, H)), gbo=zeros((L, 1, H)),
        ln2_gx=ones((L, 1, H)), ln2_bx=zeros((L, 1, H)),
        ln2_gg=ones((L, 1, H)), ln2_bg=zeros((L, 1, H)),
        w1x=wstack((H, F)), w1g=wstack((H, F)), b1=zeros((L, 1, F)),
        w2=wstack((F, H)), b2=zeros((L, 1, H)))

    # linear_bias (Db -> heads) weights/biases, flattened for SMEM scalar reads.
    wbias = std * jax.random.normal(next(keys), (L, Db, heads), jnp.float32)

    return dict(
        enc_w=w((Din, H)), enc_b=zeros((1, H)),
        layers=layers,
        wbias=wbias.reshape(-1), bbias=zeros((L * heads,)),
        final_g=ones((1, H)), final_b=zeros((1, H)),
        out_w=w((H, Dout)), out_b=zeros((1, Dout)),
        graph_token=0.02 * jax.random.normal(next(keys), (Ng, H), jnp.float32),
        virtual_dist=0.02 * jax.random.normal(next(keys), (Ng, Db), jnp.float32),
        vq_k=jax.random.uniform(next(keys), (Nc, H), jnp.float32))  # VQ buffer (torch.rand)


if __name__ == "__main__":
    cfg = dict(n_layers=2, num_heads=4, input_dim=16, hidden_dim=32, output_dim=10,
               attn_bias_dim=6, ffn_dim=64, num_global_node=1, num_centroids=8)
    key = jax.random.PRNGKey(0)
    kp, kx, kb = jax.random.split(key, 3)
    params = init_gt_params(kp, cfg)

    G, N = 2, 8
    x = jax.random.normal(kx, (G, N, cfg["input_dim"]), jnp.float32)
    attn_bias = jax.random.normal(kb, (G, N, N, cfg["attn_bias_dim"]), jnp.float32)

    fwd = jax.jit(functools.partial(gt_forward, cfg=cfg))
    out = jax.block_until_ready(fwd(params, x, attn_bias))
    assert out.shape == (G, cfg["output_dim"])
    assert bool(jnp.all(jnp.isfinite(out)))
    print("KERNEL_OK")
</pallas_src>

<mosaic_0001>
module attributes {stable_mosaic.version = 11 : i64} {
  func.func @_gt_fused_kernel(%arg0: i32, %arg1: i32, %arg2: memref<1x8x16xf32, #tpu.memory_space<vmem>>, %arg3: memref<1x6x9x9xbf16, #tpu.memory_space<vmem>>, %arg4: memref<8x32xbf16, #tpu.memory_space<vmem>>, %arg5: memref<48xf32, #tpu.memory_space<smem>>, %arg6: memref<8xf32, #tpu.memory_space<smem>>, %arg7: memref<16x32xbf16, #tpu.memory_space<vmem>>, %arg8: memref<1x32xf32, #tpu.memory_space<vmem>>, %arg9: memref<1x32xf32, #tpu.memory_space<vmem>>, %arg10: memref<1x1x32xf32, #tpu.memory_space<vmem>>, %arg11: memref<1x1x32xf32, #tpu.memory_space<vmem>>, %arg12: memref<1x32x32xbf16, #tpu.memory_space<vmem>>, %arg13: memref<1x1x32xf32, #tpu.memory_space<vmem>>, %arg14: memref<1x32x32xbf16, #tpu.memory_space<vmem>>, %arg15: memref<1x1x32xf32, #tpu.memory_space<vmem>>, %arg16: memref<1x32x32xbf16, #tpu.memory_space<vmem>>, %arg17: memref<1x1x32xf32, #tpu.memory_space<vmem>>, %arg18: memref<1x32x32xbf16, #tpu.memory_space<vmem>>, %arg19: memref<1x1x32xf32, #tpu.memory_space<vmem>>, %arg20: memref<1x32x32xbf16, #tpu.memory_space<vmem>>, %arg21: memref<1x1x32xf32, #tpu.memory_space<vmem>>, %arg22: memref<1x32x32xbf16, #tpu.memory_space<vmem>>, %arg23: memref<1x1x32xf32, #tpu.memory_space<vmem>>, %arg24: memref<1x32x32xbf16, #tpu.memory_space<vmem>>, %arg25: memref<1x1x32xf32, #tpu.memory_space<vmem>>, %arg26: memref<1x32x32xbf16, #tpu.memory_space<vmem>>, %arg27: memref<1x1x32xf32, #tpu.memory_space<vmem>>, %arg28: memref<1x1x32xf32, #tpu.memory_space<vmem>>, %arg29: memref<1x1x32xf32, #tpu.memory_space<vmem>>, %arg30: memref<1x1x32xf32, #tpu.memory_space<vmem>>, %arg31: memref<1x1x32xf32, #tpu.memory_space<vmem>>, %arg32: memref<1x32x64xbf16, #tpu.memory_space<vmem>>, %arg33: memref<1x32x64xbf16, #tpu.memory_space<vmem>>, %arg34: memref<1x1x64xf32, #tpu.memory_space<vmem>>, %arg35: memref<1x64x32xbf16, #tpu.memory_space<vmem>>, %arg36: memref<1x1x32xf32, #tpu.memory_space<vmem>>, %arg37: memref<1x32xf32, #tpu.memory_space<vmem>>, %arg38: memref<1x32xf32, #tpu.memory_space<vmem>>, %arg39: memref<32x128xbf16, #tpu.memory_space<vmem>>, %arg40: memref<1x128xf32, #tpu.memory_space<vmem>>, %arg41: memref<1x1x128xf32, #tpu.memory_space<vmem>>, %arg42: memref<9x32xf32, #tpu.memory_space<vmem>>) attributes {dimension_semantics = [#tpu.dimension_semantics<parallel>, #tpu.dimension_semantics<arbitrary>], iteration_bounds = array<i64: 2, 2>, scalar_prefetch = 0 : i64, scratch_operands = 1 : i64, tpu.core_type = #tpu.core_type<tc>, window_params = [{transform_indices = @transform_0, window_bounds = array<i64: 1, 8, 16>}, {transform_indices = @transform_1, window_bounds = array<i64: 1, 6, 9, 9>}, {pipeline_mode = #tpu.pipeline_mode<synchronous>, transform_indices = @transform_2, window_bounds = array<i64: 8, 32>}, {transform_indices = @transform_3, window_bounds = array<i64: 48>}, {transform_indices = @transform_4, window_bounds = array<i64: 8>}, {pipeline_mode = #tpu.pipeline_mode<synchronous>, transform_indices = @transform_5, window_bounds = array<i64: 16, 32>}, {pipeline_mode = #tpu.pipeline_mode<synchronous>, transform_indices = @transform_6, window_bounds = array<i64: 1, 32>}, {pipeline_mode = #tpu.pipeline_mode<synchronous>, transform_indices = @transform_7, window_bounds = array<i64: 1, 32>}, {transform_indices = @transform_8, window_bounds = array<i64: 1, 1, 32>}, {transform_indices = @transform_9, window_bounds = array<i64: 1, 1, 32>}, {transform_indices = @transform_10, window_bounds = array<i64: 1, 32, 32>}, {transform_indices = @transform_11, window_bounds = array<i64: 1, 1, 32>}, {transform_indices = @transform_12, window_bounds = array<i64: 1, 32, 32>}, {transform_indices = @transform_13, window_bounds = array<i64: 1, 1, 32>}, {transform_indices = @transform_14, window_bounds = array<i64: 1, 32, 32>}, {transform_indices = @transform_15, window_bounds = array<i64: 1, 1, 32>}, {transform_indices = @transform_16, window_bounds = array<i64: 1, 32, 32>}, {transform_indices = @transform_17, window_bounds = array<i64: 1, 1, 32>}, {transform_indices = @transform_18, window_bounds = array<i64: 1, 32, 32>}, {transform_indices = @transform_19, window_bounds = array<i64: 1, 1, 32>}, {transform_indices = @transform_20, window_bounds = array<i64: 1, 32, 32>}, {transform_indices = @transform_21, window_bounds = array<i64: 1, 1, 32>}, {transform_indices = @transform_22, window_bounds = array<i64: 1, 32, 32>}, {transform_indices = @transform_23, window_bounds = array<i64: 1, 1, 32>}, {transform_indices = @transform_24, window_bounds = array<i64: 1, 32, 32>}, {transform_indices = @transform_25, window_bounds = array<i64: 1, 1, 32>}, {transform_indices = @transform_26, window_bounds = array<i64: 1, 1, 32>}, {transform_indices = @transform_27, window_bounds = array<i64: 1, 1, 32>}, {transform_indices = @transform_28, window_bounds = array<i64: 1, 1, 32>}, {transform_indices = @transform_29, window_bounds = array<i64: 1, 1, 32>}, {transform_indices = @transform_30, window_bounds = array<i64: 1, 32, 64>}, {transform_indices = @transform_31, window_bounds = array<i64: 1, 32, 64>}, {transform_indices = @transform_32, window_bounds = array<i64: 1, 1, 64>}, {transform_indices = @transform_33, window_bounds = array<i64: 1, 64, 32>}, {transform_indices = @transform_34, window_bounds = array<i64: 1, 1, 32>}, {pipeline_mode = #tpu.pipeline_mode<synchronous>, transform_indices = @transform_35, window_bounds = array<i64: 1, 32>}, {pipeline_mode = #tpu.pipeline_mode<synchronous>, transform_indices = @transform_36, window_bounds = array<i64: 1, 32>}, {pipeline_mode = #tpu.pipeline_mode<synchronous>, transform_indices = @transform_37, window_bounds = array<i64: 32, 128>}, {pipeline_mode = #tpu.pipeline_mode<synchronous>, transform_indices = @transform_38, window_bounds = array<i64: 1, 128>}, {transform_indices = @transform_39, window_bounds = array<i64: 1, 1, 128>}]} {
    %c0_i32 = arith.constant 0 : i32
    %0 = arith.cmpi eq, %arg1, %c0_i32 : i32
    %1 = arith.extui %0 : i1 to i32
    %c0_i32_0 = arith.constant 0 : i32
    %2 = arith.cmpi ne, %1, %c0_i32_0 : i32
    scf.if %2 {
      %c0_345 = arith.constant 0 : index
      %c0_346 = arith.constant 0 : index
      %c0_347 = arith.constant 0 : index
      %648 = vector.load %arg2[%c0_345, %c0_346, %c0_347] : memref<1x8x16xf32, #tpu.memory_space<vmem>>, vector<1x8x16xf32>
      %649 = vector.shape_cast %648 : vector<1x8x16xf32> to vector<8x16xf32>
      %650 = arith.truncf %649 : vector<8x16xf32> to vector<8x16xbf16>
      %c0_348 = arith.constant 0 : index
      %c0_349 = arith.constant 0 : index
      %651 = vector.load %arg7[%c0_348, %c0_349] : memref<16x32xbf16, #tpu.memory_space<vmem>>, vector<16x32xbf16>
      %cst_350 = arith.constant dense<0.000000e+00> : vector<8x32xf32>
      %652 = tpu.matmul %650, %651, %cst_350 {dimension_numbers = #tpu.dot_dimension_numbers<[1], [0], [0], [1], [0, 0, 1, 1], [], []>} : vector<8x16xbf16>, vector<16x32xbf16>, vector<8x32xf32> -> vector<8x32xf32>
      %c0_351 = arith.constant 0 : index
      %c0_352 = arith.constant 0 : index
      %653 = vector.load %arg8[%c0_351, %c0_352] : memref<1x32xf32, #tpu.memory_space<vmem>>, vector<1x32xf32>
      %654 = vector.broadcast %653 : vector<1x32xf32> to vector<8x32xf32>
      %655 = arith.addf %652, %654 : vector<8x32xf32>
      %c0_353 = arith.constant 0 : index
      %c0_354 = arith.constant 0 : index
      %656 = vector.load %arg42[%c0_353, %c0_354] : memref<9x32xf32, #tpu.memory_space<vmem>>, vector<8x32xf32>
      tpu.vector_store %arg42[%c0_353, %c0_354], %655 {strides = array<i32>} : memref<9x32xf32, #tpu.memory_space<vmem>>, vector<8x32xf32>,
      %c0_355 = arith.constant 0 : index
      %c0_356 = arith.constant 0 : index
      %657 = vector.load %arg9[%c0_355, %c0_356] : memref<1x32xf32, #tpu.memory_space<vmem>>, vector<1x32xf32>
      %c8 = arith.constant 8 : index
      %c0_357 = arith.constant 0 : index
      %658 = vector.load %arg42[%c8, %c0_357] : memref<9x32xf32, #tpu.memory_space<vmem>>, vector<1x32xf32>
      tpu.vector_store %arg42[%c8, %c0_357], %657 {strides = array<i32>} : memref<9x32xf32, #tpu.memory_space<vmem>>, vector<1x32xf32>,
    } else {
    }
    %c0 = arith.constant 0 : index
    %c0_1 = arith.constant 0 : index
    %3 = vector.load %arg42[%c0, %c0_1] : memref<9x32xf32, #tpu.memory_space<vmem>>, vector<9x32xf32>
    %c0_2 = arith.constant 0 : index
    %c0_3 = arith.constant 0 : index
    %c0_4 = arith.constant 0 : index
    %4 = vector.load %arg10[%c0_2, %c0_3, %c0_4] : memref<1x1x32xf32, #tpu.memory_space<vmem>>, vector<1x1x32xf32>
    %5 = vector.shape_cast %4 : vector<1x1x32xf32> to vector<1x32xf32>
    %c0_5 = arith.constant 0 : index
    %c0_6 = arith.constant 0 : index
    %c0_7 = arith.constant 0 : index
    %6 = vector.load %arg11[%c0_5, %c0_6, %c0_7] : memref<1x1x32xf32, #tpu.memory_space<vmem>>, vector<1x1x32xf32>
    %7 = vector.shape_cast %6 : vector<1x1x32xf32> to vector<1x32xf32>
    %cst = arith.constant dense<0.000000e+00> : vector<9xf32>
    %8 = vector.multi_reduction <add>, %3, %cst [1] : vector<9x32xf32> to vector<9xf32>
    %9 = vector.shape_cast %8 : vector<9xf32> to vector<9x1xf32>
    %cst_8 = arith.constant 3.200000e+01 : f32
    %10 = vector.broadcast %cst_8 : f32 to vector<9x1xf32>
    %11 = arith.divf %9, %10 : vector<9x1xf32>
    %12 = vector.broadcast %11 : vector<9x1xf32> to vector<9x32xf32>
    %13 = arith.subf %3, %12 : vector<9x32xf32>
    %14 = arith.mulf %13, %13 : vector<9x32xf32>
    %cst_9 = arith.constant dense<0.000000e+00> : vector<9xf32>
    %15 = vector.multi_reduction <add>, %14, %cst_9 [1] : vector<9x32xf32> to vector<9xf32>
    %16 = vector.shape_cast %15 : vector<9xf32> to vector<9x1xf32>
    %cst_10 = arith.constant 3.200000e+01 : f32
    %17 = vector.broadcast %cst_10 : f32 to vector<9x1xf32>
    %18 = arith.divf %16, %17 : vector<9x1xf32>
    %cst_11 = arith.constant 9.99999974E-6 : f32
    %19 = vector.broadcast %cst_11 : f32 to vector<9x1xf32>
    %20 = arith.addf %18, %19 : vector<9x1xf32>
    %21 = math.rsqrt %20 : vector<9x1xf32>
    %22 = vector.broadcast %21 : vector<9x1xf32> to vector<9x32xf32>
    %23 = arith.mulf %13, %22 : vector<9x32xf32>
    %24 = vector.broadcast %5 : vector<1x32xf32> to vector<9x32xf32>
    %25 = arith.mulf %23, %24 : vector<9x32xf32>
    %26 = vector.broadcast %7 : vector<1x32xf32> to vector<9x32xf32>
    %27 = arith.addf %25, %26 : vector<9x32xf32>
    %28 = arith.truncf %27 : vector<9x32xf32> to vector<9x32xbf16>
    %c0_12 = arith.constant 0 : index
    %c0_13 = arith.constant 0 : index
    %c0_14 = arith.constant 0 : index
    %29 = vector.load %arg12[%c0_12, %c0_13, %c0_14] : memref<1x32x32xbf16, #tpu.memory_space<vmem>>, vector<1x32x32xbf16>
    %30 = vector.shape_cast %29 : vector<1x32x32xbf16> to vector<32x32xbf16>
    %c0_15 = arith.constant 0 : index
    %c0_16 = arith.constant 0 : index
    %c0_17 = arith.constant 0 : index
    %31 = vector.load %arg13[%c0_15, %c0_16, %c0_17] : memref<1x1x32xf32, #tpu.memory_space<vmem>>, vector<1x1x32xf32>
    %32 = vector.shape_cast %31 : vector<1x1x32xf32> to vector<1x32xf32>
    %c0_18 = arith.constant 0 : index
    %c0_19 = arith.constant 0 : index
    %c0_20 = arith.constant 0 : index
    %33 = vector.load %arg14[%c0_18, %c0_19, %c0_20] : memref<1x32x32xbf16, #tpu.memory_space<vmem>>, vector<1x32x32xbf16>
    %34 = vector.shape_cast %33 : vector<1x32x32xbf16> to vector<32x32xbf16>
    %c0_21 = arith.constant 0 : index
    %c0_22 = arith.constant 0 : index
    %c0_23 = arith.constant 0 : index
    %35 = vector.load %arg15[%c0_21, %c0_22, %c0_23] : memref<1x1x32xf32, #tpu.memory_space<vmem>>, vector<1x1x32xf32>
    %36 = vector.shape_cast %35 : vector<1x1x32xf32> to vector<1x32xf32>
    %c0_24 = arith.constant 0 : index
    %c0_25 = arith.constant 0 : index
    %c0_26 = arith.constant 0 : index
    %37 = vector.load %arg16[%c0_24, %c0_25, %c0_26] : memref<1x32x32xbf16, #tpu.memory_space<vmem>>, vector<1x32x32xbf16>
    %38 = vector.shape_cast %37 : vector<1x32x32xbf16> to vector<32x32xbf16>
    %c0_27 = arith.constant 0 : index
    %c0_28 = arith.constant 0 : index
    %c0_29 = arith.constant 0 : index
    %39 = vector.load %arg17[%c0_27, %c0_28, %c0_29] : memref<1x1x32xf32, #tpu.memory_space<vmem>>, vector<1x1x32xf32>
    %40 = vector.shape_cast %39 : vector<1x1x32xf32> to vector<1x32xf32>
    %c0_30 = arith.constant 0 : index
    %c0_31 = arith.constant 0 : index
    %c0_32 = arith.constant 0 : index
    %41 = vector.load %arg18[%c0_30, %c0_31, %c0_32] : memref<1x32x32xbf16, #tpu.memory_space<vmem>>, vector<1x32x32xbf16>
    %42 = vector.shape_cast %41 : vector<1x32x32xbf16> to vector<32x32xbf16>
    %c0_33 = arith.constant 0 : index
    %c0_34 = arith.constant 0 : index
    %c0_35 = arith.constant 0 : index
    %43 = vector.load %arg19[%c0_33, %c0_34, %c0_35] : memref<1x1x32xf32, #tpu.memory_space<vmem>>, vector<1x1x32xf32>
    %44 = vector.shape_cast %43 : vector<1x1x32xf32> to vector<1x32xf32>
    %cst_36 = arith.constant dense<0.000000e+00> : vector<9x32xf32>
    %45 = tpu.matmul %28, %30, %cst_36 {dimension_numbers = #tpu.dot_dimension_numbers<[1], [0], [0], [1], [0, 0, 1, 1], [], []>} : vector<9x32xbf16>, vector<32x32xbf16>, vector<9x32xf32> -> vector<9x32xf32>
    %46 = vector.broadcast %32 : vector<1x32xf32> to vector<9x32xf32>
    %47 = arith.addf %45, %46 : vector<9x32xf32>
    %cst_37 = arith.constant dense<0.000000e+00> : vector<9x32xf32>
    %48 = tpu.matmul %28, %34, %cst_37 {dimension_numbers = #tpu.dot_dimension_numbers<[1], [0], [0], [1], [0, 0, 1, 1], [], []>} : vector<9x32xbf16>, vector<32x32xbf16>, vector<9x32xf32> -> vector<9x32xf32>
    %49 = vector.broadcast %36 : vector<1x32xf32> to vector<9x32xf32>
    %50 = arith.addf %48, %49 : vector<9x32xf32>
    %cst_38 = arith.constant dense<0.000000e+00> : vector<9x32xf32>
    %51 = tpu.matmul %28, %38, %cst_38 {dimension_numbers = #tpu.dot_dimension_numbers<[1], [0], [0], [1], [0, 0, 1, 1], [], []>} : vector<9x32xbf16>, vector<32x32xbf16>, vector<9x32xf32> -> vector<9x32xf32>
    %52 = vector.broadcast %40 : vector<1x32xf32> to vector<9x32xf32>
    %53 = arith.addf %51, %52 : vector<9x32xf32>
    %cst_39 = arith.constant 0.353553385 : f32
    %54 = vector.broadcast %cst_39 : f32 to vector<9x32xf32>
    %55 = arith.mulf %47, %54 : vector<9x32xf32>
    %56 = arith.truncf %55 : vector<9x32xf32> to vector<9x32xbf16>
    %57 = arith.truncf %50 : vector<9x32xf32> to vector<9x32xbf16>
    %58 = arith.truncf %53 : vector<9x32xf32> to vector<9x32xbf16>
    %59 = vector.extract_strided_slice %56 {offsets = [0, 0], sizes = [9, 8], strides = [1, 1]} : vector<9x32xbf16> to vector<9x8xbf16>
    %60 = vector.extract_strided_slice %57 {offsets = [0, 0], sizes = [9, 8], strides = [1, 1]} : vector<9x32xbf16> to vector<9x8xbf16>
    %cst_40 = arith.constant dense<0.000000e+00> : vector<9x9xf32>
    %61 = tpu.matmul %59, %60, %cst_40 {dimension_numbers = #tpu.dot_dimension_numbers<[1], [1], [0], [0], [0, 0, 1, 0], [], []>} : vector<9x8xbf16>, vector<9x8xbf16>, vector<9x9xf32> -> vector<9x9xf32>
    %c6_i32 = arith.constant 6 : i32
    %62 = arith.muli %arg1, %c6_i32 : i32
    %c4_i32 = arith.constant 4 : i32
    %63 = arith.muli %62, %c4_i32 : i32
    %c0_i32_41 = arith.constant 0 : i32
    %64 = arith.addi %63, %c0_i32_41 : i32
    %65 = arith.index_cast %64 : i32 to index
    %66 = memref.load %arg5[%65] : memref<48xf32, #tpu.memory_space<smem>>
    %c0_42 = arith.constant 0 : index
    %c0_43 = arith.constant 0 : index
    %c0_44 = arith.constant 0 : index
    %c0_45 = arith.constant 0 : index
    %67 = vector.load %arg3[%c0_42, %c0_43, %c0_44, %c0_45] : memref<1x6x9x9xbf16, #tpu.memory_space<vmem>>, vector<1x1x9x9xbf16>
    %68 = vector.shape_cast %67 : vector<1x1x9x9xbf16> to vector<9x9xbf16>
    %69 = arith.extf %68 : vector<9x9xbf16> to vector<9x9xf32>
    %70 = vector.broadcast %66 : f32 to vector<9x9xf32>
    %71 = arith.mulf %70, %69 : vector<9x9xf32>
    %c6_i32_46 = arith.constant 6 : i32
    %72 = arith.muli %arg1, %c6_i32_46 : i32
    %c1_i32 = arith.constant 1 : i32
    %73 = arith.addi %72, %c1_i32 : i32
    %c4_i32_47 = arith.constant 4 : i32
    %74 = arith.muli %73, %c4_i32_47 : i32
    %c0_i32_48 = arith.constant 0 : i32
    %75 = arith.addi %74, %c0_i32_48 : i32
    %76 = arith.index_cast %75 : i32 to index
    %77 = memref.load %arg5[%76] : memref<48xf32, #tpu.memory_space<smem>>
    %c0_49 = arith.constant 0 : index
    %c1 = arith.constant 1 : index
    %c0_50 = arith.constant 0 : index
    %c0_51 = arith.constant 0 : index
    %78 = vector.load %arg3[%c0_49, %c1, %c0_50, %c0_51] : memref<1x6x9x9xbf16, #tpu.memory_space<vmem>>, vector<1x1x9x9xbf16>
    %79 = vector.shape_cast %78 : vector<1x1x9x9xbf16> to vector<9x9xbf16>
    %80 = arith.extf %79 : vector<9x9xbf16> to vector<9x9xf32>
    %81 = vector.broadcast %77 : f32 to vector<9x9xf32>
    %82 = arith.mulf %81, %80 : vector<9x9xf32>
    %83 = arith.addf %71, %82 : vector<9x9xf32>
    %c6_i32_52 = arith.constant 6 : i32
    %84 = arith.muli %arg1, %c6_i32_52 : i32
    %c2_i32 = arith.constant 2 : i32
    %85 = arith.addi %84, %c2_i32 : i32
    %c4_i32_53 = arith.constant 4 : i32
    %86 = arith.muli %85, %c4_i32_53 : i32
    %c0_i32_54 = arith.constant 0 : i32
    %87 = arith.addi %86, %c0_i32_54 : i32
    %88 = arith.index_cast %87 : i32 to index
    %89 = memref.load %arg5[%88] : memref<48xf32, #tpu.memory_space<smem>>
    %c0_55 = arith.constant 0 : index
    %c2 = arith.constant 2 : index
    %c0_56 = arith.constant 0 : index
    %c0_57 = arith.constant 0 : index
    %90 = vector.load %arg3[%c0_55, %c2, %c0_56, %c0_57] : memref<1x6x9x9xbf16, #tpu.memory_space<vmem>>, vector<1x1x9x9xbf16>
    %91 = vector.shape_cast %90 : vector<1x1x9x9xbf16> to vector<9x9xbf16>
    %92 = arith.extf %91 : vector<9x9xbf16> to vector<9x9xf32>
    %93 = vector.broadcast %89 : f32 to vector<9x9xf32>
    %94 = arith.mulf %93, %92 : vector<9x9xf32>
    %95 = arith.addf %83, %94 : vector<9x9xf32>
    %c6_i32_58 = arith.constant 6 : i32
    %96 = arith.muli %arg1, %c6_i32_58 : i32
    %c3_i32 = arith.constant 3 : i32
    %97 = arith.addi %96, %c3_i32 : i32
    %c4_i32_59 = arith.constant 4 : i32
    %98 = arith.muli %97, %c4_i32_59 : i32
    %c0_i32_60 = arith.constant 0 : i32
    %99 = arith.addi %98, %c0_i32_60 : i32
    %100 = arith.index_cast %99 : i32 to index
    %101 = memref.load %arg5[%100] : memref<48xf32, #tpu.memory_space<smem>>
    %c0_61 = arith.constant 0 : index
    %c3 = arith.constant 3 : index
    %c0_62 = arith.constant 0 : index
    %c0_63 = arith.constant 0 : index
    %102 = vector.load %arg3[%c0_61, %c3, %c0_62, %c0_63] : memref<1x6x9x9xbf16, #tpu.memory_space<vmem>>, vector<1x1x9x9xbf16>
    %103 = vector.shape_cast %102 : vector<1x1x9x9xbf16> to vector<9x9xbf16>
    %104 = arith.extf %103 : vector<9x9xbf16> to vector<9x9xf32>
    %105 = vector.broadcast %101 : f32 to vector<9x9xf32>
    %106 = arith.mulf %105, %104 : vector<9x9xf32>
    %107 = arith.addf %95, %106 : vector<9x9xf32>
    %c6_i32_64 = arith.constant 6 : i32
    %108 = arith.muli %arg1, %c6_i32_64 : i32
    %c4_i32_65 = arith.constant 4 : i32
    %109 = arith.addi %108, %c4_i32_65 : i32
    %c4_i32_66 = arith.constant 4 : i32
    %110 = arith.muli %109, %c4_i32_66 : i32
    %c0_i32_67 = arith.constant 0 : i32
    %111 = arith.addi %110, %c0_i32_67 : i32
    %112 = arith.index_cast %111 : i32 to index
    %113 = memref.load %arg5[%112] : memref<48xf32, #tpu.memory_space<smem>>
    %c0_68 = arith.constant 0 : index
    %c4 = arith.constant 4 : index
    %c0_69 = arith.constant 0 : index
    %c0_70 = arith.constant 0 : index
    %114 = vector.load %arg3[%c0_68, %c4, %c0_69, %c0_70] : memref<1x6x9x9xbf16, #tpu.memory_space<vmem>>, vector<1x1x9x9xbf16>
    %115 = vector.shape_cast %114 : vector<1x1x9x9xbf16> to vector<9x9xbf16>
    %116 = arith.extf %115 : vector<9x9xbf16> to vector<9x9xf32>
    %117 = vector.broadcast %113 : f32 to vector<9x9xf32>
    %118 = arith.mulf %117, %116 : vector<9x9xf32>
    %119 = arith.addf %107, %118 : vector<9x9xf32>
    %c6_i32_71 = arith.constant 6 : i32
    %120 = arith.muli %arg1, %c6_i32_71 : i32
    %c5_i32 = arith.constant 5 : i32
    %121 = arith.addi %120, %c5_i32 : i32
    %c4_i32_72 = arith.constant 4 : i32
    %122 = arith.muli %121, %c4_i32_72 : i32
    %c0_i32_73 = arith.constant 0 : i32
    %123 = arith.addi %122, %c0_i32_73 : i32
    %124 = arith.index_cast %123 : i32 to index
    %125 = memref.load %arg5[%124] : memref<48xf32, #tpu.memory_space<smem>>
    %c0_74 = arith.constant 0 : index
    %c5 = arith.constant 5 : index
    %c0_75 = arith.constant 0 : index
    %c0_76 = arith.constant 0 : index
    %126 = vector.load %arg3[%c0_74, %c5, %c0_75, %c0_76] : memref<1x6x9x9xbf16, #tpu.memory_space<vmem>>, vector<1x1x9x9xbf16>
    %127 = vector.shape_cast %126 : vector<1x1x9x9xbf16> to vector<9x9xbf16>
    %128 = arith.extf %127 : vector<9x9xbf16> to vector<9x9xf32>
    %129 = vector.broadcast %125 : f32 to vector<9x9xf32>
    %130 = arith.mulf %129, %128 : vector<9x9xf32>
    %131 = arith.addf %119, %130 : vector<9x9xf32>
    %c4_i32_77 = arith.constant 4 : i32
    %132 = arith.muli %arg1, %c4_i32_77 : i32
    %c0_i32_78 = arith.constant 0 : i32
    %133 = arith.addi %132, %c0_i32_78 : i32
    %134 = arith.index_cast %133 : i32 to index
    %135 = memref.load %arg6[%134] : memref<8xf32, #tpu.memory_space<smem>>
    %136 = vector.broadcast %135 : f32 to vector<9x9xf32>
    %137 = arith.addf %131, %136 : vector<9x9xf32>
    %138 = arith.addf %61, %137 : vector<9x9xf32>
    %cst_79 = arith.constant dense<0xFF800000> : vector<9xf32>
    %139 = vector.multi_reduction <maximumf>, %138, %cst_79 [1] : vector<9x9xf32> to vector<9xf32>
    %140 = vector.shape_cast %139 : vector<9xf32> to vector<9x1xf32>
    %141 = vector.broadcast %140 : vector<9x1xf32> to vector<9x9xf32>
    %142 = arith.subf %138, %141 : vector<9x9xf32>
    %143 = math.exp %142 : vector<9x9xf32>
    %cst_80 = arith.constant dense<0.000000e+00> : vector<9xf32>
    %144 = vector.multi_reduction <add>, %143, %cst_80 [1] : vector<9x9xf32> to vector<9xf32>
    %145 = vector.shape_cast %144 : vector<9xf32> to vector<9x1xf32>
    %146 = tpu.reciprocal %145 {approx = true} : vector<9x1xf32> -> vector<9x1xf32>
    %147 = vector.broadcast %146 : vector<9x1xf32> to vector<9x9xf32>
    %148 = arith.mulf %143, %147 : vector<9x9xf32>
    %149 = arith.truncf %148 : vector<9x9xf32> to vector<9x9xbf16>
    %150 = vector.extract_strided_slice %58 {offsets = [0, 0], sizes = [9, 8], strides = [1, 1]} : vector<9x32xbf16> to vector<9x8xbf16>
    %cst_81 = arith.constant dense<0.000000e+00> : vector<9x8xf32>
    %151 = tpu.matmul %149, %150, %cst_81 {dimension_numbers = #tpu.dot_dimension_numbers<[1], [0], [0], [1], [0, 0, 1, 1], [], []>} : vector<9x9xbf16>, vector<9x8xbf16>, vector<9x8xf32> -> vector<9x8xf32>
    %152 = vector.extract_strided_slice %56 {offsets = [0, 8], sizes = [9, 8], strides = [1, 1]} : vector<9x32xbf16> to vector<9x8xbf16>
    %153 = vector.extract_strided_slice %57 {offsets = [0, 8], sizes = [9, 8], strides = [1, 1]} : vector<9x32xbf16> to vector<9x8xbf16>
    %cst_82 = arith.constant dense<0.000000e+00> : vector<9x9xf32>
    %154 = tpu.matmul %152, %153, %cst_82 {dimension_numbers = #tpu.dot_dimension_numbers<[1], [1], [0], [0], [0, 0, 1, 0], [], []>} : vector<9x8xbf16>, vector<9x8xbf16>, vector<9x9xf32> -> vector<9x9xf32>
    %c6_i32_83 = arith.constant 6 : i32
    %155 = arith.muli %arg1, %c6_i32_83 : i32
    %c4_i32_84 = arith.constant 4 : i32
    %156 = arith.muli %155, %c4_i32_84 : i32
    %c1_i32_85 = arith.constant 1 : i32
    %157 = arith.addi %156, %c1_i32_85 : i32
    %158 = arith.index_cast %157 : i32 to index
    %159 = memref.load %arg5[%158] : memref<48xf32, #tpu.memory_space<smem>>
    %c0_86 = arith.constant 0 : index
    %c0_87 = arith.constant 0 : index
    %c0_88 = arith.constant 0 : index
    %c0_89 = arith.constant 0 : index
    %160 = vector.load %arg3[%c0_86, %c0_87, %c0_88, %c0_89] : memref<1x6x9x9xbf16, #tpu.memory_space<vmem>>, vector<1x1x9x9xbf16>
    %161 = vector.shape_cast %160 : vector<1x1x9x9xbf16> to vector<9x9xbf16>
    %162 = arith.extf %161 : vector<9x9xbf16> to vector<9x9xf32>
    %163 = vector.broadcast %159 : f32 to vector<9x9xf32>
    %164 = arith.mulf %163, %162 : vector<9x9xf32>
    %c6_i32_90 = arith.constant 6 : i32
    %165 = arith.muli %arg1, %c6_i32_90 : i32
    %c1_i32_91 = arith.constant 1 : i32
    %166 = arith.addi %165, %c1_i32_91 : i32
    %c4_i32_92 = arith.constant 4 : i32
    %167 = arith.muli %166, %c4_i32_92 : i32
    %c1_i32_93 = arith.constant 1 : i32
    %168 = arith.addi %167, %c1_i32_93 : i32
    %169 = arith.index_cast %168 : i32 to index
    %170 = memref.load %arg5[%169] : memref<48xf32, #tpu.memory_space<smem>>
    %c0_94 = arith.constant 0 : index
    %c1_95 = arith.constant 1 : index
    %c0_96 = arith.constant 0 : index
    %c0_97 = arith.constant 0 : index
    %171 = vector.load %arg3[%c0_94, %c1_95, %c0_96, %c0_97] : memref<1x6x9x9xbf16, #tpu.memory_space<vmem>>, vector<1x1x9x9xbf16>
    %172 = vector.shape_cast %171 : vector<1x1x9x9xbf16> to vector<9x9xbf16>
    %173 = arith.extf %172 : vector<9x9xbf16> to vector<9x9xf32>
    %174 = vector.broadcast %170 : f32 to vector<9x9xf32>
    %175 = arith.mulf %174, %173 : vector<9x9xf32>
    %176 = arith.addf %164, %175 : vector<9x9xf32>
    %c6_i32_98 = arith.constant 6 : i32
    %177 = arith.muli %arg1, %c6_i32_98 : i32
    %c2_i32_99 = arith.constant 2 : i32
    %178 = arith.addi %177, %c2_i32_99 : i32
    %c4_i32_100 = arith.constant 4 : i32
    %179 = arith.muli %178, %c4_i32_100 : i32
    %c1_i32_101 = arith.constant 1 : i32
    %180 = arith.addi %179, %c1_i32_101 : i32
    %181 = arith.index_cast %180 : i32 to index
    %182 = memref.load %arg5[%181] : memref<48xf32, #tpu.memory_space<smem>>
    %c0_102 = arith.constant 0 : index
    %c2_103 = arith.constant 2 : index
    %c0_104 = arith.constant 0 : index
    %c0_105 = arith.constant 0 : index
    %183 = vector.load %arg3[%c0_102, %c2_103, %c0_104, %c0_105] : memref<1x6x9x9xbf16, #tpu.memory_space<vmem>>, vector<1x1x9x9xbf16>
    %184 = vector.shape_cast %183 : vector<1x1x9x9xbf16> to vector<9x9xbf16>
    %185 = arith.extf %184 : vector<9x9xbf16> to vector<9x9xf32>
    %186 = vector.broadcast %182 : f32 to vector<9x9xf32>
    %187 = arith.mulf %186, %185 : vector<9x9xf32>
    %188 = arith.addf %176, %187 : vector<9x9xf32>
    %c6_i32_106 = arith.constant 6 : i32
    %189 = arith.muli %arg1, %c6_i32_106 : i32
    %c3_i32_107 = arith.constant 3 : i32
    %190 = arith.addi %189, %c3_i32_107 : i32
    %c4_i32_108 = arith.constant 4 : i32
    %191 = arith.muli %190, %c4_i32_108 : i32
    %c1_i32_109 = arith.constant 1 : i32
    %192 = arith.addi %191, %c1_i32_109 : i32
    %193 = arith.index_cast %192 : i32 to index
    %194 = memref.load %arg5[%193] : memref<48xf32, #tpu.memory_space<smem>>
    %c0_110 = arith.constant 0 : index
    %c3_111 = arith.constant 3 : index
    %c0_112 = arith.constant 0 : index
    %c0_113 = arith.constant 0 : index
    %195 = vector.load %arg3[%c0_110, %c3_111, %c0_112, %c0_113] : memref<1x6x9x9xbf16, #tpu.memory_space<vmem>>, vector<1x1x9x9xbf16>
    %196 = vector.shape_cast %195 : vector<1x1x9x9xbf16> to vector<9x9xbf16>
    %197 = arith.extf %196 : vector<9x9xbf16> to vector<9x9xf32>
    %198 = vector.broadcast %194 : f32 to vector<9x9xf32>
    %199 = arith.mulf %198, %197 : vector<9x9xf32>
    %200 = arith.addf %188, %199 : vector<9x9xf32>
    %c6_i32_114 = arith.constant 6 : i32
    %201 = arith.muli %arg1, %c6_i32_114 : i32
    %c4_i32_115 = arith.constant 4 : i32
    %202 = arith.addi %201, %c4_i32_115 : i32
    %c4_i32_116 = arith.constant 4 : i32
    %203 = arith.muli %202, %c4_i32_116 : i32
    %c1_i32_117 = arith.constant 1 : i32
    %204 = arith.addi %203, %c1_i32_117 : i32
    %205 = arith.index_cast %204 : i32 to index
    %206 = memref.load %arg5[%205] : memref<48xf32, #tpu.memory_space<smem>>
    %c0_118 = arith.constant 0 : index
    %c4_119 = arith.constant 4 : index
    %c0_120 = arith.constant 0 : index
    %c0_121 = arith.constant 0 : index
    %207 = vector.load %arg3[%c0_118, %c4_119, %c0_120, %c0_121] : memref<1x6x9x9xbf16, #tpu.memory_space<vmem>>, vector<1x1x9x9xbf16>
    %208 = vector.shape_cast %207 : vector<1x1x9x9xbf16> to vector<9x9xbf16>
    %209 = arith.extf %208 : vector<9x9xbf16> to vector<9x9xf32>
    %210 = vector.broadcast %206 : f32 to vector<9x9xf32>
    %211 = arith.mulf %210, %209 : vector<9x9xf32>
    %212 = arith.addf %200, %211 : vector<9x9xf32>
    %c6_i32_122 = arith.constant 6 : i32
    %213 = arith.muli %arg1, %c6_i32_122 : i32
    %c5_i32_123 = arith.constant 5 : i32
    %214 = arith.addi %213, %c5_i32_123 : i32
    %c4_i32_124 = arith.constant 4 : i32
    %215 = arith.muli %214, %c4_i32_124 : i32
    %c1_i32_125 = arith.constant 1 : i32
    %216 = arith.addi %215, %c1_i32_125 : i32
    %217 = arith.index_cast %216 : i32 to index
    %218 = memref.load %arg5[%217] : memref<48xf32, #tpu.memory_space<smem>>
    %c0_126 = arith.constant 0 : index
    %c5_127 = arith.constant 5 : index
    %c0_128 = arith.constant 0 : index
    %c0_129 = arith.constant 0 : index
    %219 = vector.load %arg3[%c0_126, %c5_127, %c0_128, %c0_129] : memref<1x6x9x9xbf16, #tpu.memory_space<vmem>>, vector<1x1x9x9xbf16>
    %220 = vector.shape_cast %219 : vector<1x1x9x9xbf16> to vector<9x9xbf16>
    %221 = arith.extf %220 : vector<9x9xbf16> to vector<9x9xf32>
    %222 = vector.broadcast %218 : f32 to vector<9x9xf32>
    %223 = arith.mulf %222, %221 : vector<9x9xf32>
    %224 = arith.addf %212, %223 : vector<9x9xf32>
    %c4_i32_130 = arith.constant 4 : i32
    %225 = arith.muli %arg1, %c4_i32_130 : i32
    %c1_i32_131 = arith.constant 1 : i32
    %226 = arith.addi %225, %c1_i32_131 : i32
    %227 = arith.index_cast %226 : i32 to index
    %228 = memref.load %arg6[%227] : memref<8xf32, #tpu.memory_space<smem>>
    %229 = vector.broadcast %228 : f32 to vector<9x9xf32>
    %230 = arith.addf %224, %229 : vector<9x9xf32>
    %231 = arith.addf %154, %230 : vector<9x9xf32>
    %cst_132 = arith.constant dense<0xFF800000> : vector<9xf32>
    %232 = vector.multi_reduction <maximumf>, %231, %cst_132 [1] : vector<9x9xf32> to vector<9xf32>
    %233 = vector.shape_cast %232 : vector<9xf32> to vector<9x1xf32>
    %234 = vector.broadcast %233 : vector<9x1xf32> to vector<9x9xf32>
    %235 = arith.subf %231, %234 : vector<9x9xf32>
    %236 = math.exp %235 : vector<9x9xf32>
    %cst_133 = arith.constant dense<0.000000e+00> : vector<9xf32>
    %237 = vector.multi_reduction <add>, %236, %cst_133 [1] : vector<9x9xf32> to vector<9xf32>
    %238 = vector.shape_cast %237 : vector<9xf32> to vector<9x1xf32>
    %239 = tpu.reciprocal %238 {approx = true} : vector<9x1xf32> -> vector<9x1xf32>
    %240 = vector.broadcast %239 : vector<9x1xf32> to vector<9x9xf32>
    %241 = arith.mulf %236, %240 : vector<9x9xf32>
    %242 = arith.truncf %241 : vector<9x9xf32> to vector<9x9xbf16>
    %243 = vector.extract_strided_slice %58 {offsets = [0, 8], sizes = [9, 8], strides = [1, 1]} : vector<9x32xbf16> to vector<9x8xbf16>
    %cst_134 = arith.constant dense<0.000000e+00> : vector<9x8xf32>
    %244 = tpu.matmul %242, %243, %cst_134 {dimension_numbers = #tpu.dot_dimension_numbers<[1], [0], [0], [1], [0, 0, 1, 1], [], []>} : vector<9x9xbf16>, vector<9x8xbf16>, vector<9x8xf32> -> vector<9x8xf32>
    %245 = vector.extract_strided_slice %56 {offsets = [0, 16], sizes = [9, 8], strides = [1, 1]} : vector<9x32xbf16> to vector<9x8xbf16>
    %246 = vector.extract_strided_slice %57 {offsets = [0, 16], sizes = [9, 8], strides = [1, 1]} : vector<9x32xbf16> to vector<9x8xbf16>
    %cst_135 = arith.constant dense<0.000000e+00> : vector<9x9xf32>
    %247 = tpu.matmul %245, %246, %cst_135 {dimension_numbers = #tpu.dot_dimension_numbers<[1], [1], [0], [0], [0, 0, 1, 0], [], []>} : vector<9x8xbf16>, vector<9x8xbf16>, vector<9x9xf32> -> vector<9x9xf32>
    %c6_i32_136 = arith.constant 6 : i32
    %248 = arith.muli %arg1, %c6_i32_136 : i32
    %c4_i32_137 = arith.constant 4 : i32
    %249 = arith.muli %248, %c4_i32_137 : i32
    %c2_i32_138 = arith.constant 2 : i32
    %250 = arith.addi %249, %c2_i32_138 : i32
    %251 = arith.index_cast %250 : i32 to index
    %252 = memref.load %arg5[%251] : memref<48xf32, #tpu.memory_space<smem>>
    %c0_139 = arith.constant 0 : index
    %c0_140 = arith.constant 0 : index
    %c0_141 = arith.constant 0 : index
    %c0_142 = arith.constant 0 : index
    %253 = vector.load %arg3[%c0_139, %c0_140, %c0_141, %c0_142] : memref<1x6x9x9xbf16, #tpu.memory_space<vmem>>, vector<1x1x9x9xbf16>
    %254 = vector.shape_cast %253 : vector<1x1x9x9xbf16> to vector<9x9xbf16>
    %255 = arith.extf %254 : vector<9x9xbf16> to vector<9x9xf32>
    %256 = vector.broadcast %252 : f32 to vector<9x9xf32>
    %257 = arith.mulf %256, %255 : vector<9x9xf32>
    %c6_i32_143 = arith.constant 6 : i32
    %258 = arith.muli %arg1, %c6_i32_143 : i32
    %c1_i32_144 = arith.constant 1 : i32
    %259 = arith.addi %258, %c1_i32_144 : i32
    %c4_i32_145 = arith.constant 4 : i32
    %260 = arith.muli %259, %c4_i32_145 : i32
    %c2_i32_146 = arith.constant 2 : i32
    %261 = arith.addi %260, %c2_i32_146 : i32
    %262 = arith.index_cast %261 : i32 to index
    %263 = memref.load %arg5[%262] : memref<48xf32, #tpu.memory_space<smem>>
    %c0_147 = arith.constant 0 : index
    %c1_148 = arith.constant 1 : index
    %c0_149 = arith.constant 0 : index
    %c0_150 = arith.constant 0 : index
    %264 = vector.load %arg3[%c0_147, %c1_148, %c0_149, %c0_150] : memref<1x6x9x9xbf16, #tpu.memory_space<vmem>>, vector<1x1x9x9xbf16>
    %265 = vector.shape_cast %264 : vector<1x1x9x9xbf16> to vector<9x9xbf16>
    %266 = arith.extf %265 : vector<9x9xbf16> to vector<9x9xf32>
    %267 = vector.broadcast %263 : f32 to vector<9x9xf32>
    %268 = arith.mulf %267, %266 : vector<9x9xf32>
    %269 = arith.addf %257, %268 : vector<9x9xf32>
    %c6_i32_151 = arith.constant 6 : i32
    %270 = arith.muli %arg1, %c6_i32_151 : i32
    %c2_i32_152 = arith.constant 2 : i32
    %271 = arith.addi %270, %c2_i32_152 : i32
    %c4_i32_153 = arith.constant 4 : i32
    %272 = arith.muli %271, %c4_i32_153 : i32
    %c2_i32_154 = arith.constant 2 : i32
    %273 = arith.addi %272, %c2_i32_154 : i32
    %274 = arith.index_cast %273 : i32 to index
    %275 = memref.load %arg5[%274] : memref<48xf32, #tpu.memory_space<smem>>
    %c0_155 = arith.constant 0 : index
    %c2_156 = arith.constant 2 : index
    %c0_157 = arith.constant 0 : index
    %c0_158 = arith.constant 0 : index
    %276 = vector.load %arg3[%c0_155, %c2_156, %c0_157, %c0_158] : memref<1x6x9x9xbf16, #tpu.memory_space<vmem>>, vector<1x1x9x9xbf16>
    %277 = vector.shape_cast %276 : vector<1x1x9x9xbf16> to vector<9x9xbf16>
    %278 = arith.extf %277 : vector<9x9xbf16> to vector<9x9xf32>
    %279 = vector.broadcast %275 : f32 to vector<9x9xf32>
    %280 = arith.mulf %279, %278 : vector<9x9xf32>
    %281 = arith.addf %269, %280 : vector<9x9xf32>
    %c6_i32_159 = arith.constant 6 : i32
    %282 = arith.muli %arg1, %c6_i32_159 : i32
    %c3_i32_160 = arith.constant 3 : i32
    %283 = arith.addi %282, %c3_i32_160 : i32
    %c4_i32_161 = arith.constant 4 : i32
    %284 = arith.muli %283, %c4_i32_161 : i32
    %c2_i32_162 = arith.constant 2 : i32
    %285 = arith.addi %284, %c2_i32_162 : i32
    %286 = arith.index_cast %285 : i32 to index
    %287 = memref.load %arg5[%286] : memref<48xf32, #tpu.memory_space<smem>>
    %c0_163 = arith.constant 0 : index
    %c3_164 = arith.constant 3 : index
    %c0_165 = arith.constant 0 : index
    %c0_166 = arith.constant 0 : index
    %288 = vector.load %arg3[%c0_163, %c3_164, %c0_165, %c0_166] : memref<1x6x9x9xbf16, #tpu.memory_space<vmem>>, vector<1x1x9x9xbf16>
    %289 = vector.shape_cast %288 : vector<1x1x9x9xbf16> to vector<9x9xbf16>
    %290 = arith.extf %289 : vector<9x9xbf16> to vector<9x9xf32>
    %291 = vector.broadcast %287 : f32 to vector<9x9xf32>
    %292 = arith.mulf %291, %290 : vector<9x9xf32>
    %293 = arith.addf %281, %292 : vector<9x9xf32>
    %c6_i32_167 = arith.constant 6 : i32
    %294 = arith.muli %arg1, %c6_i32_167 : i32
    %c4_i32_168 = arith.constant 4 : i32
    %295 = arith.addi %294, %c4_i32_168 : i32
    %c4_i32_169 = arith.constant 4 : i32
    %296 = arith.muli %295, %c4_i32_169 : i32
    %c2_i32_170 = arith.constant 2 : i32
    %297 = arith.addi %296, %c2_i32_170 : i32
    %298 = arith.index_cast %297 : i32 to index
    %299 = memref.load %arg5[%298] : memref<48xf32, #tpu.memory_space<smem>>
    %c0_171 = arith.constant 0 : index
    %c4_172 = arith.constant 4 : index
    %c0_173 = arith.constant 0 : index
    %c0_174 = arith.constant 0 : index
    %300 = vector.load %arg3[%c0_171, %c4_172, %c0_173, %c0_174] : memref<1x6x9x9xbf16, #tpu.memory_space<vmem>>, vector<1x1x9x9xbf16>
    %301 = vector.shape_cast %300 : vector<1x1x9x9xbf16> to vector<9x9xbf16>
    %302 = arith.extf %301 : vector<9x9xbf16> to vector<9x9xf32>
    %303 = vector.broadcast %299 : f32 to vector<9x9xf32>
    %304 = arith.mulf %303, %302 : vector<9x9xf32>
    %305 = arith.addf %293, %304 : vector<9x9xf32>
    %c6_i32_175 = arith.constant 6 : i32
    %306 = arith.muli %arg1, %c6_i32_175 : i32
    %c5_i32_176 = arith.constant 5 : i32
    %307 = arith.addi %306, %c5_i32_176 : i32
    %c4_i32_177 = arith.constant 4 : i32
    %308 = arith.muli %307, %c4_i32_177 : i32
    %c2_i32_178 = arith.constant 2 : i32
    %309 = arith.addi %308, %c2_i32_178 : i32
    %310 = arith.index_cast %309 : i32 to index
    %311 = memref.load %arg5[%310] : memref<48xf32, #tpu.memory_space<smem>>
    %c0_179 = arith.constant 0 : index
    %c5_180 = arith.constant 5 : index
    %c0_181 = arith.constant 0 : index
    %c0_182 = arith.constant 0 : index
    %312 = vector.load %arg3[%c0_179, %c5_180, %c0_181, %c0_182] : memref<1x6x9x9xbf16, #tpu.memory_space<vmem>>, vector<1x1x9x9xbf16>
    %313 = vector.shape_cast %312 : vector<1x1x9x9xbf16> to vector<9x9xbf16>
    %314 = arith.extf %313 : vector<9x9xbf16> to vector<9x9xf32>
    %315 = vector.broadcast %311 : f32 to vector<9x9xf32>
    %316 = arith.mulf %315, %314 : vector<9x9xf32>
    %317 = arith.addf %305, %316 : vector<9x9xf32>
    %c4_i32_183 = arith.constant 4 : i32
    %318 = arith.muli %arg1, %c4_i32_183 : i32
    %c2_i32_184 = arith.constant 2 : i32
    %319 = arith.addi %318, %c2_i32_184 : i32
    %320 = arith.index_cast %319 : i32 to index
    %321 = memref.load %arg6[%320] : memref<8xf32, #tpu.memory_space<smem>>
    %322 = vector.broadcast %321 : f32 to vector<9x9xf32>
    %323 = arith.addf %317, %322 : vector<9x9xf32>
    %324 = arith.addf %247, %323 : vector<9x9xf32>
    %cst_185 = arith.constant dense<0xFF800000> : vector<9xf32>
    %325 = vector.multi_reduction <maximumf>, %324, %cst_185 [1] : vector<9x9xf32> to vector<9xf32>
    %326 = vector.shape_cast %325 : vector<9xf32> to vector<9x1xf32>
    %327 = vector.broadcast %326 : vector<9x1xf32> to vector<9x9xf32>
    %328 = arith.subf %324, %327 : vector<9x9xf32>
    %329 = math.exp %328 : vector<9x9xf32>
    %cst_186 = arith.constant dense<0.000000e+00> : vector<9xf32>
    %330 = vector.multi_reduction <add>, %329, %cst_186 [1] : vector<9x9xf32> to vector<9xf32>
    %331 = vector.shape_cast %330 : vector<9xf32> to vector<9x1xf32>
    %332 = tpu.reciprocal %331 {approx = true} : vector<9x1xf32> -> vector<9x1xf32>
    %333 = vector.broadcast %332 : vector<9x1xf32> to vector<9x9xf32>
    %334 = arith.mulf %329, %333 : vector<9x9xf32>
    %335 = arith.truncf %334 : vector<9x9xf32> to vector<9x9xbf16>
    %336 = vector.extract_strided_slice %58 {offsets = [0, 16], sizes = [9, 8], strides = [1, 1]} : vector<9x32xbf16> to vector<9x8xbf16>
    %cst_187 = arith.constant dense<0.000000e+00> : vector<9x8xf32>
    %337 = tpu.matmul %335, %336, %cst_187 {dimension_numbers = #tpu.dot_dimension_numbers<[1], [0], [0], [1], [0, 0, 1, 1], [], []>} : vector<9x9xbf16>, vector<9x8xbf16>, vector<9x8xf32> -> vector<9x8xf32>
    %338 = vector.extract_strided_slice %56 {offsets = [0, 24], sizes = [9, 8], strides = [1, 1]} : vector<9x32xbf16> to vector<9x8xbf16>
    %339 = vector.extract_strided_slice %57 {offsets = [0, 24], sizes = [9, 8], strides = [1, 1]} : vector<9x32xbf16> to vector<9x8xbf16>
    %cst_188 = arith.constant dense<0.000000e+00> : vector<9x9xf32>
    %340 = tpu.matmul %338, %339, %cst_188 {dimension_numbers = #tpu.dot_dimension_numbers<[1], [1], [0], [0], [0, 0, 1, 0], [], []>} : vector<9x8xbf16>, vector<9x8xbf16>, vector<9x9xf32> -> vector<9x9xf32>
    %c6_i32_189 = arith.constant 6 : i32
    %341 = arith.muli %arg1, %c6_i32_189 : i32
    %c4_i32_190 = arith.constant 4 : i32
    %342 = arith.muli %341, %c4_i32_190 : i32
    %c3_i32_191 = arith.constant 3 : i32
    %343 = arith.addi %342, %c3_i32_191 : i32
    %344 = arith.index_cast %343 : i32 to index
    %345 = memref.load %arg5[%344] : memref<48xf32, #tpu.memory_space<smem>>
    %c0_192 = arith.constant 0 : index
    %c0_193 = arith.constant 0 : index
    %c0_194 = arith.constant 0 : index
    %c0_195 = arith.constant 0 : index
    %346 = vector.load %arg3[%c0_192, %c0_193, %c0_194, %c0_195] : memref<1x6x9x9xbf16, #tpu.memory_space<vmem>>, vector<1x1x9x9xbf16>
    %347 = vector.shape_cast %346 : vector<1x1x9x9xbf16> to vector<9x9xbf16>
    %348 = arith.extf %347 : vector<9x9xbf16> to vector<9x9xf32>
    %349 = vector.broadcast %345 : f32 to vector<9x9xf32>
    %350 = arith.mulf %349, %348 : vector<9x9xf32>
    %c6_i32_196 = arith.constant 6 : i32
    %351 = arith.muli %arg1, %c6_i32_196 : i32
    %c1_i32_197 = arith.constant 1 : i32
    %352 = arith.addi %351, %c1_i32_197 : i32
    %c4_i32_198 = arith.constant 4 : i32
    %353 = arith.muli %352, %c4_i32_198 : i32
    %c3_i32_199 = arith.constant 3 : i32
    %354 = arith.addi %353, %c3_i32_199 : i32
    %355 = arith.index_cast %354 : i32 to index
    %356 = memref.load %arg5[%355] : memref<48xf32, #tpu.memory_space<smem>>
    %c0_200 = arith.constant 0 : index
    %c1_201 = arith.constant 1 : index
    %c0_202 = arith.constant 0 : index
    %c0_203 = arith.constant 0 : index
    %357 = vector.load %arg3[%c0_200, %c1_201, %c0_202, %c0_203] : memref<1x6x9x9xbf16, #tpu.memory_space<vmem>>, vector<1x1x9x9xbf16>
    %358 = vector.shape_cast %357 : vector<1x1x9x9xbf16> to vector<9x9xbf16>
    %359 = arith.extf %358 : vector<9x9xbf16> to vector<9x9xf32>
    %360 = vector.broadcast %356 : f32 to vector<9x9xf32>
    %361 = arith.mulf %360, %359 : vector<9x9xf32>
    %362 = arith.addf %350, %361 : vector<9x9xf32>
    %c6_i32_204 = arith.constant 6 : i32
    %363 = arith.muli %arg1, %c6_i32_204 : i32
    %c2_i32_205 = arith.constant 2 : i32
    %364 = arith.addi %363, %c2_i32_205 : i32
    %c4_i32_206 = arith.constant 4 : i32
    %365 = arith.muli %364, %c4_i32_206 : i32
    %c3_i32_207 = arith.constant 3 : i32
    %366 = arith.addi %365, %c3_i32_207 : i32
    %367 = arith.index_cast %366 : i32 to index
    %368 = memref.load %arg5[%367] : memref<48xf32, #tpu.memory_space<smem>>
    %c0_208 = arith.constant 0 : index
    %c2_209 = arith.constant 2 : index
    %c0_210 = arith.constant 0 : index
    %c0_211 = arith.constant 0 : index
    %369 = vector.load %arg3[%c0_208, %c2_209, %c0_210, %c0_211] : memref<1x6x9x9xbf16, #tpu.memory_space<vmem>>, vector<1x1x9x9xbf16>
    %370 = vector.shape_cast %369 : vector<1x1x9x9xbf16> to vector<9x9xbf16>
    %371 = arith.extf %370 : vector<9x9xbf16> to vector<9x9xf32>
    %372 = vector.broadcast %368 : f32 to vector<9x9xf32>
    %373 = arith.mulf %372, %371 : vector<9x9xf32>
    %374 = arith.addf %362, %373 : vector<9x9xf32>
    %c6_i32_212 = arith.constant 6 : i32
    %375 = arith.muli %arg1, %c6_i32_212 : i32
    %c3_i32_213 = arith.constant 3 : i32
    %376 = arith.addi %375, %c3_i32_213 : i32
    %c4_i32_214 = arith.constant 4 : i32
    %377 = arith.muli %376, %c4_i32_214 : i32
    %c3_i32_215 = arith.constant 3 : i32
    %378 = arith.addi %377, %c3_i32_215 : i32
    %379 = arith.index_cast %378 : i32 to index
    %380 = memref.load %arg5[%379] : memref<48xf32, #tpu.memory_space<smem>>
    %c0_216 = arith.constant 0 : index
    %c3_217 = arith.constant 3 : index
    %c0_218 = arith.constant 0 : index
    %c0_219 = arith.constant 0 : index
    %381 = vector.load %arg3[%c0_216, %c3_217, %c0_218, %c0_219] : memref<1x6x9x9xbf16, #tpu.memory_space<vmem>>, vector<1x1x9x9xbf16>
    %382 = vector.shape_cast %381 : vector<1x1x9x9xbf16> to vector<9x9xbf16>
    %383 = arith.extf %382 : vector<9x9xbf16> to vector<9x9xf32>
    %384 = vector.broadcast %380 : f32 to vector<9x9xf32>
    %385 = arith.mulf %384, %383 : vector<9x9xf32>
    %386 = arith.addf %374, %385 : vector<9x9xf32>
    %c6_i32_220 = arith.constant 6 : i32
    %387 = arith.muli %arg1, %c6_i32_220 : i32
    %c4_i32_221 = arith.constant 4 : i32
    %388 = arith.addi %387, %c4_i32_221 : i32
    %c4_i32_222 = arith.constant 4 : i32
    %389 = arith.muli %388, %c4_i32_222 : i32
    %c3_i32_223 = arith.constant 3 : i32
    %390 = arith.addi %389, %c3_i32_223 : i32
    %391 = arith.index_cast %390 : i32 to index
    %392 = memref.load %arg5[%391] : memref<48xf32, #tpu.memory_space<smem>>
    %c0_224 = arith.constant 0 : index
    %c4_225 = arith.constant 4 : index
    %c0_226 = arith.constant 0 : index
    %c0_227 = arith.constant 0 : index
    %393 = vector.load %arg3[%c0_224, %c4_225, %c0_226, %c0_227] : memref<1x6x9x9xbf16, #tpu.memory_space<vmem>>, vector<1x1x9x9xbf16>
    %394 = vector.shape_cast %393 : vector<1x1x9x9xbf16> to vector<9x9xbf16>
    %395 = arith.extf %394 : vector<9x9xbf16> to vector<9x9xf32>
    %396 = vector.broadcast %392 : f32 to vector<9x9xf32>
    %397 = arith.mulf %396, %395 : vector<9x9xf32>
    %398 = arith.addf %386, %397 : vector<9x9xf32>
    %c6_i32_228 = arith.constant 6 : i32
    %399 = arith.muli %arg1, %c6_i32_228 : i32
    %c5_i32_229 = arith.constant 5 : i32
    %400 = arith.addi %399, %c5_i32_229 : i32
    %c4_i32_230 = arith.constant 4 : i32
    %401 = arith.muli %400, %c4_i32_230 : i32
    %c3_i32_231 = arith.constant 3 : i32
    %402 = arith.addi %401, %c3_i32_231 : i32
    %403 = arith.index_cast %402 : i32 to index
    %404 = memref.load %arg5[%403] : memref<48xf32, #tpu.memory_space<smem>>
    %c0_232 = arith.constant 0 : index
    %c5_233 = arith.constant 5 : index
    %c0_234 = arith.constant 0 : index
    %c0_235 = arith.constant 0 : index
    %405 = vector.load %arg3[%c0_232, %c5_233, %c0_234, %c0_235] : memref<1x6x9x9xbf16, #tpu.memory_space<vmem>>, vector<1x1x9x9xbf16>
    %406 = vector.shape_cast %405 : vector<1x1x9x9xbf16> to vector<9x9xbf16>
    %407 = arith.extf %406 : vector<9x9xbf16> to vector<9x9xf32>
    %408 = vector.broadcast %404 : f32 to vector<9x9xf32>
    %409 = arith.mulf %408, %407 : vector<9x9xf32>
    %410 = arith.addf %398, %409 : vector<9x9xf32>
    %c4_i32_236 = arith.constant 4 : i32
    %411 = arith.muli %arg1, %c4_i32_236 : i32
    %c3_i32_237 = arith.constant 3 : i32
    %412 = arith.addi %411, %c3_i32_237 : i32
    %413 = arith.index_cast %412 : i32 to index
    %414 = memref.load %arg6[%413] : memref<8xf32, #tpu.memory_space<smem>>
    %415 = vector.broadcast %414 : f32 to vector<9x9xf32>
    %416 = arith.addf %410, %415 : vector<9x9xf32>
    %417 = arith.addf %340, %416 : vector<9x9xf32>
    %cst_238 = arith.constant dense<0xFF800000> : vector<9xf32>
    %418 = vector.multi_reduction <maximumf>, %417, %cst_238 [1] : vector<9x9xf32> to vector<9xf32>
    %419 = vector.shape_cast %418 : vector<9xf32> to vector<9x1xf32>
    %420 = vector.broadcast %419 : vector<9x1xf32> to vector<9x9xf32>
    %421 = arith.subf %417, %420 : vector<9x9xf32>
    %422 = math.exp %421 : vector<9x9xf32>
    %cst_239 = arith.constant dense<0.000000e+00> : vector<9xf32>
    %423 = vector.multi_reduction <add>, %422, %cst_239 [1] : vector<9x9xf32> to vector<9xf32>
    %424 = vector.shape_cast %423 : vector<9xf32> to vector<9x1xf32>
    %425 = tpu.reciprocal %424 {approx = true} : vector<9x1xf32> -> vector<9x1xf32>
    %426 = vector.broadcast %425 : vector<9x1xf32> to vector<9x9xf32>
    %427 = arith.mulf %422, %426 : vector<9x9xf32>
    %428 = arith.truncf %427 : vector<9x9xf32> to vector<9x9xbf16>
    %429 = vector.extract_strided_slice %58 {offsets = [0, 24], sizes = [9, 8], strides = [1, 1]} : vector<9x32xbf16> to vector<9x8xbf16>
    %cst_240 = arith.constant dense<0.000000e+00> : vector<9x8xf32>
    %430 = tpu.matmul %428, %429, %cst_240 {dimension_numbers = #tpu.dot_dimension_numbers<[1], [0], [0], [1], [0, 0, 1, 1], [], []>} : vector<9x9xbf16>, vector<9x8xbf16>, vector<9x8xf32> -> vector<9x8xf32>
    %431 = tpu.concatenate %151, %244, %337, %430 in 1 : vector<9x8xf32>, vector<9x8xf32>, vector<9x8xf32>, vector<9x8xf32> -> vector<9x32xf32>
    %432 = arith.truncf %431 : vector<9x32xf32> to vector<9x32xbf16>
    %cst_241 = arith.constant dense<0.000000e+00> : vector<9x32xf32>
    %433 = tpu.matmul %432, %42, %cst_241 {dimension_numbers = #tpu.dot_dimension_numbers<[1], [0], [0], [1], [0, 0, 1, 1], [], []>} : vector<9x32xbf16>, vector<32x32xbf16>, vector<9x32xf32> -> vector<9x32xf32>
    %434 = vector.broadcast %44 : vector<1x32xf32> to vector<9x32xf32>
    %435 = arith.addf %433, %434 : vector<9x32xf32>
    %436 = arith.addf %3, %435 : vector<9x32xf32>
    %437 = arith.truncf %435 : vector<9x32xf32> to vector<9x32xbf16>
    %c0_242 = arith.constant 0 : index
    %c0_243 = arith.constant 0 : index
    %438 = vector.load %arg4[%c0_242, %c0_243] : memref<8x32xbf16, #tpu.memory_space<vmem>>, vector<8x32xbf16>
    %c0_244 = arith.constant 0 : index
    %c0_245 = arith.constant 0 : index
    %c0_246 = arith.constant 0 : index
    %439 = vector.load %arg20[%c0_244, %c0_245, %c0_246] : memref<1x32x32xbf16, #tpu.memory_space<vmem>>, vector<1x32x32xbf16>
    %440 = vector.shape_cast %439 : vector<1x32x32xbf16> to vector<32x32xbf16>
    %c0_247 = arith.constant 0 : index
    %c0_248 = arith.constant 0 : index
    %c0_249 = arith.constant 0 : index
    %441 = vector.load %arg21[%c0_247, %c0_248, %c0_249] : memref<1x1x32xf32, #tpu.memory_space<vmem>>, vector<1x1x32xf32>
    %442 = vector.shape_cast %441 : vector<1x1x32xf32> to vector<1x32xf32>
    %c0_250 = arith.constant 0 : index
    %c0_251 = arith.constant 0 : index
    %c0_252 = arith.constant 0 : index
    %443 = vector.load %arg22[%c0_250, %c0_251, %c0_252] : memref<1x32x32xbf16, #tpu.memory_space<vmem>>, vector<1x32x32xbf16>
    %444 = vector.shape_cast %443 : vector<1x32x32xbf16> to vector<32x32xbf16>
    %c0_253 = arith.constant 0 : index
    %c0_254 = arith.constant 0 : index
    %c0_255 = arith.constant 0 : index
    %445 = vector.load %arg23[%c0_253, %c0_254, %c0_255] : memref<1x1x32xf32, #tpu.memory_space<vmem>>, vector<1x1x32xf32>
    %446 = vector.shape_cast %445 : vector<1x1x32xf32> to vector<1x32xf32>
    %c0_256 = arith.constant 0 : index
    %c0_257 = arith.constant 0 : index
    %c0_258 = arith.constant 0 : index
    %447 = vector.load %arg24[%c0_256, %c0_257, %c0_258] : memref<1x32x32xbf16, #tpu.memory_space<vmem>>, vector<1x32x32xbf16>
    %448 = vector.shape_cast %447 : vector<1x32x32xbf16> to vector<32x32xbf16>
    %c0_259 = arith.constant 0 : index
    %c0_260 = arith.constant 0 : index
    %c0_261 = arith.constant 0 : index
    %449 = vector.load %arg25[%c0_259, %c0_260, %c0_261] : memref<1x1x32xf32, #tpu.memory_space<vmem>>, vector<1x1x32xf32>
    %450 = vector.shape_cast %449 : vector<1x1x32xf32> to vector<1x32xf32>
    %c0_262 = arith.constant 0 : index
    %c0_263 = arith.constant 0 : index
    %c0_264 = arith.constant 0 : index
    %451 = vector.load %arg26[%c0_262, %c0_263, %c0_264] : memref<1x32x32xbf16, #tpu.memory_space<vmem>>, vector<1x32x32xbf16>
    %452 = vector.shape_cast %451 : vector<1x32x32xbf16> to vector<32x32xbf16>
    %c0_265 = arith.constant 0 : index
    %c0_266 = arith.constant 0 : index
    %c0_267 = arith.constant 0 : index
    %453 = vector.load %arg27[%c0_265, %c0_266, %c0_267] : memref<1x1x32xf32, #tpu.memory_space<vmem>>, vector<1x1x32xf32>
    %454 = vector.shape_cast %453 : vector<1x1x32xf32> to vector<1x32xf32>
    %cst_268 = arith.constant dense<0.000000e+00> : vector<9x32xf32>
    %455 = tpu.matmul %437, %440, %cst_268 {dimension_numbers = #tpu.dot_dimension_numbers<[1], [0], [0], [1], [0, 0, 1, 1], [], []>} : vector<9x32xbf16>, vector<32x32xbf16>, vector<9x32xf32> -> vector<9x32xf32>
    %456 = vector.broadcast %442 : vector<1x32xf32> to vector<9x32xf32>
    %457 = arith.addf %455, %456 : vector<9x32xf32>
    %cst_269 = arith.constant dense<0.000000e+00> : vector<8x32xf32>
    %458 = tpu.matmul %438, %444, %cst_269 {dimension_numbers = #tpu.dot_dimension_numbers<[1], [0], [0], [1], [0, 0, 1, 1], [], []>} : vector<8x32xbf16>, vector<32x32xbf16>, vector<8x32xf32> -> vector<8x32xf32>
    %459 = vector.broadcast %446 : vector<1x32xf32> to vector<8x32xf32>
    %460 = arith.addf %458, %459 : vector<8x32xf32>
    %cst_270 = arith.constant dense<0.000000e+00> : vector<8x32xf32>
    %461 = tpu.matmul %438, %448, %cst_270 {dimension_numbers = #tpu.dot_dimension_numbers<[1], [0], [0], [1], [0, 0, 1, 1], [], []>} : vector<8x32xbf16>, vector<32x32xbf16>, vector<8x32xf32> -> vector<8x32xf32>
    %462 = vector.broadcast %450 : vector<1x32xf32> to vector<8x32xf32>
    %463 = arith.addf %461, %462 : vector<8x32xf32>
    %cst_271 = arith.constant 0.353553385 : f32
    %464 = vector.broadcast %cst_271 : f32 to vector<9x32xf32>
    %465 = arith.mulf %457, %464 : vector<9x32xf32>
    %466 = arith.truncf %465 : vector<9x32xf32> to vector<9x32xbf16>
    %467 = arith.truncf %460 : vector<8x32xf32> to vector<8x32xbf16>
    %468 = arith.truncf %463 : vector<8x32xf32> to vector<8x32xbf16>
    %469 = vector.extract_strided_slice %466 {offsets = [0, 0], sizes = [9, 8], strides = [1, 1]} : vector<9x32xbf16> to vector<9x8xbf16>
    %470 = vector.extract_strided_slice %467 {offsets = [0, 0], sizes = [8, 8], strides = [1, 1]} : vector<8x32xbf16> to vector<8x8xbf16>
    %cst_272 = arith.constant dense<0.000000e+00> : vector<9x8xf32>
    %471 = tpu.matmul %469, %470, %cst_272 {dimension_numbers = #tpu.dot_dimension_numbers<[1], [1], [0], [0], [0, 0, 1, 0], [], []>} : vector<9x8xbf16>, vector<8x8xbf16>, vector<9x8xf32> -> vector<9x8xf32>
    %cst_273 = arith.constant dense<0xFF800000> : vector<9xf32>
    %472 = vector.multi_reduction <maximumf>, %471, %cst_273 [1] : vector<9x8xf32> to vector<9xf32>
    %473 = vector.shape_cast %472 : vector<9xf32> to vector<9x1xf32>
    %474 = vector.broadcast %473 : vector<9x1xf32> to vector<9x8xf32>
    %475 = arith.subf %471, %474 : vector<9x8xf32>
    %476 = math.exp %475 : vector<9x8xf32>
    %cst_274 = arith.constant dense<0.000000e+00> : vector<9xf32>
    %477 = vector.multi_reduction <add>, %476, %cst_274 [1] : vector<9x8xf32> to vector<9xf32>
    %478 = vector.shape_cast %477 : vector<9xf32> to vector<9x1xf32>
    %479 = tpu.reciprocal %478 {approx = true} : vector<9x1xf32> -> vector<9x1xf32>
    %480 = vector.broadcast %479 : vector<9x1xf32> to vector<9x8xf32>
    %481 = arith.mulf %476, %480 : vector<9x8xf32>
    %482 = arith.truncf %481 : vector<9x8xf32> to vector<9x8xbf16>
    %483 = vector.extract_strided_slice %468 {offsets = [0, 0], sizes = [8, 8], strides = [1, 1]} : vector<8x32xbf16> to vector<8x8xbf16>
    %cst_275 = arith.constant dense<0.000000e+00> : vector<9x8xf32>
    %484 = tpu.matmul %482, %483, %cst_275 {dimension_numbers = #tpu.dot_dimension_numbers<[1], [0], [0], [1], [0, 0, 1, 1], [], []>} : vector<9x8xbf16>, vector<8x8xbf16>, vector<9x8xf32> -> vector<9x8xf32>
    %485 = vector.extract_strided_slice %466 {offsets = [0, 8], sizes = [9, 8], strides = [1, 1]} : vector<9x32xbf16> to vector<9x8xbf16>
    %486 = vector.extract_strided_slice %467 {offsets = [0, 8], sizes = [8, 8], strides = [1, 1]} : vector<8x32xbf16> to vector<8x8xbf16>
    %cst_276 = arith.constant dense<0.000000e+00> : vector<9x8xf32>
    %487 = tpu.matmul %485, %486, %cst_276 {dimension_numbers = #tpu.dot_dimension_numbers<[1], [1], [0], [0], [0, 0, 1, 0], [], []>} : vector<9x8xbf16>, vector<8x8xbf16>, vector<9x8xf32> -> vector<9x8xf32>
    %cst_277 = arith.constant dense<0xFF800000> : vector<9xf32>
    %488 = vector.multi_reduction <maximumf>, %487, %cst_277 [1] : vector<9x8xf32> to vector<9xf32>
    %489 = vector.shape_cast %488 : vector<9xf32> to vector<9x1xf32>
    %490 = vector.broadcast %489 : vector<9x1xf32> to vector<9x8xf32>
    %491 = arith.subf %487, %490 : vector<9x8xf32>
    %492 = math.exp %491 : vector<9x8xf32>
    %cst_278 = arith.constant dense<0.000000e+00> : vector<9xf32>
    %493 = vector.multi_reduction <add>, %492, %cst_278 [1] : vector<9x8xf32> to vector<9xf32>
    %494 = vector.shape_cast %493 : vector<9xf32> to vector<9x1xf32>
    %495 = tpu.reciprocal %494 {approx = true} : vector<9x1xf32> -> vector<9x1xf32>
    %496 = vector.broadcast %495 : vector<9x1xf32> to vector<9x8xf32>
    %497 = arith.mulf %492, %496 : vector<9x8xf32>
    %498 = arith.truncf %497 : vector<9x8xf32> to vector<9x8xbf16>
    %499 = vector.extract_strided_slice %468 {offsets = [0, 8], sizes = [8, 8], strides = [1, 1]} : vector<8x32xbf16> to vector<8x8xbf16>
    %cst_279 = arith.constant dense<0.000000e+00> : vector<9x8xf32>
    %500 = tpu.matmul %498, %499, %cst_279 {dimension_numbers = #tpu.dot_dimension_numbers<[1], [0], [0], [1], [0, 0, 1, 1], [], []>} : vector<9x8xbf16>, vector<8x8xbf16>, vector<9x8xf32> -> vector<9x8xf32>
    %501 = vector.extract_strided_slice %466 {offsets = [0, 16], sizes = [9, 8], strides = [1, 1]} : vector<9x32xbf16> to vector<9x8xbf16>
    %502 = vector.extract_strided_slice %467 {offsets = [0, 16], sizes = [8, 8], strides = [1, 1]} : vector<8x32xbf16> to vector<8x8xbf16>
    %cst_280 = arith.constant dense<0.000000e+00> : vector<9x8xf32>
    %503 = tpu.matmul %501, %502, %cst_280 {dimension_numbers = #tpu.dot_dimension_numbers<[1], [1], [0], [0], [0, 0, 1, 0], [], []>} : vector<9x8xbf16>, vector<8x8xbf16>, vector<9x8xf32> -> vector<9x8xf32>
    %cst_281 = arith.constant dense<0xFF800000> : vector<9xf32>
    %504 = vector.multi_reduction <maximumf>, %503, %cst_281 [1] : vector<9x8xf32> to vector<9xf32>
    %505 = vector.shape_cast %504 : vector<9xf32> to vector<9x1xf32>
    %506 = vector.broadcast %505 : vector<9x1xf32> to vector<9x8xf32>
    %507 = arith.subf %503, %506 : vector<9x8xf32>
    %508 = math.exp %507 : vector<9x8xf32>
    %cst_282 = arith.constant dense<0.000000e+00> : vector<9xf32>
    %509 = vector.multi_reduction <add>, %508, %cst_282 [1] : vector<9x8xf32> to vector<9xf32>
    %510 = vector.shape_cast %509 : vector<9xf32> to vector<9x1xf32>
    %511 = tpu.reciprocal %510 {approx = true} : vector<9x1xf32> -> vector<9x1xf32>
    %512 = vector.broadcast %511 : vector<9x1xf32> to vector<9x8xf32>
    %513 = arith.mulf %508, %512 : vector<9x8xf32>
    %514 = arith.truncf %513 : vector<9x8xf32> to vector<9x8xbf16>
    %515 = vector.extract_strided_slice %468 {offsets = [0, 16], sizes = [8, 8], strides = [1, 1]} : vector<8x32xbf16> to vector<8x8xbf16>
    %cst_283 = arith.constant dense<0.000000e+00> : vector<9x8xf32>
    %516 = tpu.matmul %514, %515, %cst_283 {dimension_numbers = #tpu.dot_dimension_numbers<[1], [0], [0], [1], [0, 0, 1, 1], [], []>} : vector<9x8xbf16>, vector<8x8xbf16>, vector<9x8xf32> -> vector<9x8xf32>
    %517 = vector.extract_strided_slice %466 {offsets = [0, 24], sizes = [9, 8], strides = [1, 1]} : vector<9x32xbf16> to vector<9x8xbf16>
    %518 = vector.extract_strided_slice %467 {offsets = [0, 24], sizes = [8, 8], strides = [1, 1]} : vector<8x32xbf16> to vector<8x8xbf16>
    %cst_284 = arith.constant dense<0.000000e+00> : vector<9x8xf32>
    %519 = tpu.matmul %517, %518, %cst_284 {dimension_numbers = #tpu.dot_dimension_numbers<[1], [1], [0], [0], [0, 0, 1, 0], [], []>} : vector<9x8xbf16>, vector<8x8xbf16>, vector<9x8xf32> -> vector<9x8xf32>
    %cst_285 = arith.constant dense<0xFF800000> : vector<9xf32>
    %520 = vector.multi_reduction <maximumf>, %519, %cst_285 [1] : vector<9x8xf32> to vector<9xf32>
    %521 = vector.shape_cast %520 : vector<9xf32> to vector<9x1xf32>
    %522 = vector.broadcast %521 : vector<9x1xf32> to vector<9x8xf32>
    %523 = arith.subf %519, %522 : vector<9x8xf32>
    %524 = math.exp %523 : vector<9x8xf32>
    %cst_286 = arith.constant dense<0.000000e+00> : vector<9xf32>
    %525 = vector.multi_reduction <add>, %524, %cst_286 [1] : vector<9x8xf32> to vector<9xf32>
    %526 = vector.shape_cast %525 : vector<9xf32> to vector<9x1xf32>
    %527 = tpu.reciprocal %526 {approx = true} : vector<9x1xf32> -> vector<9x1xf32>
    %528 = vector.broadcast %527 : vector<9x1xf32> to vector<9x8xf32>
    %529 = arith.mulf %524, %528 : vector<9x8xf32>
    %530 = arith.truncf %529 : vector<9x8xf32> to vector<9x8xbf16>
    %531 = vector.extract_strided_slice %468 {offsets = [0, 24], sizes = [8, 8], strides = [1, 1]} : vector<8x32xbf16> to vector<8x8xbf16>
    %cst_287 = arith.constant dense<0.000000e+00> : vector<9x8xf32>
    %532 = tpu.matmul %530, %531, %cst_287 {dimension_numbers = #tpu.dot_dimension_numbers<[1], [0], [0], [1], [0, 0, 1, 1], [], []>} : vector<9x8xbf16>, vector<8x8xbf16>, vector<9x8xf32> -> vector<9x8xf32>
    %533 = tpu.concatenate %484, %500, %516, %532 in 1 : vector<9x8xf32>, vector<9x8xf32>, vector<9x8xf32>, vector<9x8xf32> -> vector<9x32xf32>
    %534 = arith.truncf %533 : vector<9x32xf32> to vector<9x32xbf16>
    %cst_288 = arith.constant dense<0.000000e+00> : vector<9x32xf32>
    %535 = tpu.matmul %534, %452, %cst_288 {dimension_numbers = #tpu.dot_dimension_numbers<[1], [0], [0], [1], [0, 0, 1, 1], [], []>} : vector<9x32xbf16>, vector<32x32xbf16>, vector<9x32xf32> -> vector<9x32xf32>
    %536 = vector.broadcast %454 : vector<1x32xf32> to vector<9x32xf32>
    %537 = arith.addf %535, %536 : vector<9x32xf32>
    %538 = arith.addf %436, %537 : vector<9x32xf32>
    %cst_289 = arith.constant dense<0.000000e+00> : vector<9xf32>
    %539 = vector.multi_reduction <add>, %436, %cst_289 [1] : vector<9x32xf32> to vector<9xf32>
    %540 = vector.shape_cast %539 : vector<9xf32> to vector<9x1xf32>
    %cst_290 = arith.constant dense<0.000000e+00> : vector<9xf32>
    %541 = vector.multi_reduction <add>, %538, %cst_290 [1] : vector<9x32xf32> to vector<9xf32>
    %542 = vector.shape_cast %541 : vector<9xf32> to vector<9x1xf32>
    %543 = arith.addf %540, %542 : vector<9x1xf32>
    %cst_291 = arith.constant 1.562500e-02 : f32
    %544 = vector.broadcast %cst_291 : f32 to vector<9x1xf32>
    %545 = arith.mulf %543, %544 : vector<9x1xf32>
    %546 = vector.broadcast %545 : vector<9x1xf32> to vector<9x32xf32>
    %547 = arith.subf %436, %546 : vector<9x32xf32>
    %548 = vector.broadcast %545 : vector<9x1xf32> to vector<9x32xf32>
    %549 = arith.subf %538, %548 : vector<9x32xf32>
    %550 = arith.mulf %547, %547 : vector<9x32xf32>
    %cst_292 = arith.constant dense<0.000000e+00> : vector<9xf32>
    %551 = vector.multi_reduction <add>, %550, %cst_292 [1] : vector<9x32xf32> to vector<9xf32>
    %552 = vector.shape_cast %551 : vector<9xf32> to vector<9x1xf32>
    %553 = arith.mulf %549, %549 : vector<9x32xf32>
    %cst_293 = arith.constant dense<0.000000e+00> : vector<9xf32>
    %554 = vector.multi_reduction <add>, %553, %cst_293 [1] : vector<9x32xf32> to vector<9xf32>
    %555 = vector.shape_cast %554 : vector<9xf32> to vector<9x1xf32>
    %556 = arith.addf %552, %555 : vector<9x1xf32>
    %cst_294 = arith.constant 1.562500e-02 : f32
    %557 = vector.broadcast %cst_294 : f32 to vector<9x1xf32>
    %558 = arith.mulf %556, %557 : vector<9x1xf32>
    %cst_295 = arith.constant 9.99999974E-6 : f32
    %559 = vector.broadcast %cst_295 : f32 to vector<9x1xf32>
    %560 = arith.addf %558, %559 : vector<9x1xf32>
    %561 = math.rsqrt %560 : vector<9x1xf32>
    %562 = vector.broadcast %561 : vector<9x1xf32> to vector<9x32xf32>
    %563 = arith.mulf %547, %562 : vector<9x32xf32>
    %c0_296 = arith.constant 0 : index
    %c0_297 = arith.constant 0 : index
    %c0_298 = arith.constant 0 : index
    %564 = vector.load %arg28[%c0_296, %c0_297, %c0_298] : memref<1x1x32xf32, #tpu.memory_space<vmem>>, vector<1x1x32xf32>
    %565 = vector.shape_cast %564 : vector<1x1x32xf32> to vector<1x32xf32>
    %566 = vector.broadcast %565 : vector<1x32xf32> to vector<9x32xf32>
    %567 = arith.mulf %563, %566 : vector<9x32xf32>
    %c0_299 = arith.constant 0 : index
    %c0_300 = arith.constant 0 : index
    %c0_301 = arith.constant 0 : index
    %568 = vector.load %arg29[%c0_299, %c0_300, %c0_301] : memref<1x1x32xf32, #tpu.memory_space<vmem>>, vector<1x1x32xf32>
    %569 = vector.shape_cast %568 : vector<1x1x32xf32> to vector<1x32xf32>
    %570 = vector.broadcast %569 : vector<1x32xf32> to vector<9x32xf32>
    %571 = arith.addf %567, %570 : vector<9x32xf32>
    %572 = arith.truncf %571 : vector<9x32xf32> to vector<9x32xbf16>
    %573 = vector.broadcast %561 : vector<9x1xf32> to vector<9x32xf32>
    %574 = arith.mulf %549, %573 : vector<9x32xf32>
    %c0_302 = arith.constant 0 : index
    %c0_303 = arith.constant 0 : index
    %c0_304 = arith.constant 0 : index
    %575 = vector.load %arg30[%c0_302, %c0_303, %c0_304] : memref<1x1x32xf32, #tpu.memory_space<vmem>>, vector<1x1x32xf32>
    %576 = vector.shape_cast %575 : vector<1x1x32xf32> to vector<1x32xf32>
    %577 = vector.broadcast %576 : vector<1x32xf32> to vector<9x32xf32>
    %578 = arith.mulf %574, %577 : vector<9x32xf32>
    %c0_305 = arith.constant 0 : index
    %c0_306 = arith.constant 0 : index
    %c0_307 = arith.constant 0 : index
    %579 = vector.load %arg31[%c0_305, %c0_306, %c0_307] : memref<1x1x32xf32, #tpu.memory_space<vmem>>, vector<1x1x32xf32>
    %580 = vector.shape_cast %579 : vector<1x1x32xf32> to vector<1x32xf32>
    %581 = vector.broadcast %580 : vector<1x32xf32> to vector<9x32xf32>
    %582 = arith.addf %578, %581 : vector<9x32xf32>
    %583 = arith.truncf %582 : vector<9x32xf32> to vector<9x32xbf16>
    %c0_308 = arith.constant 0 : index
    %c0_309 = arith.constant 0 : index
    %c0_310 = arith.constant 0 : index
    %584 = vector.load %arg32[%c0_308, %c0_309, %c0_310] : memref<1x32x64xbf16, #tpu.memory_space<vmem>>, vector<1x32x64xbf16>
    %585 = vector.shape_cast %584 : vector<1x32x64xbf16> to vector<32x64xbf16>
    %cst_311 = arith.constant dense<0.000000e+00> : vector<9x64xf32>
    %586 = tpu.matmul %572, %585, %cst_311 {dimension_numbers = #tpu.dot_dimension_numbers<[1], [0], [0], [1], [0, 0, 1, 1], [], []>} : vector<9x32xbf16>, vector<32x64xbf16>, vector<9x64xf32> -> vector<9x64xf32>
    %c0_312 = arith.constant 0 : index
    %c0_313 = arith.constant 0 : index
    %c0_314 = arith.constant 0 : index
    %587 = vector.load %arg33[%c0_312, %c0_313, %c0_314] : memref<1x32x64xbf16, #tpu.memory_space<vmem>>, vector<1x32x64xbf16>
    %588 = vector.shape_cast %587 : vector<1x32x64xbf16> to vector<32x64xbf16>
    %cst_315 = arith.constant dense<0.000000e+00> : vector<9x64xf32>
    %589 = tpu.matmul %583, %588, %cst_315 {dimension_numbers = #tpu.dot_dimension_numbers<[1], [0], [0], [1], [0, 0, 1, 1], [], []>} : vector<9x32xbf16>, vector<32x64xbf16>, vector<9x64xf32> -> vector<9x64xf32>
    %590 = arith.addf %586, %589 : vector<9x64xf32>
    %c0_316 = arith.constant 0 : index
    %c0_317 = arith.constant 0 : index
    %c0_318 = arith.constant 0 : index
    %591 = vector.load %arg34[%c0_316, %c0_317, %c0_318] : memref<1x1x64xf32, #tpu.memory_space<vmem>>, vector<1x1x64xf32>
    %592 = vector.shape_cast %591 : vector<1x1x64xf32> to vector<1x64xf32>
    %593 = vector.broadcast %592 : vector<1x64xf32> to vector<9x64xf32>
    %594 = arith.addf %590, %593 : vector<9x64xf32>
    %cst_319 = arith.constant 5.000000e-01 : f32
    %595 = vector.broadcast %cst_319 : f32 to vector<9x64xf32>
    %596 = arith.mulf %595, %594 : vector<9x64xf32>
    %cst_320 = arith.constant 0.707106769 : f32
    %597 = vector.broadcast %cst_320 : f32 to vector<9x64xf32>
    %598 = arith.mulf %594, %597 : vector<9x64xf32>
    %599 = math.absf %598 : vector<9x64xf32>
    %cst_321 = arith.constant 0.327591091 : f32
    %600 = vector.broadcast %cst_321 : f32 to vector<9x64xf32>
    %601 = arith.mulf %600, %599 : vector<9x64xf32>
    %cst_322 = arith.constant 1.000000e+00 : f32
    %602 = vector.broadcast %cst_322 : f32 to vector<9x64xf32>
    %603 = arith.addf %602, %601 : vector<9x64xf32>
    %cst_323 = arith.constant 1.000000e+00 : f32
    %604 = vector.broadcast %cst_323 : f32 to vector<9x64xf32>
    %605 = arith.divf %604, %603 : vector<9x64xf32>
    %cst_324 = arith.constant 1.06140542 : f32
    %606 = vector.broadcast %cst_324 : f32 to vector<9x64xf32>
    %607 = arith.mulf %606, %605 : vector<9x64xf32>
    %cst_325 = arith.constant -1.45315206 : f32
    %608 = vector.broadcast %cst_325 : f32 to vector<9x64xf32>
    %609 = arith.addf %607, %608 : vector<9x64xf32>
    %610 = arith.mulf %609, %605 : vector<9x64xf32>
    %cst_326 = arith.constant 1.42141378 : f32
    %611 = vector.broadcast %cst_326 : f32 to vector<9x64xf32>
    %612 = arith.addf %610, %611 : vector<9x64xf32>
    %613 = arith.mulf %612, %605 : vector<9x64xf32>
    %cst_327 = arith.constant -0.284496725 : f32
    %614 = vector.broadcast %cst_327 : f32 to vector<9x64xf32>
    %615 = arith.addf %613, %614 : vector<9x64xf32>
    %616 = arith.mulf %615, %605 : vector<9x64xf32>
    %cst_328 = arith.constant 0.254829586 : f32
    %617 = vector.broadcast %cst_328 : f32 to vector<9x64xf32>
    %618 = arith.addf %616, %617 : vector<9x64xf32>
    %619 = arith.mulf %618, %605 : vector<9x64xf32>
    %cst_329 = arith.constant 0.000000e+00 : f32
    %620 = vector.broadcast %cst_329 : f32 to vector<9x64xf32>
    %621 = arith.subf %620, %599 : vector<9x64xf32>
    %622 = arith.mulf %621, %599 : vector<9x64xf32>
    %623 = math.exp %622 : vector<9x64xf32>
    %624 = arith.mulf %619, %623 : vector<9x64xf32>
    %cst_330 = arith.constant 1.000000e+00 : f32
    %625 = vector.broadcast %cst_330 : f32 to vector<9x64xf32>
    %626 = arith.subf %625, %624 : vector<9x64xf32>
    %cst_331 = arith.constant 0.000000e+00 : f32
    %627 = vector.broadcast %cst_331 : f32 to vector<9x64xf32>
    %628 = arith.cmpf oge, %598, %627 : vector<9x64xf32>
    %cst_332 = arith.constant 0.000000e+00 : f32
    %629 = vector.broadcast %cst_332 : f32 to vector<9x64xf32>
    %630 = arith.subf %629, %626 : vector<9x64xf32>
    %631 = arith.select %628, %626, %630 : vector<9x64xi1>, vector<9x64xf32>
    %cst_333 = arith.constant 1.000000e+00 : f32
    %632 = vector.broadcast %cst_333 : f32 to vector<9x64xf32>
    %633 = arith.addf %632, %631 : vector<9x64xf32>
    %634 = arith.mulf %596, %633 : vector<9x64xf32>
    %635 = arith.truncf %634 : vector<9x64xf32> to vector<9x64xbf16>
    %c0_334 = arith.constant 0 : index
    %c0_335 = arith.constant 0 : index
    %c0_336 = arith.constant 0 : index
    %636 = vector.load %arg35[%c0_334, %c0_335, %c0_336] : memref<1x64x32xbf16, #tpu.memory_space<vmem>>, vector<1x64x32xbf16>
    %637 = vector.shape_cast %636 : vector<1x64x32xbf16> to vector<64x32xbf16>
    %cst_337 = arith.constant dense<0.000000e+00> : vector<9x32xf32>
    %638 = tpu.matmul %635, %637, %cst_337 {dimension_numbers = #tpu.dot_dimension_numbers<[1], [0], [0], [1], [0, 0, 1, 1], [], []>} : vector<9x64xbf16>, vector<64x32xbf16>, vector<9x32xf32> -> vector<9x32xf32>
    %c0_338 = arith.constant 0 : index
    %c0_339 = arith.constant 0 : index
    %c0_340 = arith.constant 0 : index
    %639 = vector.load %arg36[%c0_338, %c0_339, %c0_340] : memref<1x1x32xf32, #tpu.memory_space<vmem>>, vector<1x1x32xf32>
    %640 = vector.shape_cast %639 : vector<1x1x32xf32> to vector<1x32xf32>
    %641 = vector.broadcast %640 : vector<1x32xf32> to vector<9x32xf32>
    %642 = arith.addf %638, %641 : vector<9x32xf32>
    %643 = arith.addf %436, %642 : vector<9x32xf32>
    %c0_341 = arith.constant 0 : index
    %c0_342 = arith.constant 0 : index
    %644 = vector.load %arg42[%c0_341, %c0_342] : memref<9x32xf32, #tpu.memory_space<vmem>>, vector<9x32xf32>
    tpu.vector_store %arg42[%c0_341, %c0_342], %643 {strides = array<i32>} : memref<9x32xf32, #tpu.memory_space<vmem>>, vector<9x32xf32>,
    %c1_i32_343 = arith.constant 1 : i32
    %645 = arith.cmpi eq, %arg1, %c1_i32_343 : i32
    %646 = arith.extui %645 : i1 to i32
    %c0_i32_344 = arith.constant 0 : i32
    %647 = arith.cmpi ne, %646, %c0_i32_344 : i32
    scf.if %647 {
      %648 = vector.extract_strided_slice %643 {offsets = [0, 0], sizes = [1, 32], strides = [1, 1]} : vector<9x32xf32> to vector<1x32xf32>
      %c0_345 = arith.constant 0 : index
      %c0_346 = arith.constant 0 : index
      %649 = vector.load %arg37[%c0_345, %c0_346] : memref<1x32xf32, #tpu.memory_space<vmem>>, vector<1x32xf32>
      %c0_347 = arith.constant 0 : index
      %c0_348 = arith.constant 0 : index
      %650 = vector.load %arg38[%c0_347, %c0_348] : memref<1x32xf32, #tpu.memory_space<vmem>>, vector<1x32xf32>
      %cst_349 = arith.constant dense<0.000000e+00> : vector<1xf32>
      %651 = vector.multi_reduction <add>, %648, %cst_349 [1] : vector<1x32xf32> to vector<1xf32>
      %652 = vector.shape_cast %651 : vector<1xf32> to vector<1x1xf32>
      %cst_350 = arith.constant 3.200000e+01 : f32
      %653 = vector.broadcast %cst_350 : f32 to vector<1x1xf32>
      %654 = arith.divf %652, %653 : vector<1x1xf32>
      %655 = vector.broadcast %654 : vector<1x1xf32> to vector<1x32xf32>
      %656 = arith.subf %648, %655 : vector<1x32xf32>
      %657 = arith.mulf %656, %656 : vector<1x32xf32>
      %cst_351 = arith.constant dense<0.000000e+00> : vector<1xf32>
      %658 = vector.multi_reduction <add>, %657, %cst_351 [1] : vector<1x32xf32> to vector<1xf32>
      %659 = vector.shape_cast %658 : vector<1xf32> to vector<1x1xf32>
      %cst_352 = arith.constant 3.200000e+01 : f32
      %660 = vector.broadcast %cst_352 : f32 to vector<1x1xf32>
      %661 = arith.divf %659, %660 : vector<1x1xf32>
      %cst_353 = arith.constant 9.99999974E-6 : f32
      %662 = vector.broadcast %cst_353 : f32 to vector<1x1xf32>
      %663 = arith.addf %661, %662 : vector<1x1xf32>
      %664 = math.rsqrt %663 : vector<1x1xf32>
      %665 = vector.broadcast %664 : vector<1x1xf32> to vector<1x32xf32>
      %666 = arith.mulf %656, %665 : vector<1x32xf32>
      %667 = arith.mulf %666, %649 : vector<1x32xf32>
      %668 = arith.addf %667, %650 : vector<1x32xf32>
      %669 = arith.truncf %668 : vector<1x32xf32> to vector<1x32xbf16>
      %c0_354 = arith.constant 0 : index
      %c0_355 = arith.constant 0 : index
      %670 = vector.load %arg39[%c0_354, %c0_355] : memref<32x128xbf16, #tpu.memory_space<vmem>>, vector<32x128xbf16>
      %cst_356 = arith.constant dense<0.000000e+00> : vector<1x128xf32>
      %671 = tpu.matmul %669, %670, %cst_356 {dimension_numbers = #tpu.dot_dimension_numbers<[1], [0], [0], [1], [0, 0, 1, 1], [], []>} : vector<1x32xbf16>, vector<32x128xbf16>, vector<1x128xf32> -> vector<1x128xf32>
      %c0_357 = arith.constant 0 : index
      %c0_358 = arith.constant 0 : index
      %672 = vector.load %arg40[%c0_357, %c0_358] : memref<1x128xf32, #tpu.memory_space<vmem>>, vector<1x128xf32>
      %673 = arith.addf %671, %672 : vector<1x128xf32>
      %cst_359 = arith.constant dense<0xFF800000> : vector<1xf32>
      %674 = vector.multi_reduction <maximumf>, %673, %cst_359 [1] : vector<1x128xf32> to vector<1xf32>
      %675 = vector.shape_cast %674 : vector<1xf32> to vector<1x1xf32>
      %676 = vector.broadcast %675 : vector<1x1xf32> to vector<1x128xf32>
      %677 = arith.subf %673, %676 : vector<1x128xf32>
      %678 = math.exp %677 : vector<1x128xf32>
      %cst_360 = arith.constant dense<0.000000e+00> : vector<1xf32>
      %679 = vector.multi_reduction <add>, %678, %cst_360 [1] : vector<1x128xf32> to vector<1xf32>
      %680 = vector.shape_cast %679 : vector<1xf32> to vector<1x1xf32>
      %681 = math.log %680 : vector<1x1xf32>
      %682 = vector.broadcast %681 : vector<1x1xf32> to vector<1x128xf32>
      %683 = arith.subf %677, %682 : vector<1x128xf32>
      %c0_361 = arith.constant 0 : index
      %c0_362 = arith.constant 0 : index
      %c0_363 = arith.constant 0 : index
      %684 = vector.load %arg41[%c0_361, %c0_362, %c0_363] : memref<1x1x128xf32, #tpu.memory_space<vmem>>, vector<1x1x128xf32>
      %685 = vector.shape_cast %684 : vector<1x1x128xf32> to vector<1x128xf32>
      %686 = vector.shape_cast %683 : vector<1x128xf32> to vector<1x1x128xf32>
      tpu.vector_store %arg41[%c0_361, %c0_362, %c0_363], %686 {strides = array<i32>} : memref<1x1x128xf32, #tpu.memory_space<vmem>>, vector<1x1x128xf32>,
    } else {
    }
    return
  }
  func.func @transform_0(%arg0: i32, %arg1: i32) -> (i32, i32, i32) {
    %c0_i32 = arith.constant 0 : i32
    %c0_i32_0 = arith.constant 0 : i32
    %c0_i32_1 = arith.constant 0 : i32
    return %arg0, %c0_i32, %c0_i32_0 : i32, i32, i32
  }
  func.func @transform_1(%arg0: i32, %arg1: i32) -> (i32, i32, i32, i32) {
    %c0_i32 = arith.constant 0 : i32
    %c0_i32_0 = arith.constant 0 : i32
    %c0_i32_1 = arith.constant 0 : i32
    %c0_i32_2 = arith.constant 0 : i32
    return %arg0, %c0_i32, %c0_i32_0, %c0_i32_1 : i32, i32, i32, i32
  }
  func.func @transform_2(%arg0: i32, %arg1: i32) -> (i32, i32) {
    %c0_i32 = arith.constant 0 : i32
    %c0_i32_0 = arith.constant 0 : i32
    %c0_i32_1 = arith.constant 0 : i32
    return %c0_i32, %c0_i32_0 : i32, i32
  }
  func.func @transform_3(%arg0: i32, %arg1: i32) -> i32 {
    %c0_i32 = arith.constant 0 : i32
    %c0_i32_0 = arith.constant 0 : i32
    return %c0_i32 : i32
  }
  func.func @transform_4(%arg0: i32, %arg1: i32) -> i32 {
    %c0_i32 = arith.constant 0 : i32
    %c0_i32_0 = arith.constant 0 : i32
    return %c0_i32 : i32
  }
  func.func @transform_5(%arg0: i32, %arg1: i32) -> (i32, i32) {
    %c0_i32 = arith.constant 0 : i32
    %c0_i32_0 = arith.constant 0 : i32
    %c0_i32_1 = arith.constant 0 : i32
    return %c0_i32, %c0_i32_0 : i32, i32
  }
  func.func @transform_6(%arg0: i32, %arg1: i32) -> (i32, i32) {
    %c0_i32 = arith.constant 0 : i32
    %c0_i32_0 = arith.constant 0 : i32
    %c0_i32_1 = arith.constant 0 : i32
    return %c0_i32, %c0_i32_0 : i32, i32
  }
  func.func @transform_7(%arg0: i32, %arg1: i32) -> (i32, i32) {
    %c0_i32 = arith.constant 0 : i32
    %c0_i32_0 = arith.constant 0 : i32
    %c0_i32_1 = arith.constant 0 : i32
    return %c0_i32, %c0_i32_0 : i32, i32
  }
  func.func @transform_8(%arg0: i32, %arg1: i32) -> (i32, i32, i32) {
    %c0_i32 = arith.constant 0 : i32
    %c0_i32_0 = arith.constant 0 : i32
    %c0_i32_1 = arith.constant 0 : i32
    return %arg1, %c0_i32, %c0_i32_0 : i32, i32, i32
  }
  func.func @transform_9(%arg0: i32, %arg1: i32) -> (i32, i32, i32) {
    %c0_i32 = arith.constant 0 : i32
    %c0_i32_0 = arith.constant 0 : i32
    %c0_i32_1 = arith.constant 0 : i32
    return %arg1, %c0_i32, %c0_i32_0 : i32, i32, i32
  }
  func.func @transform_10(%arg0: i32, %arg1: i32) -> (i32, i32, i32) {
    %c0_i32 = arith.constant 0 : i32
    %c0_i32_0 = arith.constant 0 : i32
    %c0_i32_1 = arith.constant 0 : i32
    return %arg1, %c0_i32, %c0_i32_0 : i32, i32, i32
  }
  func.func @transform_11(%arg0: i32, %arg1: i32) -> (i32, i32, i32) {
    %c0_i32 = arith.constant 0 : i32
    %c0_i32_0 = arith.constant 0 : i32
    %c0_i32_1 = arith.constant 0 : i32
    return %arg1, %c0_i32, %c0_i32_0 : i32, i32, i32
  }
  func.func @transform_12(%arg0: i32, %arg1: i32) -> (i32, i32, i32) {
    %c0_i32 = arith.constant 0 : i32
    %c0_i32_0 = arith.constant 0 : i32
    %c0_i32_1 = arith.constant 0 : i32
    return %arg1, %c0_i32, %c0_i32_0 : i32, i32, i32
  }
  func.func @transform_13(%arg0: i32, %arg1: i32) -> (i32, i32, i32) {
    %c0_i32 = arith.constant 0 : i32
    %c0_i32_0 = arith.constant 0 : i32
    %c0_i32_1 = arith.constant 0 : i32
    return %arg1, %c0_i32, %c0_i32_0 : i32, i32, i32
  }
  func.func @transform_14(%arg0: i32, %arg1: i32) -> (i32, i32, i32) {
    %c0_i32 = arith.constant 0 : i32
    %c0_i32_0 = arith.constant 0 : i32
    %c0_i32_1 = arith.constant 0 : i32
    return %arg1, %c0_i32, %c0_i32_0 : i32, i32, i32
  }
  func.func @transform_15(%arg0: i32, %arg1: i32) -> (i32, i32, i32) {
    %c0_i32 = arith.constant 0 : i32
    %c0_i32_0 = arith.constant 0 : i32
    %c0_i32_1 = arith.constant 0 : i32
    return %arg1, %c0_i32, %c0_i32_0 : i32, i32, i32
  }
  func.func @transform_16(%arg0: i32, %arg1: i32) -> (i32, i32, i32) {
    %c0_i32 = arith.constant 0 : i32
    %c0_i32_0 = arith.constant 0 : i32
    %c0_i32_1 = arith.constant 0 : i32
    return %arg1, %c0_i32, %c0_i32_0 : i32, i32, i32
  }
  func.func @transform_17(%arg0: i32, %arg1: i32) -> (i32, i32, i32) {
    %c0_i32 = arith.constant 0 : i32
    %c0_i32_0 = arith.constant 0 : i32
    %c0_i32_1 = arith.constant 0 : i32
    return %arg1, %c0_i32, %c0_i32_0 : i32, i32, i32
  }
  func.func @transform_18(%arg0: i32, %arg1: i32) -> (i32, i32, i32) {
    %c0_i32 = arith.constant 0 : i32
    %c0_i32_0 = arith.constant 0 : i32
    %c0_i32_1 = arith.constant 0 : i32
    return %arg1, %c0_i32, %c0_i32_0 : i32, i32, i32
  }
  func.func @transform_19(%arg0: i32, %arg1: i32) -> (i32, i32, i32) {
    %c0_i32 = arith.constant 0 : i32
    %c0_i32_0 = arith.constant 0 : i32
    %c0_i32_1 = arith.constant 0 : i32
    return %arg1, %c0_i32, %c0_i32_0 : i32, i32, i32
  }
  func.func @transform_20(%arg0: i32, %arg1: i32) -> (i32, i32, i32) {
    %c0_i32 = arith.constant 0 : i32
    %c0_i32_0 = arith.constant 0 : i32
    %c0_i32_1 = arith.constant 0 : i32
    return %arg1, %c0_i32, %c0_i32_0 : i32, i32, i32
  }
  func.func @transform_21(%arg0: i32, %arg1: i32) -> (i32, i32, i32) {
    %c0_i32 = arith.constant 0 : i32
    %c0_i32_0 = arith.constant 0 : i32
    %c0_i32_1 = arith.constant 0 : i32
    return %arg1, %c0_i32, %c0_i32_0 : i32, i32, i32
  }
  func.func @transform_22(%arg0: i32, %arg1: i32) -> (i32, i32, i32) {
    %c0_i32 = arith.constant 0 : i32
    %c0_i32_0 = arith.constant 0 : i32
    %c0_i32_1 = arith.constant 0 : i32
    return %arg1, %c0_i32, %c0_i32_0 : i32, i32, i32
  }
  func.func @transform_23(%arg0: i32, %arg1: i32) -> (i32, i32, i32) {
    %c0_i32 = arith.constant 0 : i32
    %c0_i32_0 = arith.constant 0 : i32
    %c0_i32_1 = arith.constant 0 : i32
    return %arg1, %c0_i32, %c0_i32_0 : i32, i32, i32
  }
  func.func @transform_24(%arg0: i32, %arg1: i32) -> (i32, i32, i32) {
    %c0_i32 = arith.constant 0 : i32
    %c0_i32_0 = arith.constant 0 : i32
    %c0_i32_1 = arith.constant 0 : i32
    return %arg1, %c0_i32, %c0_i32_0 : i32, i32, i32
  }
  func.func @transform_25(%arg0: i32, %arg1: i32) -> (i32, i32, i32) {
    %c0_i32 = arith.constant 0 : i32
    %c0_i32_0 = arith.constant 0 : i32
    %c0_i32_1 = arith.constant 0 : i32
    return %arg1, %c0_i32, %c0_i32_0 : i32, i32, i32
  }
  func.func @transform_26(%arg0: i32, %arg1: i32) -> (i32, i32, i32) {
    %c0_i32 = arith.constant 0 : i32
    %c0_i32_0 = arith.constant 0 : i32
    %c0_i32_1 = arith.constant 0 : i32
    return %arg1, %c0_i32, %c0_i32_0 : i32, i32, i32
  }
  func.func @transform_27(%arg0: i32, %arg1: i32) -> (i32, i32, i32) {
    %c0_i32 = arith.constant 0 : i32
    %c0_i32_0 = arith.constant 0 : i32
    %c0_i32_1 = arith.constant 0 : i32
    return %arg1, %c0_i32, %c0_i32_0 : i32, i32, i32
  }
  func.func @transform_28(%arg0: i32, %arg1: i32) -> (i32, i32, i32) {
    %c0_i32 = arith.constant 0 : i32
    %c0_i32_0 = arith.constant 0 : i32
    %c0_i32_1 = arith.constant 0 : i32
    return %arg1, %c0_i32, %c0_i32_0 : i32, i32, i32
  }
  func.func @transform_29(%arg0: i32, %arg1: i32) -> (i32, i32, i32) {
    %c0_i32 = arith.constant 0 : i32
    %c0_i32_0 = arith.constant 0 : i32
    %c0_i32_1 = arith.constant 0 : i32
    return %arg1, %c0_i32, %c0_i32_0 : i32, i32, i32
  }
  func.func @transform_30(%arg0: i32, %arg1: i32) -> (i32, i32, i32) {
    %c0_i32 = arith.constant 0 : i32
    %c0_i32_0 = arith.constant 0 : i32
    %c0_i32_1 = arith.constant 0 : i32
    return %arg1, %c0_i32, %c0_i32_0 : i32, i32, i32
  }
  func.func @transform_31(%arg0: i32, %arg1: i32) -> (i32, i32, i32) {
    %c0_i32 = arith.constant 0 : i32
    %c0_i32_0 = arith.constant 0 : i32
    %c0_i32_1 = arith.constant 0 : i32
    return %arg1, %c0_i32, %c0_i32_0 : i32, i32, i32
  }
  func.func @transform_32(%arg0: i32, %arg1: i32) -> (i32, i32, i32) {
    %c0_i32 = arith.constant 0 : i32
    %c0_i32_0 = arith.constant 0 : i32
    %c0_i32_1 = arith.constant 0 : i32
    return %arg1, %c0_i32, %c0_i32_0 : i32, i32, i32
  }
  func.func @transform_33(%arg0: i32, %arg1: i32) -> (i32, i32, i32) {
    %c0_i32 = arith.constant 0 : i32
    %c0_i32_0 = arith.constant 0 : i32
    %c0_i32_1 = arith.constant 0 : i32
    return %arg1, %c0_i32, %c0_i32_0 : i32, i32, i32
  }
  func.func @transform_34(%arg0: i32, %arg1: i32) -> (i32, i32, i32) {
    %c0_i32 = arith.constant 0 : i32
    %c0_i32_0 = arith.constant 0 : i32
    %c0_i32_1 = arith.constant 0 : i32
    return %arg1, %c0_i32, %c0_i32_0 : i32, i32, i32
  }
  func.func @transform_35(%arg0: i32, %arg1: i32) -> (i32, i32) {
    %c0_i32 = arith.constant 0 : i32
    %c0_i32_0 = arith.constant 0 : i32
    %c0_i32_1 = arith.constant 0 : i32
    return %c0_i32, %c0_i32_0 : i32, i32
  }
  func.func @transform_36(%arg0: i32, %arg1: i32) -> (i32, i32) {
    %c0_i32 = arith.constant 0 : i32
    %c0_i32_0 = arith.constant 0 : i32
    %c0_i32_1 = arith.constant 0 : i32
    return %c0_i32, %c0_i32_0 : i32, i32
  }
  func.func @transform_37(%arg0: i32, %arg1: i32) -> (i32, i32) {
    %c0_i32 = arith.constant 0 : i32
    %c0_i32_0 = arith.constant 0 : i32
    %c0_i32_1 = arith.constant 0 : i32
    return %c0_i32, %c0_i32_0 : i32, i32
  }
  func.func @transform_38(%arg0: i32, %arg1: i32) -> (i32, i32) {
    %c0_i32 = arith.constant 0 : i32
    %c0_i32_0 = arith.constant 0 : i32
    %c0_i32_1 = arith.constant 0 : i32
    return %c0_i32, %c0_i32_0 : i32, i32
  }
  func.func @transform_39(%arg0: i32, %arg1: i32) -> (i32, i32, i32) {
    %c0_i32 = arith.constant 0 : i32
    %c0_i32_0 = arith.constant 0 : i32
    %c0_i32_1 = arith.constant 0 : i32
    return %arg0, %c0_i32, %c0_i32_0 : i32, i32, i32
  }
}

</mosaic_0001>

<llo_original>
// kernel: gt_forward.1
$region0: #{gt_forward.1}
  #allocation0 [shape = 'u32[]', space=smem, size = 0x4, offset = 0x4, fixed_abs, tag = 'smem constant byte address 0x4 - core index']
  #allocation1 [shape = 'u32[144,128]{1,0:T(1,128)}', space=vmem, size = 0x12000, scoped, tag = 'internal scratch']
  #allocation2 [shape = 'f32[9,32]{1,0:T(8,128)}', space=vmem, size = 0x2000, scoped, tag = 'scratch operand']
  %s0 = inlined_call_operand.smem [shape: u32[40], index: -1, kind: input, shape index: {}]
  %s1 = sld [smem:[%s0]]
  %s2 = scalar_lea.smem %s0, 1
  %s3 = sld [smem:[%s2]]
  %s4 = scalar_lea.smem %s0, 2
  %s5 = sld [smem:[%s4]]
  %s6 = scalar_lea.smem %s0, 3
  %s7 = sld [smem:[%s6]]
  %s8 = scalar_lea.smem %s0, 4
  %s9 = sld [smem:[%s8]]
  %s10 = scalar_lea.smem %s0, 5
  %s11 = sld [smem:[%s10]]
  %s12 = scalar_lea.smem %s0, 6
  %s13 = sld [smem:[%s12]]
  %s14 = scalar_lea.smem %s0, 7
  %s15 = sld [smem:[%s14]]
  %s16 = scalar_lea.smem %s0, 8
  %s17 = sld [smem:[%s16]]
  %s18 = scalar_lea.smem %s0, 9
  %s19 = sld [smem:[%s18]]
  %s20 = scalar_lea.smem %s0, 10
  %s21 = sld [smem:[%s20]]
  %s22 = scalar_lea.smem %s0, 11
  %s23 = sld [smem:[%s22]]
  %s24 = scalar_lea.smem %s0, 12
  %s25 = sld [smem:[%s24]]
  %s26 = scalar_lea.smem %s0, 13
  %s27 = sld [smem:[%s26]]
  %s28 = scalar_lea.smem %s0, 14
  %s29 = sld [smem:[%s28]]
  %s30 = scalar_lea.smem %s0, 15
  %s31 = sld [smem:[%s30]]
  %s32 = scalar_lea.smem %s0, 16
  %s33 = sld [smem:[%s32]]
  %s34 = scalar_lea.smem %s0, 17
  %s35 = sld [smem:[%s34]]
  %s36 = scalar_lea.smem %s0, 18
  %s37 = sld [smem:[%s36]]
  %s38 = scalar_lea.smem %s0, 19
  %s39 = sld [smem:[%s38]]
  %s40 = scalar_lea.smem %s0, 20
  %s41 = sld [smem:[%s40]]
  %s42 = scalar_lea.smem %s0, 21
  %s43 = sld [smem:[%s42]]
  %s44 = scalar_lea.smem %s0, 22
  %s45 = sld [smem:[%s44]]
  %s46 = scalar_lea.smem %s0, 23
  %s47 = sld [smem:[%s46]]
  %s48 = scalar_lea.smem %s0, 24
  %s49 = sld [smem:[%s48]]
  %s50 = scalar_lea.smem %s0, 25
  %s51 = sld [smem:[%s50]]
  %s52 = scalar_lea.smem %s0, 26
  %s53 = sld [smem:[%s52]]
  %s54 = scalar_lea.smem %s0, 27
  %s55 = sld [smem:[%s54]]
  %s56 = scalar_lea.smem %s0, 28
  %s57 = sld [smem:[%s56]]
  %s58 = scalar_lea.smem %s0, 29
  %s59 = sld [smem:[%s58]]
  %s60 = scalar_lea.smem %s0, 30
  %s61 = sld [smem:[%s60]]
  %s62 = scalar_lea.smem %s0, 31
  %s63 = sld [smem:[%s62]]
  %s64 = scalar_lea.smem %s0, 32
  %s65 = sld [smem:[%s64]]
  %s66 = scalar_lea.smem %s0, 33
  %s67 = sld [smem:[%s66]]
  %s68 = scalar_lea.smem %s0, 34
  %s69 = sld [smem:[%s68]]
  %s70 = scalar_lea.smem %s0, 35
  %s71 = sld [smem:[%s70]]
  %s72 = scalar_lea.smem %s0, 36
  %s73 = sld [smem:[%s72]]
  %s74 = scalar_lea.smem %s0, 37
  %s75 = sld [smem:[%s74]]
  %s76 = scalar_lea.smem %s0, 38
  %s77 = sld [smem:[%s76]]
  %s78 = scalar_lea.smem %s0, 39
  %s79 = sld [smem:[%s78]]
  %s80 = sld [smem:[#allocation0]]
  $region205: #{gt_forward.1} parent=0
    _
  %s82 = ssub.s32 1, %s80
  %s83 = scalar_select 0, %s82, %s80
  $region1: #{gt_forward.1} parent=0
    #allocation3 [shape = 'u8[512]{0}', space=smem, size = 0x200, scoped, tag = 'input window, operand 3, single buffered']
    #allocation4 [shape = 's32[2]{0}', space=sflag, size = 0x8, scoped, tag = 'scoped memory for gt_forward.1']
    #allocation5 [shape = 's32[2]{0}', space=sflag, size = 0x8, scoped, tag = 'scoped memory for gt_forward.1']
    #allocation6 [shape = 'u8[512]{0}', space=smem, size = 0x200, scoped, tag = 'input window, operand 4, single buffered']
    #allocation7 [shape = 's32[1]{0}', space=sflag, size = 0x4, scoped, tag = 'scoped memory for gt_forward.1']
    #allocation8 [shape = 'u8[1024]{0}', space=vmem, size = 0x400, scoped, tag = 'output window, operand 0']
    %84 = vsyncpa [#allocation5], 0
    %85 = vsyncpa [#allocation7], 0
    %86 = vsyncpa [#allocation4], 0
    %s87 = scalar_lea.sflag [#allocation4], 1
    %88 = vsyncpa %s87, 0
    loop: start=0, step=1, limit=6
    $region2: #{gt_forward.1} parent=1 // loop_pre_header
      _
    $region3: #{gt_forward.1} parent=1 // loop_header
      %s90 = sphi 0, %s94
      %p91 = scmp.ge.s32.totalorder %s90, 6
      %s97 = sphi 0, %s109
      %s98 = sphi 0, %s105
      %s99 = sphi 0, %s97
      %s100 = sphi 0, %s98
      %s101 = sphi 0, %s99
      %s102 = sphi 0, %s100
      %s112 = sphi 0, %s114
      %s115 = sphi 0, %s112
      %s116 = sphi 0, %s115
      %s132 = sphi 0, %s116
      %s138 = sphi 0, %s140
      %s141 = sphi 0, %s138
      %s142 = sphi 0, %s141
      %s158 = sphi 0, %s142
      %s162 = sphi 0, %s162
      %s164 = sphi 0, %s162
      %s165 = sphi 0, %s164
      %s179 = sphi 0, %s165
      %s183 = sphi 0, %s183
      %s185 = sphi 0, %s183
      %s186 = sphi 0, %s185
      %s200 = sphi 0, %s186
      %s204 = sphi 0, %s204
      %s206 = sphi 0, %s204
      %s207 = sphi 0, %s206
      %s221 = sphi 0, %s207
      %s225 = sphi 0, %s225
      %s227 = sphi 0, %s225
      %s228 = sphi 0, %s227
      %s242 = sphi 0, %s228
      %s246 = sphi 0, %s246
      %s248 = sphi 0, %s246
      %s249 = sphi 0, %s248
      %s263 = sphi 0, %s249
      %s267 = sphi 0, %s267
      %s269 = sphi 0, %s267
      %s270 = sphi 0, %s269
      %s284 = sphi 0, %s270
      %s290 = sphi 0, %s292
      %s293 = sphi 0, %s290
      %s294 = sphi 0, %s293
      %s310 = sphi 0, %s294
      %s316 = sphi 0, %s318
      %s319 = sphi 0, %s316
      %s320 = sphi 0, %s319
      %s336 = sphi 0, %s320
      %s342 = sphi 0, %s344
      %s345 = sphi 0, %s342
      %s346 = sphi 0, %s345
      %s362 = sphi 0, %s346
      %s368 = sphi 0, %s370
      %s371 = sphi 0, %s368
      %s372 = sphi 0, %s371
      %s388 = sphi 0, %s372
      %s394 = sphi 0, %s396
      %s397 = sphi 0, %s394
      %s398 = sphi 0, %s397
      %s414 = sphi 0, %s398
      %s420 = sphi 0, %s422
      %s423 = sphi 0, %s420
      %s424 = sphi 0, %s423
      %s440 = sphi 0, %s424
      %s446 = sphi 0, %s448
      %s449 = sphi 0, %s446
      %s450 = sphi 0, %s449
      %s466 = sphi 0, %s450
      %s472 = sphi 0, %s474
      %s475 = sphi 0, %s472
      %s476 = sphi 0, %s475
      %s492 = sphi 0, %s476
      %s498 = sphi 0, %s500
      %s501 = sphi 0, %s498
      %s502 = sphi 0, %s501
      %s518 = sphi 0, %s502
      %s524 = sphi 0, %s526
      %s527 = sphi 0, %s524
      %s528 = sphi 0, %s527
      %s544 = sphi 0, %s528
      %s550 = sphi 0, %s552
      %s553 = sphi 0, %s550
      %s554 = sphi 0, %s553
      %s570 = sphi 0, %s554
      %s576 = sphi 0, %s578
      %s579 = sphi 0, %s576
      %s580 = sphi 0, %s579
      %s596 = sphi 0, %s580
      %s602 = sphi 0, %s604
      %s605 = sphi 0, %s602
      %s606 = sphi 0, %s605
      %s622 = sphi 0, %s606
      %s628 = sphi 0, %s630
      %s631 = sphi 0, %s628
      %s632 = sphi 0, %s631
      %s648 = sphi 0, %s632
      %s654 = sphi 0, %s656
      %s657 = sphi 0, %s654
      %s658 = sphi 0, %s657
      %s674 = sphi 0, %s658
      %s680 = sphi 0, %s682
      %s683 = sphi 0, %s680
      %s684 = sphi 0, %s683
      %s700 = sphi 0, %s684
      %s706 = sphi 0, %s708
      %s709 = sphi 0, %s706
      %s710 = sphi 0, %s709
      %s726 = sphi 0, %s710
      %s732 = sphi 0, %s734
      %s735 = sphi 0, %s732
      %s736 = sphi 0, %s735
      %s752 = sphi 0, %s736
      %s758 = sphi 0, %s760
      %s761 = sphi 0, %s758
      %s762 = sphi 0, %s761
      %s778 = sphi 0, %s762
      %s784 = sphi 0, %s786
      %s787 = sphi 0, %s784
      %s788 = sphi 0, %s787
      %s804 = sphi 0, %s788
      %s810 = sphi 0, %s812
      %s813 = sphi 0, %s810
      %s814 = sphi 0, %s813
      %s830 = sphi 0, %s814
      %s836 = sphi 0, %s838
      %s839 = sphi 0, %s836
      %s840 = sphi 0, %s839
      %s856 = sphi 0, %s840
      %s862 = sphi 0, %s864
      %s865 = sphi 0, %s862
      %s866 = sphi 0, %s865
      %s882 = sphi 0, %s866
      %s888 = sphi 0, %s890
      %s891 = sphi 0, %s888
      %s892 = sphi 0, %s891
      %s908 = sphi 0, %s892
      %s914 = sphi 0, %s916
      %s917 = sphi 0, %s914
      %s918 = sphi 0, %s917
      %s934 = sphi 0, %s918
      %s940 = sphi 0, %s942
      %s943 = sphi 0, %s940
      %s944 = sphi 0, %s943
      %s960 = sphi 0, %s944
      %s966 = sphi 0, %s968
      %s969 = sphi 0, %s966
      %s970 = sphi 0, %s969
      %s986 = sphi 0, %s970
      %s990 = sphi 0, %s990
      %s992 = sphi 0, %s990
      %s993 = sphi 0, %s992
      %s1007 = sphi 0, %s993
      %s1011 = sphi 0, %s1011
      %s1013 = sphi 0, %s1011
      %s1014 = sphi 0, %s1013
      %s1028 = sphi 0, %s1014
      %s1032 = sphi 0, %s1032
      %s1034 = sphi 0, %s1032
      %s1035 = sphi 0, %s1034
      %s1049 = sphi 0, %s1035
      %s1053 = sphi 0, %s1053
      %s1055 = sphi 0, %s1053
      %s1056 = sphi 0, %s1055
      %s1070 = sphi 0, %s1056
      %s1076 = sphi 0, %s1078
      %s1079 = sphi 0, %s1076
      %s1080 = sphi 0, %s1079
      %s1096 = sphi 0, %s1080
    $region4: #{gt_forward.1} parent=1 // loop_header_branch
      %93 = sbr.rel (%p91) target = $region8
    $region5: #{gt_forward.1} parent=1 // loop_body
      %s95 = ssub.s32 %s90, 1
      %s96 = ssub.s32 %s90, 2
      %s103 = sadd.s32 1, %s98
      %p104 = scmp.ge.s32.totalorder %s103, 2
      %s105 = scalar_select %p104, 0, %s103
      %s106 = sadd.s32 1, %s97
      %s107 = scalar_select %p104, %s106, %s97
      %p108 = scmp.ge.s32.totalorder %s107, 2
      %s109 = scalar_select %p108, 0, %s107
      %s110 = ssub.s32 %s97, %s109
      %p111 = scmp.eq.s32.totalorder %s110, 0
      %s113 = sadd.s32 %s112, 1
      %s114 = scalar_select %p111, %s112, %s113
      %p117 = pneg %p111
      %p118 = scmp.eq.s32.totalorder %s90, 3
      %p119 = por %p117, %p118
      %p120 = scmp.ne.s32.totalorder %s112, %s115
      %p121 = scmp.eq.s32.totalorder %s90, 0
      %p122 = por %p120, %p121
      %p123 = scmp.ne.s32.totalorder %s112, %s115
      %p124 = scmp.eq.s32.totalorder %s95, 3
      %p125 = por %p123, %p124
      %p126 = scmp.ne.s32.totalorder %s115, %s116
      %p127 = scmp.eq.s32.totalorder %s95, 0
      %p128 = por %p126, %p127
      %p129 = scmp.ne.s32.totalorder %s115, %s116
      %p130 = scmp.eq.s32.totalorder %s96, 3
      %p131 = por %p129, %p130
      %p133 = scmp.ne.s32.totalorder %s116, %s132
      %p134 = scmp.eq.s32.totalorder %s96, 0
      %p135 = por %p133, %p134
      %s136 = ssub.s32 %s97, %s109
      %p137 = scmp.eq.s32.totalorder %s136, 0
      %s139 = sadd.s32 %s138, 1
      %s140 = scalar_select %p137, %s138, %s139
      %p143 = pneg %p137
      %p144 = scmp.eq.s32.totalorder %s90, 3
      %p145 = por %p143, %p144
      %p146 = scmp.ne.s32.totalorder %s138, %s141
      %p147 = scmp.eq.s32.totalorder %s90, 0
      %p148 = por %p146, %p147
      %p149 = scmp.ne.s32.totalorder %s138, %s141
      %p150 = scmp.eq.s32.totalorder %s95, 3
      %p151 = por %p149, %p150
      %p152 = scmp.ne.s32.totalorder %s141, %s142
      %p153 = scmp.eq.s32.totalorder %s95, 0
      %p154 = por %p152, %p153
      %p155 = scmp.ne.s32.totalorder %s141, %s142
      %p156 = scmp.eq.s32.totalorder %s96, 3
      %p157 = por %p155, %p156
      %p159 = scmp.ne.s32.totalorder %s142, %s158
      %p160 = scmp.eq.s32.totalorder %s96, 0
      %p161 = por %p159, %p160
      %s163 = sadd.s32 %s162, 1
      %p166 = scmp.eq.s32.totalorder %s90, 3
      %p167 = scmp.ne.s32.totalorder %s162, %s164
      %p168 = scmp.eq.s32.totalorder %s90, 0
      %p169 = por %p167, %p168
      %p170 = scmp.ne.s32.totalorder %s162, %s164
      %p171 = scmp.eq.s32.totalorder %s95, 3
      %p172 = por %p170, %p171
      %p173 = scmp.ne.s32.totalorder %s164, %s165
      %p174 = scmp.eq.s32.totalorder %s95, 0
      %p175 = por %p173, %p174
      %p176 = scmp.ne.s32.totalorder %s164, %s165
      %p177 = scmp.eq.s32.totalorder %s96, 3
      %p178 = por %p176, %p177
      %p180 = scmp.ne.s32.totalorder %s165, %s179
      %p181 = scmp.eq.s32.totalorder %s96, 0
      %p182 = por %p180, %p181
      %s184 = sadd.s32 %s183, 1
      %p187 = scmp.eq.s32.totalorder %s90, 3
      %p188 = scmp.ne.s32.totalorder %s183, %s185
      %p189 = scmp.eq.s32.totalorder %s90, 0
      %p190 = por %p188, %p189
      %p191 = scmp.ne.s32.totalorder %s183, %s185
      %p192 = scmp.eq.s32.totalorder %s95, 3
      %p193 = por %p191, %p192
      %p194 = scmp.ne.s32.totalorder %s185, %s186
      %p195 = scmp.eq.s32.totalorder %s95, 0
      %p196 = por %p194, %p195
      %p197 = scmp.ne.s32.totalorder %s185, %s186
      %p198 = scmp.eq.s32.totalorder %s96, 3
      %p199 = por %p197, %p198
      %p201 = scmp.ne.s32.totalorder %s186, %s200
      %p202 = scmp.eq.s32.totalorder %s96, 0
      %p203 = por %p201, %p202
      %s205 = sadd.s32 %s204, 1
      %p208 = scmp.eq.s32.totalorder %s90, 3
      %p209 = scmp.ne.s32.totalorder %s204, %s206
      %p210 = scmp.eq.s32.totalorder %s90, 0
      %p211 = por %p209, %p210
      %p212 = scmp.ne.s32.totalorder %s204, %s206
      %p213 = scmp.eq.s32.totalorder %s95, 3
      %p214 = por %p212, %p213
      %p215 = scmp.ne.s32.totalorder %s206, %s207
      %p216 = scmp.eq.s32.totalorder %s95, 0
      %p217 = por %p215, %p216
      %p218 = scmp.ne.s32.totalorder %s206, %s207
      %p219 = scmp.eq.s32.totalorder %s96, 3
      %p220 = por %p218, %p219
      %p222 = scmp.ne.s32.totalorder %s207, %s221
      %p223 = scmp.eq.s32.totalorder %s96, 0
      %p224 = por %p222, %p223
      %s226 = sadd.s32 %s225, 1
      %p229 = scmp.eq.s32.totalorder %s90, 3
      %p230 = scmp.ne.s32.totalorder %s225, %s227
      %p231 = scmp.eq.s32.totalorder %s90, 0
      %p232 = por %p230, %p231
      %p233 = scmp.ne.s32.totalorder %s225, %s227
      %p234 = scmp.eq.s32.totalorder %s95, 3
      %p235 = por %p233, %p234
      %p236 = scmp.ne.s32.totalorder %s227, %s228
      %p237 = scmp.eq.s32.totalorder %s95, 0
      %p238 = por %p236, %p237
      %p239 = scmp.ne.s32.totalorder %s227, %s228
      %p240 = scmp.eq.s32.totalorder %s96, 3
      %p241 = por %p239, %p240
      %p243 = scmp.ne.s32.totalorder %s228, %s242
      %p244 = scmp.eq.s32.totalorder %s96, 0
      %p245 = por %p243, %p244
      %s247 = sadd.s32 %s246, 1
      %p250 = scmp.eq.s32.totalorder %s90, 3
      %p251 = scmp.ne.s32.totalorder %s246, %s248
      %p252 = scmp.eq.s32.totalorder %s90, 0
      %p253 = por %p251, %p252
      %p254 = scmp.ne.s32.totalorder %s246, %s248
      %p255 = scmp.eq.s32.totalorder %s95, 3
      %p256 = por %p254, %p255
      %p257 = scmp.ne.s32.totalorder %s248, %s249
      %p258 = scmp.eq.s32.totalorder %s95, 0
      %p259 = por %p257, %p258
      %p260 = scmp.ne.s32.totalorder %s248, %s249
      %p261 = scmp.eq.s32.totalorder %s96, 3
      %p262 = por %p260, %p261
      %p264 = scmp.ne.s32.totalorder %s249, %s263
      %p265 = scmp.eq.s32.totalorder %s96, 0
      %p266 = por %p264, %p265
      %s268 = sadd.s32 %s267, 1
      %p271 = scmp.eq.s32.totalorder %s90, 3
      %p272 = scmp.ne.s32.totalorder %s267, %s269
      %p273 = scmp.eq.s32.totalorder %s90, 0
      %p274 = por %p272, %p273
      %p275 = scmp.ne.s32.totalorder %s267, %s269
      %p276 = scmp.eq.s32.totalorder %s95, 3
      %p277 = por %p275, %p276
      %p278 = scmp.ne.s32.totalorder %s269, %s270
      %p279 = scmp.eq.s32.totalorder %s95, 0
      %p280 = por %p278, %p279
      %p281 = scmp.ne.s32.totalorder %s269, %s270
      %p282 = scmp.eq.s32.totalorder %s96, 3
      %p283 = por %p281, %p282
      %p285 = scmp.ne.s32.totalorder %s270, %s284
      %p286 = scmp.eq.s32.totalorder %s96, 0
      %p287 = por %p285, %p286
      %s288 = ssub.s32 %s98, %s105
      %p289 = scmp.eq.s32.totalorder %s288, 0
      %s291 = sadd.s32 %s290, 1
      %s292 = scalar_select %p289, %s290, %s291
      %p295 = pneg %p289
      %p296 = scmp.eq.s32.totalorder %s90, 3
      %p297 = por %p295, %p296
      %p298 = scmp.ne.s32.totalorder %s290, %s293
      %p299 = scmp.eq.s32.totalorder %s90, 0
      %p300 = por %p298, %p299
      %p301 = scmp.ne.s32.totalorder %s290, %s293
      %p302 = scmp.eq.s32.totalorder %s95, 3
      %p303 = por %p301, %p302
      %p304 = scmp.ne.s32.totalorder %s293, %s294
      %p305 = scmp.eq.s32.totalorder %s95, 0
      %p306 = por %p304, %p305
      %p307 = scmp.ne.s32.totalorder %s293, %s294
      %p308 = scmp.eq.s32.totalorder %s96, 3
      %p309 = por %p307, %p308
      %p311 = scmp.ne.s32.totalorder %s294, %s310
      %p312 = scmp.eq.s32.totalorder %s96, 0
      %p313 = por %p311, %p312
      %s314 = ssub.s32 %s98, %s105
      %p315 = scmp.eq.s32.totalorder %s314, 0
      %s317 = sadd.s32 %s316, 1
      %s318 = scalar_select %p315, %s316, %s317
      %p321 = pneg %p315
      %p322 = scmp.eq.s32.totalorder %s90, 3
      %p323 = por %p321, %p322
      %p324 = scmp.ne.s32.totalorder %s316, %s319
      %p325 = scmp.eq.s32.totalorder %s90, 0
      %p326 = por %p324, %p325
      %p327 = scmp.ne.s32.totalorder %s316, %s319
      %p328 = scmp.eq.s32.totalorder %s95, 3
      %p329 = por %p327, %p328
      %p330 = scmp.ne.s32.totalorder %s319, %s320
      %p331 = scmp.eq.s32.totalorder %s95, 0
      %p332 = por %p330, %p331
      %p333 = scmp.ne.s32.totalorder %s319, %s320
      %p334 = scmp.eq.s32.totalorder %s96, 3
      %p335 = por %p333, %p334
      %p337 = scmp.ne.s32.totalorder %s320, %s336
      %p338 = scmp.eq.s32.totalorder %s96, 0
      %p339 = por %p337, %p338
      %s340 = ssub.s32 %s98, %s105
      %p341 = scmp.eq.s32.totalorder %s340, 0
      %s343 = sadd.s32 %s342, 1
      %s344 = scalar_select %p341, %s342, %s343
      %p347 = pneg %p341
      %p348 = scmp.eq.s32.totalorder %s90, 3
      %p349 = por %p347, %p348
      %p350 = scmp.ne.s32.totalorder %s342, %s345
      %p351 = scmp.eq.s32.totalorder %s90, 0
      %p352 = por %p350, %p351
      %p353 = scmp.ne.s32.totalorder %s342, %s345
      %p354 = scmp.eq.s32.totalorder %s95, 3
      %p355 = por %p353, %p354
      %p356 = scmp.ne.s32.totalorder %s345, %s346
      %p357 = scmp.eq.s32.totalorder %s95, 0
      %p358 = por %p356, %p357
      %p359 = scmp.ne.s32.totalorder %s345, %s346
      %p360 = scmp.eq.s32.totalorder %s96, 3
      %p361 = por %p359, %p360
      %p363 = scmp.ne.s32.totalorder %s346, %s362
      %p364 = scmp.eq.s32.totalorder %s96, 0
      %p365 = por %p363, %p364
      %s366 = ssub.s32 %s98, %s105
      %p367 = scmp.eq.s32.totalorder %s366, 0
      %s369 = sadd.s32 %s368, 1
      %s370 = scalar_select %p367, %s368, %s369
      %p373 = pneg %p367
      %p374 = scmp.eq.s32.totalorder %s90, 3
      %p375 = por %p373, %p374
      %p376 = scmp.ne.s32.totalorder %s368, %s371
      %p377 = scmp.eq.s32.totalorder %s90, 0
      %p378 = por %p376, %p377
      %p379 = scmp.ne.s32.totalorder %s368, %s371
      %p380 = scmp.eq.s32.totalorder %s95, 3
      %p381 = por %p379, %p380
      %p382 = scmp.ne.s32.totalorder %s371, %s372
      %p383 = scmp.eq.s32.totalorder %s95, 0
      %p384 = por %p382, %p383
      %p385 = scmp.ne.s32.totalorder %s371, %s372
      %p386 = scmp.eq.s32.totalorder %s96, 3
      %p387 = por %p385, %p386
      %p389 = scmp.ne.s32.totalorder %s372, %s388
      %p390 = scmp.eq.s32.totalorder %s96, 0
      %p391 = por %p389, %p390
      %s392 = ssub.s32 %s98, %s105
      %p393 = scmp.eq.s32.totalorder %s392, 0
      %s395 = sadd.s32 %s394, 1
      %s396 = scalar_select %p393, %s394, %s395
      %p399 = pneg %p393
      %p400 = scmp.eq.s32.totalorder %s90, 3
      %p401 = por %p399, %p400
      %p402 = scmp.ne.s32.totalorder %s394, %s397
      %p403 = scmp.eq.s32.totalorder %s90, 0
      %p404 = por %p402, %p403
      %p405 = scmp.ne.s32.totalorder %s394, %s397
      %p406 = scmp.eq.s32.totalorder %s95, 3
      %p407 = por %p405, %p406
      %p408 = scmp.ne.s32.totalorder %s397, %s398
      %p409 = scmp.eq.s32.totalorder %s95, 0
      %p410 = por %p408, %p409
      %p411 = scmp.ne.s32.totalorder %s397, %s398
      %p412 = scmp.eq.s32.totalorder %s96, 3
      %p413 = por %p411, %p412
      %p415 = scmp.ne.s32.totalorder %s398, %s414
      %p416 = scmp.eq.s32.totalorder %s96, 0
      %p417 = por %p415, %p416
      %s418 = ssub.s32 %s98, %s105
      %p419 = scmp.eq.s32.totalorder %s418, 0
      %s421 = sadd.s32 %s420, 1
      %s422 = scalar_select %p419, %s420, %s421
      %p425 = pneg %p419
      %p426 = scmp.eq.s32.totalorder %s90, 3
      %p427 = por %p425, %p426
      %p428 = scmp.ne.s32.totalorder %s420, %s423
      %p429 = scmp.eq.s32.totalorder %s90, 0
      %p430 = por %p428, %p429
      %p431 = scmp.ne.s32.totalorder %s420, %s423
      %p432 = scmp.eq.s32.totalorder %s95, 3
      %p433 = por %p431, %p432
      %p434 = scmp.ne.s32.totalorder %s423, %s424
      %p435 = scmp.eq.s32.totalorder %s95, 0
      %p436 = por %p434, %p435
      %p437 = scmp.ne.s32.totalorder %s423, %s424
      %p438 = scmp.eq.s32.totalorder %s96, 3
      %p439 = por %p437, %p438
      %p441 = scmp.ne.s32.totalorder %s424, %s440
      %p442 = scmp.eq.s32.totalorder %s96, 0
      %p443 = por %p441, %p442
      %s444 = ssub.s32 %s98, %s105
      %p445 = scmp.eq.s32.totalorder %s444, 0
      %s447 = sadd.s32 %s446, 1
      %s448 = scalar_select %p445, %s446, %s447
      %p451 = pneg %p445
      %p452 = scmp.eq.s32.totalorder %s90, 3
      %p453 = por %p451, %p452
      %p454 = scmp.ne.s32.totalorder %s446, %s449
      %p455 = scmp.eq.s32.totalorder %s90, 0
      %p456 = por %p454, %p455
      %p457 = scmp.ne.s32.totalorder %s446, %s449
      %p458 = scmp.eq.s32.totalorder %s95, 3
      %p459 = por %p457, %p458
      %p460 = scmp.ne.s32.totalorder %s449, %s450
      %p461 = scmp.eq.s32.totalorder %s95, 0
      %p462 = por %p460, %p461
      %p463 = scmp.ne.s32.totalorder %s449, %s450
      %p464 = scmp.eq.s32.totalorder %s96, 3
      %p465 = por %p463, %p464
      %p467 = scmp.ne.s32.totalorder %s450, %s466
      %p468 = scmp.eq.s32.totalorder %s96, 0
      %p469 = por %p467, %p468
      %s470 = ssub.s32 %s98, %s105
      %p471 = scmp.eq.s32.totalorder %s470, 0
      %s473 = sadd.s32 %s472, 1
      %s474 = scalar_select %p471, %s472, %s473
      %p477 = pneg %p471
      %p478 = scmp.eq.s32.totalorder %s90, 3
      %p479 = por %p477, %p478
      %p480 = scmp.ne.s32.totalorder %s472, %s475
      %p481 = scmp.eq.s32.totalorder %s90, 0
      %p482 = por %p480, %p481
      %p483 = scmp.ne.s32.totalorder %s472, %s475
      %p484 = scmp.eq.s32.totalorder %s95, 3
      %p485 = por %p483, %p484
      %p486 = scmp.ne.s32.totalorder %s475, %s476
      %p487 = scmp.eq.s32.totalorder %s95, 0
      %p488 = por %p486, %p487
      %p489 = scmp.ne.s32.totalorder %s475, %s476
      %p490 = scmp.eq.s32.totalorder %s96, 3
      %p491 = por %p489, %p490
      %p493 = scmp.ne.s32.totalorder %s476, %s492
      %p494 = scmp.eq.s32.totalorder %s96, 0
      %p495 = por %p493, %p494
      %s496 = ssub.s32 %s98, %s105
      %p497 = scmp.eq.s32.totalorder %s496, 0
      %s499 = sadd.s32 %s498, 1
      %s500 = scalar_select %p497, %s498, %s499
      %p503 = pneg %p497
      %p504 = scmp.eq.s32.totalorder %s90, 3
      %p505 = por %p503, %p504
      %p506 = scmp.ne.s32.totalorder %s498, %s501
      %p507 = scmp.eq.s32.totalorder %s90, 0
      %p508 = por %p506, %p507
      %p509 = scmp.ne.s32.totalorder %s498, %s501
      %p510 = scmp.eq.s32.totalorder %s95, 3
      %p511 = por %p509, %p510
      %p512 = scmp.ne.s32.totalorder %s501, %s502
      %p513 = scmp.eq.s32.totalorder %s95, 0
      %p514 = por %p512, %p513
      %p515 = scmp.ne.s32.totalorder %s501, %s502
      %p516 = scmp.eq.s32.totalorder %s96, 3
      %p517 = por %p515, %p516
      %p519 = scmp.ne.s32.totalorder %s502, %s518
      %p520 = scmp.eq.s32.totalorder %s96, 0
      %p521 = por %p519, %p520
      %s522 = ssub.s32 %s98, %s105
      %p523 = scmp.eq.s32.totalorder %s522, 0
      %s525 = sadd.s32 %s524, 1
      %s526 = scalar_select %p523, %s524, %s525
      %p529 = pneg %p523
      %p530 = scmp.eq.s32.totalorder %s90, 3
      %p531 = por %p529, %p530
      %p532 = scmp.ne.s32.totalorder %s524, %s527
      %p533 = scmp.eq.s32.totalorder %s90, 0
      %p534 = por %p532, %p533
      %p535 = scmp.ne.s32.totalorder %s524, %s527
      %p536 = scmp.eq.s32.totalorder %s95, 3
      %p537 = por %p535, %p536
      %p538 = scmp.ne.s32.totalorder %s527, %s528
      %p539 = scmp.eq.s32.totalorder %s95, 0
      %p540 = por %p538, %p539
      %p541 = scmp.ne.s32.totalorder %s527, %s528
      %p542 = scmp.eq.s32.totalorder %s96, 3
      %p543 = por %p541, %p542
      %p545 = scmp.ne.s32.totalorder %s528, %s544
      %p546 = scmp.eq.s32.totalorder %s96, 0
      %p547 = por %p545, %p546
      %s548 = ssub.s32 %s98, %s105
      %p549 = scmp.eq.s32.totalorder %s548, 0
      %s551 = sadd.s32 %s550, 1
      %s552 = scalar_select %p549, %s550, %s551
      %p555 = pneg %p549
      %p556 = scmp.eq.s32.totalorder %s90, 3
      %p557 = por %p555, %p556
      %p558 = scmp.ne.s32.totalorder %s550, %s553
      %p559 = scmp.eq.s32.totalorder %s90, 0
      %p560 = por %p558, %p559
      %p561 = scmp.ne.s32.totalorder %s550, %s553
      %p562 = scmp.eq.s32.totalorder %s95, 3
      %p563 = por %p561, %p562
      %p564 = scmp.ne.s32.totalorder %s553, %s554
      %p565 = scmp.eq.s32.totalorder %s95, 0
      %p566 = por %p564, %p565
      %p567 = scmp.ne.s32.totalorder %s553, %s554
      %p568 = scmp.eq.s32.totalorder %s96, 3
      %p569 = por %p567, %p568
      %p571 = scmp.ne.s32.totalorder %s554, %s570
      %p572 = scmp.eq.s32.totalorder %s96, 0
      %p573 = por %p571, %p572
      %s574 = ssub.s32 %s98, %s105
      %p575 = scmp.eq.s32.totalorder %s574, 0
      %s577 = sadd.s32 %s576, 1
      %s578 = scalar_select %p575, %s576, %s577
      %p581 = pneg %p575
      %p582 = scmp.eq.s32.totalorder %s90, 3
      %p583 = por %p581, %p582
      %p584 = scmp.ne.s32.totalorder %s576, %s579
      %p585 = scmp.eq.s32.totalorder %s90, 0
      %p586 = por %p584, %p585
      %p587 = scmp.ne.s32.totalorder %s576, %s579
      %p588 = scmp.eq.s32.totalorder %s95, 3
      %p589 = por %p587, %p588
      %p590 = scmp.ne.s32.totalorder %s579, %s580
      %p591 = scmp.eq.s32.totalorder %s95, 0
      %p592 = por %p590, %p591
      %p593 = scmp.ne.s32.totalorder %s579, %s580
      %p594 = scmp.eq.s32.totalorder %s96, 3
      %p595 = por %p593, %p594
      %p597 = scmp.ne.s32.totalorder %s580, %s596
      %p598 = scmp.eq.s32.totalorder %s96, 0
      %p599 = por %p597, %p598
      %s600 = ssub.s32 %s98, %s105
      %p601 = scmp.eq.s32.totalorder %s600, 0
      %s603 = sadd.s32 %s602, 1
      %s604 = scalar_select %p601, %s602, %s603
      %p607 = pneg %p601
      %p608 = scmp.eq.s32.totalorder %s90, 3
      %p609 = por %p607, %p608
      %p610 = scmp.ne.s32.totalorder %s602, %s605
      %p611 = scmp.eq.s32.totalorder %s90, 0
      %p612 = por %p610, %p611
      %p613 = scmp.ne.s32.totalorder %s602, %s605
      %p614 = scmp.eq.s32.totalorder %s95, 3
      %p615 = por %p613, %p614
      %p616 = scmp.ne.s32.totalorder %s605, %s606
      %p617 = scmp.eq.s32.totalorder %s95, 0
      %p618 = por %p616, %p617
      %p619 = scmp.ne.s32.totalorder %s605, %s606
      %p620 = scmp.eq.s32.totalorder %s96, 3
      %p621 = por %p619, %p620
      %p623 = scmp.ne.s32.totalorder %s606, %s622
      %p624 = scmp.eq.s32.totalorder %s96, 0
      %p625 = por %p623, %p624
      %s626 = ssub.s32 %s98, %s105
      %p627 = scmp.eq.s32.totalorder %s626, 0
      %s629 = sadd.s32 %s628, 1
      %s630 = scalar_select %p627, %s628, %s629
      %p633 = pneg %p627
      %p634 = scmp.eq.s32.totalorder %s90, 3
      %p635 = por %p633, %p634
      %p636 = scmp.ne.s32.totalorder %s628, %s631
      %p637 = scmp.eq.s32.totalorder %s90, 0
      %p638 = por %p636, %p637
      %p639 = scmp.ne.s32.totalorder %s628, %s631
      %p640 = scmp.eq.s32.totalorder %s95, 3
      %p641 = por %p639, %p640
      %p642 = scmp.ne.s32.totalorder %s631, %s632
      %p643 = scmp.eq.s32.totalorder %s95, 0
      %p644 = por %p642, %p643
      %p645 = scmp.ne.s32.totalorder %s631, %s632
      %p646 = scmp.eq.s32.totalorder %s96, 3
      %p647 = por %p645, %p646
      %p649 = scmp.ne.s32.totalorder %s632, %s648
      %p650 = scmp.eq.s32.totalorder %s96, 0
      %p651 = por %p649, %p650
      %s652 = ssub.s32 %s98, %s105
      %p653 = scmp.eq.s32.totalorder %s652, 0
      %s655 = sadd.s32 %s654, 1
      %s656 = scalar_select %p653, %s654, %s655
      %p659 = pneg %p653
      %p660 = scmp.eq.s32.totalorder %s90, 3
      %p661 = por %p659, %p660
      %p662 = scmp.ne.s32.totalorder %s654, %s657
      %p663 = scmp.eq.s32.totalorder %s90, 0
      %p664 = por %p662, %p663
      %p665 = scmp.ne.s32.totalorder %s654, %s657
      %p666 = scmp.eq.s32.totalorder %s95, 3
      %p667 = por %p665, %p666
      %p668 = scmp.ne.s32.totalorder %s657, %s658
      %p669 = scmp.eq.s32.totalorder %s95, 0
      %p670 = por %p668, %p669
      %p671 = scmp.ne.s32.totalorder %s657, %s658
      %p672 = scmp.eq.s32.totalorder %s96, 3
      %p673 = por %p671, %p672
      %p675 = scmp.ne.s32.totalorder %s658, %s674
      %p676 = scmp.eq.s32.totalorder %s96, 0
      %p677 = por %p675, %p676
      %s678 = ssub.s32 %s98, %s105
      %p679 = scmp.eq.s32.totalorder %s678, 0
      %s681 = sadd.s32 %s680, 1
      %s682 = scalar_select %p679, %s680, %s681
      %p685 = pneg %p679
      %p686 = scmp.eq.s32.totalorder %s90, 3
      %p687 = por %p685, %p686
      %p688 = scmp.ne.s32.totalorder %s680, %s683
      %p689 = scmp.eq.s32.totalorder %s90, 0
      %p690 = por %p688, %p689
      %p691 = scmp.ne.s32.totalorder %s680, %s683
      %p692 = scmp.eq.s32.totalorder %s95, 3
      %p693 = por %p691, %p692
      %p694 = scmp.ne.s32.totalorder %s683, %s684
      %p695 = scmp.eq.s32.totalorder %s95, 0
      %p696 = por %p694, %p695
      %p697 = scmp.ne.s32.totalorder %s683, %s684
      %p698 = scmp.eq.s32.totalorder %s96, 3
      %p699 = por %p697, %p698
      %p701 = scmp.ne.s32.totalorder %s684, %s700
      %p702 = scmp.eq.s32.totalorder %s96, 0
      %p703 = por %p701, %p702
      %s704 = ssub.s32 %s98, %s105
      %p705 = scmp.eq.s32.totalorder %s704, 0
      %s707 = sadd.s32 %s706, 1
      %s708 = scalar_select %p705, %s706, %s707
      %p711 = pneg %p705
      %p712 = scmp.eq.s32.totalorder %s90, 3
      %p713 = por %p711, %p712
      %p714 = scmp.ne.s32.totalorder %s706, %s709
      %p715 = scmp.eq.s32.totalorder %s90, 0
      %p716 = por %p714, %p715
      %p717 = scmp.ne.s32.totalorder %s706, %s709
      %p718 = scmp.eq.s32.totalorder %s95, 3
      %p719 = por %p717, %p718
      %p720 = scmp.ne.s32.totalorder %s709, %s710
      %p721 = scmp.eq.s32.totalorder %s95, 0
      %p722 = por %p720, %p721
      %p723 = scmp.ne.s32.totalorder %s709, %s710
      %p724 = scmp.eq.s32.totalorder %s96, 3
      %p725 = por %p723, %p724
      %p727 = scmp.ne.s32.totalorder %s710, %s726
      %p728 = scmp.eq.s32.totalorder %s96, 0
      %p729 = por %p727, %p728
      %s730 = ssub.s32 %s98, %s105
      %p731 = scmp.eq.s32.totalorder %s730, 0
      %s733 = sadd.s32 %s732, 1
      %s734 = scalar_select %p731, %s732, %s733
      %p737 = pneg %p731
      %p738 = scmp.eq.s32.totalorder %s90, 3
      %p739 = por %p737, %p738
      %p740 = scmp.ne.s32.totalorder %s732, %s735
      %p741 = scmp.eq.s32.totalorder %s90, 0
      %p742 = por %p740, %p741
      %p743 = scmp.ne.s32.totalorder %s732, %s735
      %p744 = scmp.eq.s32.totalorder %s95, 3
      %p745 = por %p743, %p744
      %p746 = scmp.ne.s32.totalorder %s735, %s736
      %p747 = scmp.eq.s32.totalorder %s95, 0
      %p748 = por %p746, %p747
      %p749 = scmp.ne.s32.totalorder %s735, %s736
      %p750 = scmp.eq.s32.totalorder %s96, 3
      %p751 = por %p749, %p750
      %p753 = scmp.ne.s32.totalorder %s736, %s752
      %p754 = scmp.eq.s32.totalorder %s96, 0
      %p755 = por %p753, %p754
      %s756 = ssub.s32 %s98, %s105
      %p757 = scmp.eq.s32.totalorder %s756, 0
      %s759 = sadd.s32 %s758, 1
      %s760 = scalar_select %p757, %s758, %s759
      %p763 = pneg %p757
      %p764 = scmp.eq.s32.totalorder %s90, 3
      %p765 = por %p763, %p764
      %p766 = scmp.ne.s32.totalorder %s758, %s761
      %p767 = scmp.eq.s32.totalorder %s90, 0
      %p768 = por %p766, %p767
      %p769 = scmp.ne.s32.totalorder %s758, %s761
      %p770 = scmp.eq.s32.totalorder %s95, 3
      %p771 = por %p769, %p770
      %p772 = scmp.ne.s32.totalorder %s761, %s762
      %p773 = scmp.eq.s32.totalorder %s95, 0
      %p774 = por %p772, %p773
      %p775 = scmp.ne.s32.totalorder %s761, %s762
      %p776 = scmp.eq.s32.totalorder %s96, 3
      %p777 = por %p775, %p776
      %p779 = scmp.ne.s32.totalorder %s762, %s778
      %p780 = scmp.eq.s32.totalorder %s96, 0
      %p781 = por %p779, %p780
      %s782 = ssub.s32 %s98, %s105
      %p783 = scmp.eq.s32.totalorder %s782, 0
      %s785 = sadd.s32 %s784, 1
      %s786 = scalar_select %p783, %s784, %s785
      %p789 = pneg %p783
      %p790 = scmp.eq.s32.totalorder %s90, 3
      %p791 = por %p789, %p790
      %p792 = scmp.ne.s32.totalorder %s784, %s787
      %p793 = scmp.eq.s32.totalorder %s90, 0
      %p794 = por %p792, %p793
      %p795 = scmp.ne.s32.totalorder %s784, %s787
      %p796 = scmp.eq.s32.totalorder %s95, 3
      %p797 = por %p795, %p796
      %p798 = scmp.ne.s32.totalorder %s787, %s788
      %p799 = scmp.eq.s32.totalorder %s95, 0
      %p800 = por %p798, %p799
      %p801 = scmp.ne.s32.totalorder %s787, %s788
      %p802 = scmp.eq.s32.totalorder %s96, 3
      %p803 = por %p801, %p802
      %p805 = scmp.ne.s32.totalorder %s788, %s804
      %p806 = scmp.eq.s32.totalorder %s96, 0
      %p807 = por %p805, %p806
      %s808 = ssub.s32 %s98, %s105
      %p809 = scmp.eq.s32.totalorder %s808, 0
      %s811 = sadd.s32 %s810, 1
      %s812 = scalar_select %p809, %s810, %s811
      %p815 = pneg %p809
      %p816 = scmp.eq.s32.totalorder %s90, 3
      %p817 = por %p815, %p816
      %p818 = scmp.ne.s32.totalorder %s810, %s813
      %p819 = scmp.eq.s32.totalorder %s90, 0
      %p820 = por %p818, %p819
      %p821 = scmp.ne.s32.totalorder %s810, %s813
      %p822 = scmp.eq.s32.totalorder %s95, 3
      %p823 = por %p821, %p822
      %p824 = scmp.ne.s32.totalorder %s813, %s814
      %p825 = scmp.eq.s32.totalorder %s95, 0
      %p826 = por %p824, %p825
      %p827 = scmp.ne.s32.totalorder %s813, %s814
      %p828 = scmp.eq.s32.totalorder %s96, 3
      %p829 = por %p827, %p828
      %p831 = scmp.ne.s32.totalorder %s814, %s830
      %p832 = scmp.eq.s32.totalorder %s96, 0
      %p833 = por %p831, %p832
      %s834 = ssub.s32 %s98, %s105
      %p835 = scmp.eq.s32.totalorder %s834, 0
      %s837 = sadd.s32 %s836, 1
      %s838 = scalar_select %p835, %s836, %s837
      %p841 = pneg %p835
      %p842 = scmp.eq.s32.totalorder %s90, 3
      %p843 = por %p841, %p842
      %p844 = scmp.ne.s32.totalorder %s836, %s839
      %p845 = scmp.eq.s32.totalorder %s90, 0
      %p846 = por %p844, %p845
      %p847 = scmp.ne.s32.totalorder %s836, %s839
      %p848 = scmp.eq.s32.totalorder %s95, 3
      %p849 = por %p847, %p848
      %p850 = scmp.ne.s32.totalorder %s839, %s840
      %p851 = scmp.eq.s32.totalorder %s95, 0
      %p852 = por %p850, %p851
      %p853 = scmp.ne.s32.totalorder %s839, %s840
      %p854 = scmp.eq.s32.totalorder %s96, 3
      %p855 = por %p853, %p854
      %p857 = scmp.ne.s32.totalorder %s840, %s856
      %p858 = scmp.eq.s32.totalorder %s96, 0
      %p859 = por %p857, %p858
      %s860 = ssub.s32 %s98, %s105
      %p861 = scmp.eq.s32.totalorder %s860, 0
      %s863 = sadd.s32 %s862, 1
      %s864 = scalar_select %p861, %s862, %s863
      %p867 = pneg %p861
      %p868 = scmp.eq.s32.totalorder %s90, 3
      %p869 = por %p867, %p868
      %p870 = scmp.ne.s32.totalorder %s862, %s865
      %p871 = scmp.eq.s32.totalorder %s90, 0
      %p872 = por %p870, %p871
      %p873 = scmp.ne.s32.totalorder %s862, %s865
      %p874 = scmp.eq.s32.totalorder %s95, 3
      %p875 = por %p873, %p874
      %p876 = scmp.ne.s32.totalorder %s865, %s866
      %p877 = scmp.eq.s32.totalorder %s95, 0
      %p878 = por %p876, %p877
      %p879 = scmp.ne.s32.totalorder %s865, %s866
      %p880 = scmp.eq.s32.totalorder %s96, 3
      %p881 = por %p879, %p880
      %p883 = scmp.ne.s32.totalorder %s866, %s882
      %p884 = scmp.eq.s32.totalorder %s96, 0
      %p885 = por %p883, %p884
      %s886 = ssub.s32 %s98, %s105
      %p887 = scmp.eq.s32.totalorder %s886, 0
      %s889 = sadd.s32 %s888, 1
      %s890 = scalar_select %p887, %s888, %s889
      %p893 = pneg %p887
      %p894 = scmp.eq.s32.totalorder %s90, 3
      %p895 = por %p893, %p894
      %p896 = scmp.ne.s32.totalorder %s888, %s891
      %p897 = scmp.eq.s32.totalorder %s90, 0
      %p898 = por %p896, %p897
      %p899 = scmp.ne.s32.totalorder %s888, %s891
      %p900 = scmp.eq.s32.totalorder %s95, 3
      %p901 = por %p899, %p900
      %p902 = scmp.ne.s32.totalorder %s891, %s892
      %p903 = scmp.eq.s32.totalorder %s95, 0
      %p904 = por %p902, %p903
      %p905 = scmp.ne.s32.totalorder %s891, %s892
      %p906 = scmp.eq.s32.totalorder %s96, 3
      %p907 = por %p905, %p906
      %p909 = scmp.ne.s32.totalorder %s892, %s908
      %p910 = scmp.eq.s32.totalorder %s96, 0
      %p911 = por %p909, %p910
      %s912 = ssub.s32 %s98, %s105
      %p913 = scmp.eq.s32.totalorder %s912, 0
      %s915 = sadd.s32 %s914, 1
      %s916 = scalar_select %p913, %s914, %s915
      %p919 = pneg %p913
      %p920 = scmp.eq.s32.totalorder %s90, 3
      %p921 = por %p919, %p920
      %p922 = scmp.ne.s32.totalorder %s914, %s917
      %p923 = scmp.eq.s32.totalorder %s90, 0
      %p924 = por %p922, %p923
      %p925 = scmp.ne.s32.totalorder %s914, %s917
      %p926 = scmp.eq.s32.totalorder %s95, 3
      %p927 = por %p925, %p926
      %p928 = scmp.ne.s32.totalorder %s917, %s918
      %p929 = scmp.eq.s32.totalorder %s95, 0
      %p930 = por %p928, %p929
      %p931 = scmp.ne.s32.totalorder %s917, %s918
      %p932 = scmp.eq.s32.totalorder %s96, 3
      %p933 = por %p931, %p932
      %p935 = scmp.ne.s32.totalorder %s918, %s934
      %p936 = scmp.eq.s32.totalorder %s96, 0
      %p937 = por %p935, %p936
      %s938 = ssub.s32 %s98, %s105
      %p939 = scmp.eq.s32.totalorder %s938, 0
      %s941 = sadd.s32 %s940, 1
      %s942 = scalar_select %p939, %s940, %s941
      %p945 = pneg %p939
      %p946 = scmp.eq.s32.totalorder %s90, 3
      %p947 = por %p945, %p946
      %p948 = scmp.ne.s32.totalorder %s940, %s943
      %p949 = scmp.eq.s32.totalorder %s90, 0
      %p950 = por %p948, %p949
      %p951 = scmp.ne.s32.totalorder %s940, %s943
      %p952 = scmp.eq.s32.totalorder %s95, 3
      %p953 = por %p951, %p952
      %p954 = scmp.ne.s32.totalorder %s943, %s944
      %p955 = scmp.eq.s32.totalorder %s95, 0
      %p956 = por %p954, %p955
      %p957 = scmp.ne.s32.totalorder %s943, %s944
      %p958 = scmp.eq.s32.totalorder %s96, 3
      %p959 = por %p957, %p958
      %p961 = scmp.ne.s32.totalorder %s944, %s960
      %p962 = scmp.eq.s32.totalorder %s96, 0
      %p963 = por %p961, %p962
      %s964 = ssub.s32 %s98, %s105
      %p965 = scmp.eq.s32.totalorder %s964, 0
      %s967 = sadd.s32 %s966, 1
      %s968 = scalar_select %p965, %s966, %s967
      %p971 = pneg %p965
      %p972 = scmp.eq.s32.totalorder %s90, 3
      %p973 = por %p971, %p972
      %p974 = scmp.ne.s32.totalorder %s966, %s969
      %p975 = scmp.eq.s32.totalorder %s90, 0
      %p976 = por %p974, %p975
      %p977 = scmp.ne.s32.totalorder %s966, %s969
      %p978 = scmp.eq.s32.totalorder %s95, 3
      %p979 = por %p977, %p978
      %p980 = scmp.ne.s32.totalorder %s969, %s970
      %p981 = scmp.eq.s32.totalorder %s95, 0
      %p982 = por %p980, %p981
      %p983 = scmp.ne.s32.totalorder %s969, %s970
      %p984 = scmp.eq.s32.totalorder %s96, 3
      %p985 = por %p983, %p984
      %p987 = scmp.ne.s32.totalorder %s970, %s986
      %p988 = scmp.eq.s32.totalorder %s96, 0
      %p989 = por %p987, %p988
      %s991 = sadd.s32 %s990, 1
      %p994 = scmp.eq.s32.totalorder %s90, 3
      %p995 = scmp.ne.s32.totalorder %s990, %s992
      %p996 = scmp.eq.s32.totalorder %s90, 0
      %p997 = por %p995, %p996
      %p998 = scmp.ne.s32.totalorder %s990, %s992
      %p999 = scmp.eq.s32.totalorder %s95, 3
      %p1000 = por %p998, %p999
      %p1001 = scmp.ne.s32.totalorder %s992, %s993
      %p1002 = scmp.eq.s32.totalorder %s95, 0
      %p1003 = por %p1001, %p1002
      %p1004 = scmp.ne.s32.totalorder %s992, %s993
      %p1005 = scmp.eq.s32.totalorder %s96, 3
      %p1006 = por %p1004, %p1005
      %p1008 = scmp.ne.s32.totalorder %s993, %s1007
      %p1009 = scmp.eq.s32.totalorder %s96, 0
      %p1010 = por %p1008, %p1009
      %s1012 = sadd.s32 %s1011, 1
      %p1015 = scmp.eq.s32.totalorder %s90, 3
      %p1016 = scmp.ne.s32.totalorder %s1011, %s1013
      %p1017 = scmp.eq.s32.totalorder %s90, 0
      %p1018 = por %p1016, %p1017
      %p1019 = scmp.ne.s32.totalorder %s1011, %s1013
      %p1020 = scmp.eq.s32.totalorder %s95, 3
      %p1021 = por %p1019, %p1020
      %p1022 = scmp.ne.s32.totalorder %s1013, %s1014
      %p1023 = scmp.eq.s32.totalorder %s95, 0
      %p1024 = por %p1022, %p1023
      %p1025 = scmp.ne.s32.totalorder %s1013, %s1014
      %p1026 = scmp.eq.s32.totalorder %s96, 3
      %p1027 = por %p1025, %p1026
      %p1029 = scmp.ne.s32.totalorder %s1014, %s1028
      %p1030 = scmp.eq.s32.totalorder %s96, 0
      %p1031 = por %p1029, %p1030
      %s1033 = sadd.s32 %s1032, 1
      %p1036 = scmp.eq.s32.totalorder %s90, 3
      %p1037 = scmp.ne.s32.totalorder %s1032, %s1034
      %p1038 = scmp.eq.s32.totalorder %s90, 0
      %p1039 = por %p1037, %p1038
      %p1040 = scmp.ne.s32.totalorder %s1032, %s1034
      %p1041 = scmp.eq.s32.totalorder %s95, 3
      %p1042 = por %p1040, %p1041
      %p1043 = scmp.ne.s32.totalorder %s1034, %s1035
      %p1044 = scmp.eq.s32.totalorder %s95, 0
      %p1045 = por %p1043, %p1044
      %p1046 = scmp.ne.s32.totalorder %s1034, %s1035
      %p1047 = scmp.eq.s32.totalorder %s96, 3
      %p1048 = por %p1046, %p1047
      %p1050 = scmp.ne.s32.totalorder %s1035, %s1049
      %p1051 = scmp.eq.s32.totalorder %s96, 0
      %p1052 = por %p1050, %p1051
      %s1054 = sadd.s32 %s1053, 1
      %p1057 = scmp.eq.s32.totalorder %s90, 3
      %p1058 = scmp.ne.s32.totalorder %s1053, %s1055
      %p1059 = scmp.eq.s32.totalorder %s90, 0
      %p1060 = por %p1058, %p1059
      %p1061 = scmp.ne.s32.totalorder %s1053, %s1055
      %p1062 = scmp.eq.s32.totalorder %s95, 3
      %p1063 = por %p1061, %p1062
      %p1064 = scmp.ne.s32.totalorder %s1055, %s1056
      %p1065 = scmp.eq.s32.totalorder %s95, 0
      %p1066 = por %p1064, %p1065
      %p1067 = scmp.ne.s32.totalorder %s1055, %s1056
      %p1068 = scmp.eq.s32.totalorder %s96, 3
      %p1069 = por %p1067, %p1068
      %p1071 = scmp.ne.s32.totalorder %s1056, %s1070
      %p1072 = scmp.eq.s32.totalorder %s96, 0
      %p1073 = por %p1071, %p1072
      %s1074 = ssub.s32 %s97, %s109
      %p1075 = scmp.eq.s32.totalorder %s1074, 0
      %s1077 = sadd.s32 %s1076, 1
      %s1078 = scalar_select %p1075, %s1076, %s1077
      %p1081 = pneg %p1075
      %p1082 = scmp.eq.s32.totalorder %s90, 3
      %p1083 = por %p1081, %p1082
      %p1084 = scmp.ne.s32.totalorder %s1076, %s1079
      %p1085 = scmp.eq.s32.totalorder %s90, 0
      %p1086 = por %p1084, %p1085
      %p1087 = scmp.ne.s32.totalorder %s1076, %s1079
      %p1088 = scmp.eq.s32.totalorder %s95, 3
      %p1089 = por %p1087, %p1088
      %p1090 = scmp.ne.s32.totalorder %s1079, %s1080
      %p1091 = scmp.eq.s32.totalorder %s95, 0
      %p1092 = por %p1090, %p1091
      %p1093 = scmp.ne.s32.totalorder %s1079, %s1080
      %p1094 = scmp.eq.s32.totalorder %s96, 3
      %p1095 = por %p1093, %p1094
      %p1097 = scmp.ne.s32.totalorder %s1080, %s1096
      %p1098 = scmp.eq.s32.totalorder %s96, 0
      %p1099 = por %p1097, %p1098
      %p1100 = scmp.le.s32.totalorder 1, %s90
      %p1101 = scmp.lt.s32.totalorder %s90, 5
      %p1102 = pnand %p1100, %p1101
      %p1103 = pneg %p1102
      // Predicated region
      $region9: #{gt_forward.1} parent=5 // pred_check
        _
      $region10: #{gt_forward.1} parent=5 // pred_check_branch
        %1105 = sbr.rel (%p1102) target = $region12
      $region11: #{gt_forward.1} parent=5 // pred_region
        %s1106 = ssub.s32 %s90, 1
        // Predicated region
        $region13: #{gt_forward.1} parent=11 // pred_check
          %p1107 = pneg %p175
        $region14: #{gt_forward.1} parent=11 // pred_check_branch
          %1109 = sbr.rel (%p1107) target = $region16
        $region15: #{gt_forward.1} parent=11 // pred_region
          _
        $region16: #{gt_forward.1} parent=11 // pred_fallthru
          _
        // Predicated region
        $region17: #{gt_forward.1} parent=11 // pred_check
          %p1110 = pneg %p196
        $region18: #{gt_forward.1} parent=11 // pred_check_branch
          %1112 = sbr.rel (%p1110) target = $region20
        $region19: #{gt_forward.1} parent=11 // pred_region
          %s1114 = ssub.s32 16, 16
          %1115 = vsyncadd [#allocation5], %s1114
          %s1117 = sshll.u32 %s7, 4
          %s1118 = int_to_ptr.vmem [resolvable:$true] %s1117
          %1120 = dma.vmem_to_smem %s1118, 16, [#allocation3], [#allocation5]
        $region20: #{gt_forward.1} parent=11 // pred_fallthru
          _
        // Predicated region
        $region21: #{gt_forward.1} parent=11 // pred_check
          %p1121 = pneg %p217
        $region22: #{gt_forward.1} parent=11 // pred_check_branch
          %1123 = sbr.rel (%p1121) target = $region24
        $region23: #{gt_forward.1} parent=11 // pred_region
          %s1125 = ssub.s32 16, 16
          %1126 = vsyncadd [#allocation7], %s1125
          %s1128 = sshll.u32 %s9, 4
          %s1129 = int_to_ptr.vmem [resolvable:$true] %s1128
          %1131 = dma.vmem_to_smem %s1129, 16, [#allocation6], [#allocation7]
        $region24: #{gt_forward.1} parent=11 // pred_fallthru
          _
        // Predicated region
        $region25: #{gt_forward.1} parent=11 // pred_check
          %p1132 = pneg %p238
        $region26: #{gt_forward.1} parent=11 // pred_check_branch
          %1134 = sbr.rel (%p1132) target = $region28
        $region27: #{gt_forward.1} parent=11 // pred_region
          _
        $region28: #{gt_forward.1} parent=11 // pred_fallthru
          _
        // Predicated region
        $region29: #{gt_forward.1} parent=11 // pred_check
          %p1135 = pneg %p259
        $region30: #{gt_forward.1} parent=11 // pred_check_branch
          %1137 = sbr.rel (%p1135) target = $region32
        $region31: #{gt_forward.1} parent=11 // pred_region
          _
        $region32: #{gt_forward.1} parent=11 // pred_fallthru
          _
        // Predicated region
        $region33: #{gt_forward.1} parent=11 // pred_check
          %p1138 = pneg %p280
        $region34: #{gt_forward.1} parent=11 // pred_check_branch
          %1140 = sbr.rel (%p1138) target = $region36
        $region35: #{gt_forward.1} parent=11 // pred_region
          _
        $region36: #{gt_forward.1} parent=11 // pred_fallthru
          _
        // Predicated region
        $region37: #{gt_forward.1} parent=11 // pred_check
          %p1141 = pneg %p1003
        $region38: #{gt_forward.1} parent=11 // pred_check_branch
          %1143 = sbr.rel (%p1141) target = $region40
        $region39: #{gt_forward.1} parent=11 // pred_region
          _
        $region40: #{gt_forward.1} parent=11 // pred_fallthru
          _
        // Predicated region
        $region41: #{gt_forward.1} parent=11 // pred_check
          %p1144 = pneg %p1024
        $region42: #{gt_forward.1} parent=11 // pred_check_branch
          %1146 = sbr.rel (%p1144) target = $region44
        $region43: #{gt_forward.1} parent=11 // pred_region
          _
        $region44: #{gt_forward.1} parent=11 // pred_fallthru
          _
        // Predicated region
        $region45: #{gt_forward.1} parent=11 // pred_check
          %p1147 = pneg %p1045
        $region46: #{gt_forward.1} parent=11 // pred_check_branch
          %1149 = sbr.rel (%p1147) target = $region48
        $region47: #{gt_forward.1} parent=11 // pred_region
          _
        $region48: #{gt_forward.1} parent=11 // pred_fallthru
          _
        // Predicated region
        $region49: #{gt_forward.1} parent=11 // pred_check
          %p1150 = pneg %p1066
        $region50: #{gt_forward.1} parent=11 // pred_check_branch
          %1152 = sbr.rel (%p1150) target = $region52
        $region51: #{gt_forward.1} parent=11 // pred_region
          _
        $region52: #{gt_forward.1} parent=11 // pred_fallthru
          _
      $region12: #{gt_forward.1} parent=5 // pred_fallthru
        _
      %p1153 = scmp.lt.s32.totalorder %s90, 4
      // Predicated region
      $region53: #{gt_forward.1} parent=5 // pred_check
        %p1154 = pneg %p1153
      $region54: #{gt_forward.1} parent=5 // pred_check_branch
        %1156 = sbr.rel (%p1154) target = $region56
      $region55: #{gt_forward.1} parent=5 // pred_region
        // Predicated region
        $region57: #{gt_forward.1} parent=55 // pred_check
          %p1157 = pneg %p122
        $region58: #{gt_forward.1} parent=55 // pred_check_branch
          %1159 = sbr.rel (%p1157) target = $region60
        $region59: #{gt_forward.1} parent=55 // pred_region
          %p1160 = scmp.lt.s32.totalorder %s97, 1
          %s1161 = scalar_select %p1160, %s97, 1
          %s1162 = smul.addr %s1161, 8
          %s1163 = scalar_lea.vmem %s1, %s1162
        $region60: #{gt_forward.1} parent=55 // pred_fallthru
          _
        // Predicated region
        $region61: #{gt_forward.1} parent=55 // pred_check
          %p1164 = pneg %p148
        $region62: #{gt_forward.1} parent=55 // pred_check_branch
          %1166 = sbr.rel (%p1164) target = $region64
        $region63: #{gt_forward.1} parent=55 // pred_region
          %p1167 = scmp.lt.s32.totalorder %s97, 1
          %s1168 = scalar_select %p1167, %s97, 1
          %s1169 = smul.addr %s1168, 12
          %s1170 = smul.addr %s1169, 4
          %s1171 = scalar_lea.vmem %s3, %s1170
        $region64: #{gt_forward.1} parent=55 // pred_fallthru
          _
        // Predicated region
        $region65: #{gt_forward.1} parent=55 // pred_check
          %p1172 = pneg %p300
        $region66: #{gt_forward.1} parent=55 // pred_check_branch
          %1174 = sbr.rel (%p1172) target = $region68
        $region67: #{gt_forward.1} parent=55 // pred_region
          %p1175 = scmp.lt.s32.totalorder %s98, 1
          %s1176 = scalar_select %p1175, %s98, 1
          %s1177 = scalar_lea.vmem %s17, %s1176
        $region68: #{gt_forward.1} parent=55 // pred_fallthru
          _
        // Predicated region
        $region69: #{gt_forward.1} parent=55 // pred_check
          %p1178 = pneg %p326
        $region70: #{gt_forward.1} parent=55 // pred_check_branch
          %1180 = sbr.rel (%p1178) target = $region72
        $region71: #{gt_forward.1} parent=55 // pred_region
          %p1181 = scmp.lt.s32.totalorder %s98, 1
          %s1182 = scalar_select %p1181, %s98, 1
          %s1183 = scalar_lea.vmem %s19, %s1182
        $region72: #{gt_forward.1} parent=55 // pred_fallthru
          _
        // Predicated region
        $region73: #{gt_forward.1} parent=55 // pred_check
          %p1184 = pneg %p352
        $region74: #{gt_forward.1} parent=55 // pred_check_branch
          %1186 = sbr.rel (%p1184) target = $region76
        $region75: #{gt_forward.1} parent=55 // pred_region
          %p1187 = scmp.lt.s32.totalorder %s98, 1
          %s1188 = scalar_select %p1187, %s98, 1
          %s1189 = smul.addr %s1188, 4
          %s1190 = smul.addr %s1189, 4
          %s1191 = scalar_lea.vmem %s21, %s1190
        $region76: #{gt_forward.1} parent=55 // pred_fallthru
          _
        // Predicated region
        $region77: #{gt_forward.1} parent=55 // pred_check
          %p1192 = pneg %p378
        $region78: #{gt_forward.1} parent=55 // pred_check_branch
          %1194 = sbr.rel (%p1192) target = $region80
        $region79: #{gt_forward.1} parent=55 // pred_region
          %p1195 = scmp.lt.s32.totalorder %s98, 1
          %s1196 = scalar_select %p1195, %s98, 1
          %s1197 = scalar_lea.vmem %s23, %s1196
        $region80: #{gt_forward.1} parent=55 // pred_fallthru
          _
        // Predicated region
        $region81: #{gt_forward.1} parent=55 // pred_check
          %p1198 = pneg %p404
        $region82: #{gt_forward.1} parent=55 // pred_check_branch
          %1200 = sbr.rel (%p1198) target = $region84
        $region83: #{gt_forward.1} parent=55 // pred_region
          %p1201 = scmp.lt.s32.totalorder %s98, 1
          %s1202 = scalar_select %p1201, %s98, 1
          %s1203 = smul.addr %s1202, 4
          %s1204 = smul.addr %s1203, 4
          %s1205 = scalar_lea.vmem %s25, %s1204
        $region84: #{gt_forward.1} parent=55 // pred_fallthru
          _
        // Predicated region
        $region85: #{gt_forward.1} parent=55 // pred_check
          %p1206 = pneg %p430
        $region86: #{gt_forward.1} parent=55 // pred_check_branch
          %1208 = sbr.rel (%p1206) target = $region88
        $region87: #{gt_forward.1} parent=55 // pred_region
          %p1209 = scmp.lt.s32.totalorder %s98, 1
          %s1210 = scalar_select %p1209, %s98, 1
          %s1211 = scalar_lea.vmem %s27, %s1210
        $region88: #{gt_forward.1} parent=55 // pred_fallthru
          _
        // Predicated region
        $region89: #{gt_forward.1} parent=55 // pred_check
          %p1212 = pneg %p456
        $region90: #{gt_forward.1} parent=55 // pred_check_branch
          %1214 = sbr.rel (%p1212) target = $region92
        $region91: #{gt_forward.1} parent=55 // pred_region
          %p1215 = scmp.lt.s32.totalorder %s98, 1
          %s1216 = scalar_select %p1215, %s98, 1
          %s1217 = smul.addr %s1216, 4
          %s1218 = smul.addr %s1217, 4
          %s1219 = scalar_lea.vmem %s29, %s1218
        $region92: #{gt_forward.1} parent=55 // pred_fallthru
          _
        // Predicated region
        $region93: #{gt_forward.1} parent=55 // pred_check
          %p1220 = pneg %p482
        $region94: #{gt_forward.1} parent=55 // pred_check_branch
          %1222 = sbr.rel (%p1220) target = $region96
        $region95: #{gt_forward.1} parent=55 // pred_region
          %p1223 = scmp.lt.s32.totalorder %s98, 1
          %s1224 = scalar_select %p1223, %s98, 1
          %s1225 = scalar_lea.vmem %s31, %s1224
        $region96: #{gt_forward.1} parent=55 // pred_fallthru
          _
        // Predicated region
        $region97: #{gt_forward.1} parent=55 // pred_check
          %p1226 = pneg %p508
        $region98: #{gt_forward.1} parent=55 // pred_check_branch
          %1228 = sbr.rel (%p1226) target = $region100
        $region99: #{gt_forward.1} parent=55 // pred_region
          %p1229 = scmp.lt.s32.totalorder %s98, 1
          %s1230 = scalar_select %p1229, %s98, 1
          %s1231 = smul.addr %s1230, 4
          %s1232 = smul.addr %s1231, 4
          %s1233 = scalar_lea.vmem %s33, %s1232
        $region100: #{gt_forward.1} parent=55 // pred_fallthru
          _
        // Predicated region
        $region101: #{gt_forward.1} parent=55 // pred_check
          %p1234 = pneg %p534
        $region102: #{gt_forward.1} parent=55 // pred_check_branch
          %1236 = sbr.rel (%p1234) target = $region104
        $region103: #{gt_forward.1} parent=55 // pred_region
          %p1237 = scmp.lt.s32.totalorder %s98, 1
          %s1238 = scalar_select %p1237, %s98, 1
          %s1239 = scalar_lea.vmem %s35, %s1238
        $region104: #{gt_forward.1} parent=55 // pred_fallthru
          _
        // Predicated region
        $region105: #{gt_forward.1} parent=55 // pred_check
          %p1240 = pneg %p560
        $region106: #{gt_forward.1} parent=55 // pred_check_branch
          %1242 = sbr.rel (%p1240) target = $region108
        $region107: #{gt_forward.1} parent=55 // pred_region
          %p1243 = scmp.lt.s32.totalorder %s98, 1
          %s1244 = scalar_select %p1243, %s98, 1
          %s1245 = smul.addr %s1244, 4
          %s1246 = smul.addr %s1245, 4
          %s1247 = scalar_lea.vmem %s37, %s1246
        $region108: #{gt_forward.1} parent=55 // pred_fallthru
          _
        // Predicated region
        $region109: #{gt_forward.1} parent=55 // pred_check
          %p1248 = pneg %p586
        $region110: #{gt_forward.1} parent=55 // pred_check_branch
          %1250 = sbr.rel (%p1248) target = $region112
        $region111: #{gt_forward.1} parent=55 // pred_region
          %p1251 = scmp.lt.s32.totalorder %s98, 1
          %s1252 = scalar_select %p1251, %s98, 1
          %s1253 = scalar_lea.vmem %s39, %s1252
        $region112: #{gt_forward.1} parent=55 // pred_fallthru
          _
        // Predicated region
        $region113: #{gt_forward.1} parent=55 // pred_check
          %p1254 = pneg %p612
        $region114: #{gt_forward.1} parent=55 // pred_check_branch
          %1256 = sbr.rel (%p1254) target = $region116
        $region115: #{gt_forward.1} parent=55 // pred_region
          %p1257 = scmp.lt.s32.totalorder %s98, 1
          %s1258 = scalar_select %p1257, %s98, 1
          %s1259 = smul.addr %s1258, 4
          %s1260 = smul.addr %s1259, 4
          %s1261 = scalar_lea.vmem %s41, %s1260
        $region116: #{gt_forward.1} parent=55 // pred_fallthru
          _
        // Predicated region
        $region117: #{gt_forward.1} parent=55 // pred_check
          %p1262 = pneg %p638
        $region118: #{gt_forward.1} parent=55 // pred_check_branch
          %1264 = sbr.rel (%p1262) target = $region120
        $region119: #{gt_forward.1} parent=55 // pred_region
          %p1265 = scmp.lt.s32.totalorder %s98, 1
          %s1266 = scalar_select %p1265, %s98, 1
          %s1267 = scalar_lea.vmem %s43, %s1266
        $region120: #{gt_forward.1} parent=55 // pred_fallthru
          _
        // Predicated region
        $region121: #{gt_forward.1} parent=55 // pred_check
          %p1268 = pneg %p664
        $region122: #{gt_forward.1} parent=55 // pred_check_branch
          %1270 = sbr.rel (%p1268) target = $region124
        $region123: #{gt_forward.1} parent=55 // pred_region
          %p1271 = scmp.lt.s32.totalorder %s98, 1
          %s1272 = scalar_select %p1271, %s98, 1
          %s1273 = smul.addr %s1272, 4
          %s1274 = smul.addr %s1273, 4
          %s1275 = scalar_lea.vmem %s45, %s1274
        $region124: #{gt_forward.1} parent=55 // pred_fallthru
          _
        // Predicated region
        $region125: #{gt_forward.1} parent=55 // pred_check
          %p1276 = pneg %p690
        $region126: #{gt_forward.1} parent=55 // pred_check_branch
          %1278 = sbr.rel (%p1276) target = $region128
        $region127: #{gt_forward.1} parent=55 // pred_region
          %p1279 = scmp.lt.s32.totalorder %s98, 1
          %s1280 = scalar_select %p1279, %s98, 1
          %s1281 = scalar_lea.vmem %s47, %s1280
        $region128: #{gt_forward.1} parent=55 // pred_fallthru
          _
        // Predicated region
        $region129: #{gt_forward.1} parent=55 // pred_check
          %p1282 = pneg %p716
        $region130: #{gt_forward.1} parent=55 // pred_check_branch
          %1284 = sbr.rel (%p1282) target = $region132
        $region131: #{gt_forward.1} parent=55 // pred_region
          %p1285 = scmp.lt.s32.totalorder %s98, 1
          %s1286 = scalar_select %p1285, %s98, 1
          %s1287 = smul.addr %s1286, 4
          %s1288 = smul.addr %s1287, 4
          %s1289 = scalar_lea.vmem %s49, %s1288
        $region132: #{gt_forward.1} parent=55 // pred_fallthru
          _
        // Predicated region
        $region133: #{gt_forward.1} parent=55 // pred_check
          %p1290 = pneg %p742
        $region134: #{gt_forward.1} parent=55 // pred_check_branch
          %1292 = sbr.rel (%p1290) target = $region136
        $region135: #{gt_forward.1} parent=55 // pred_region
          %p1293 = scmp.lt.s32.totalorder %s98, 1
          %s1294 = scalar_select %p1293, %s98, 1
          %s1295 = scalar_lea.vmem %s51, %s1294
        $region136: #{gt_forward.1} parent=55 // pred_fallthru
          _
        // Predicated region
        $region137: #{gt_forward.1} parent=55 // pred_check
          %p1296 = pneg %p768
        $region138: #{gt_forward.1} parent=55 // pred_check_branch
          %1298 = sbr.rel (%p1296) target = $region140
        $region139: #{gt_forward.1} parent=55 // pred_region
          %p1299 = scmp.lt.s32.totalorder %s98, 1
          %s1300 = scalar_select %p1299, %s98, 1
          %s1301 = scalar_lea.vmem %s53, %s1300
        $region140: #{gt_forward.1} parent=55 // pred_fallthru
          _
        // Predicated region
        $region141: #{gt_forward.1} parent=55 // pred_check
          %p1302 = pneg %p794
        $region142: #{gt_forward.1} parent=55 // pred_check_branch
          %1304 = sbr.rel (%p1302) target = $region144
        $region143: #{gt_forward.1} parent=55 // pred_region
          %p1305 = scmp.lt.s32.totalorder %s98, 1
          %s1306 = scalar_select %p1305, %s98, 1
          %s1307 = scalar_lea.vmem %s55, %s1306
        $region144: #{gt_forward.1} parent=55 // pred_fallthru
          _
        // Predicated region
        $region145: #{gt_forward.1} parent=55 // pred_check
          %p1308 = pneg %p820
        $region146: #{gt_forward.1} parent=55 // pred_check_branch
          %1310 = sbr.rel (%p1308) target = $region148
        $region147: #{gt_forward.1} parent=55 // pred_region
          %p1311 = scmp.lt.s32.totalorder %s98, 1
          %s1312 = scalar_select %p1311, %s98, 1
          %s1313 = scalar_lea.vmem %s57, %s1312
        $region148: #{gt_forward.1} parent=55 // pred_fallthru
          _
        // Predicated region
        $region149: #{gt_forward.1} parent=55 // pred_check
          %p1314 = pneg %p846
        $region150: #{gt_forward.1} parent=55 // pred_check_branch
          %1316 = sbr.rel (%p1314) target = $region152
        $region151: #{gt_forward.1} parent=55 // pred_region
          %p1317 = scmp.lt.s32.totalorder %s98, 1
          %s1318 = scalar_select %p1317, %s98, 1
          %s1319 = scalar_lea.vmem %s59, %s1318
        $region152: #{gt_forward.1} parent=55 // pred_fallthru
          _
        // Predicated region
        $region153: #{gt_forward.1} parent=55 // pred_check
          %p1320 = pneg %p872
        $region154: #{gt_forward.1} parent=55 // pred_check_branch
          %1322 = sbr.rel (%p1320) target = $region156
        $region155: #{gt_forward.1} parent=55 // pred_region
          %p1323 = scmp.lt.s32.totalorder %s98, 1
          %s1324 = scalar_select %p1323, %s98, 1
          %s1325 = smul.addr %s1324, 4
          %s1326 = smul.addr %s1325, 4
          %s1327 = scalar_lea.vmem %s61, %s1326
        $region156: #{gt_forward.1} parent=55 // pred_fallthru
          _
        // Predicated region
        $region157: #{gt_forward.1} parent=55 // pred_check
          %p1328 = pneg %p898
        $region158: #{gt_forward.1} parent=55 // pred_check_branch
          %1330 = sbr.rel (%p1328) target = $region160
        $region159: #{gt_forward.1} parent=55 // pred_region
          %p1331 = scmp.lt.s32.totalorder %s98, 1
          %s1332 = scalar_select %p1331, %s98, 1
          %s1333 = smul.addr %s1332, 4
          %s1334 = smul.addr %s1333, 4
          %s1335 = scalar_lea.vmem %s63, %s1334
        $region160: #{gt_forward.1} parent=55 // pred_fallthru
          _
        // Predicated region
        $region161: #{gt_forward.1} parent=55 // pred_check
          %p1336 = pneg %p924
        $region162: #{gt_forward.1} parent=55 // pred_check_branch
          %1338 = sbr.rel (%p1336) target = $region164
        $region163: #{gt_forward.1} parent=55 // pred_region
          %p1339 = scmp.lt.s32.totalorder %s98, 1
          %s1340 = scalar_select %p1339, %s98, 1
          %s1341 = scalar_lea.vmem %s65, %s1340
        $region164: #{gt_forward.1} parent=55 // pred_fallthru
          _
        // Predicated region
        $region165: #{gt_forward.1} parent=55 // pred_check
          %p1342 = pneg %p950
        $region166: #{gt_forward.1} parent=55 // pred_check_branch
          %1344 = sbr.rel (%p1342) target = $region168
        $region167: #{gt_forward.1} parent=55 // pred_region
          %p1345 = scmp.lt.s32.totalorder %s98, 1
          %s1346 = scalar_select %p1345, %s98, 1
          %s1347 = smul.addr %s1346, 8
          %s1348 = smul.addr %s1347, 4
          %s1349 = scalar_lea.vmem %s67, %s1348
        $region168: #{gt_forward.1} parent=55 // pred_fallthru
          _
        // Predicated region
        $region169: #{gt_forward.1} parent=55 // pred_check
          %p1350 = pneg %p976
        $region170: #{gt_forward.1} parent=55 // pred_check_branch
          %1352 = sbr.rel (%p1350) target = $region172
        $region171: #{gt_forward.1} parent=55 // pred_region
          %p1353 = scmp.lt.s32.totalorder %s98, 1
          %s1354 = scalar_select %p1353, %s98, 1
          %s1355 = scalar_lea.vmem %s69, %s1354
        $region172: #{gt_forward.1} parent=55 // pred_fallthru
          _
      $region56: #{gt_forward.1} parent=5 // pred_fallthru
        _
      %p1356 = scmp.le.s32.totalorder 1, %s90
      %p1357 = scmp.lt.s32.totalorder %s90, 5
      %p1358 = pnand %p1356, %p1357
      %p1359 = pneg %p1358
      // Predicated region
      $region173: #{gt_forward.1} parent=5 // pred_check
        _
      $region174: #{gt_forward.1} parent=5 // pred_check_branch
        %1361 = sbr.rel (%p1358) target = $region176
      $region175: #{gt_forward.1} parent=5 // pred_region
        %s1362 = ssub.s32 %s90, 1
        // Predicated region
        $region177: #{gt_forward.1} parent=175 // pred_check
          %p1363 = pneg %p196
        $region178: #{gt_forward.1} parent=175 // pred_check_branch
          %1365 = sbr.rel (%p1363) target = $region180
        $region179: #{gt_forward.1} parent=175 // pred_region
          %1366 = dma.done [#allocation5], 16
        $region180: #{gt_forward.1} parent=175 // pred_fallthru
          _
        // Predicated region
        $region181: #{gt_forward.1} parent=175 // pred_check
          %p1367 = pneg %p217
        $region182: #{gt_forward.1} parent=175 // pred_check_branch
          %1369 = sbr.rel (%p1367) target = $region184
        $region183: #{gt_forward.1} parent=175 // pred_region
          %1370 = dma.done [#allocation7], 16
        $region184: #{gt_forward.1} parent=175 // pred_fallthru
          _
        %1371 = sfence
        %p1372 = scmp.lt.s32.totalorder %s99, 1
        %s1373 = scalar_select %p1372, %s99, 1
        %s1374 = smul.addr %s1373, 8
        %s1375 = scalar_lea.vmem %s1, %s1374
        %p1376 = pneg %p128
        %p1377 = pneg %p125
        %p1378 = scmp.lt.s32.totalorder %s99, 1
        %s1379 = scalar_select %p1378, %s99, 1
        %s1380 = smul.addr %s1379, 12
        %s1381 = smul.addr %s1380, 4
        %s1382 = scalar_lea.vmem %s3, %s1381
        %p1383 = pneg %p154
        %p1384 = pneg %p151
        %p1385 = pneg %p175
        %p1386 = pneg %p172
        %p1387 = pneg %p196
        %p1388 = pneg %p193
        %p1389 = pneg %p217
        %p1390 = pneg %p214
        %p1391 = pneg %p238
        %p1392 = pneg %p235
        %p1393 = pneg %p259
        %p1394 = pneg %p256
        %p1395 = pneg %p280
        %p1396 = pneg %p277
        %p1397 = scmp.lt.s32.totalorder %s100, 1
        %s1398 = scalar_select %p1397, %s100, 1
        %s1399 = scalar_lea.vmem %s17, %s1398
        %p1400 = pneg %p306
        %p1401 = pneg %p303
        %p1402 = scmp.lt.s32.totalorder %s100, 1
        %s1403 = scalar_select %p1402, %s100, 1
        %s1404 = scalar_lea.vmem %s19, %s1403
        %p1405 = pneg %p332
        %p1406 = pneg %p329
        %p1407 = scmp.lt.s32.totalorder %s100, 1
        %s1408 = scalar_select %p1407, %s100, 1
        %s1409 = smul.addr %s1408, 4
        %s1410 = smul.addr %s1409, 4
        %s1411 = scalar_lea.vmem %s21, %s1410
        %p1412 = pneg %p358
        %p1413 = pneg %p355
        %p1414 = scmp.lt.s32.totalorder %s100, 1
        %s1415 = scalar_select %p1414, %s100, 1
        %s1416 = scalar_lea.vmem %s23, %s1415
        %p1417 = pneg %p384
        %p1418 = pneg %p381
        %p1419 = scmp.lt.s32.totalorder %s100, 1
        %s1420 = scalar_select %p1419, %s100, 1
        %s1421 = smul.addr %s1420, 4
        %s1422 = smul.addr %s1421, 4
        %s1423 = scalar_lea.vmem %s25, %s1422
        %p1424 = pneg %p410
        %p1425 = pneg %p407
        %p1426 = scmp.lt.s32.totalorder %s100, 1
        %s1427 = scalar_select %p1426, %s100, 1
        %s1428 = scalar_lea.vmem %s27, %s1427
        %p1429 = pneg %p436
        %p1430 = pneg %p433
        %p1431 = scmp.lt.s32.totalorder %s100, 1
        %s1432 = scalar_select %p1431, %s100, 1
        %s1433 = smul.addr %s1432, 4
        %s1434 = smul.addr %s1433, 4
        %s1435 = scalar_lea.vmem %s29, %s1434
        %p1436 = pneg %p462
        %p1437 = pneg %p459
        %p1438 = scmp.lt.s32.totalorder %s100, 1
        %s1439 = scalar_select %p1438, %s100, 1
        %s1440 = scalar_lea.vmem %s31, %s1439
        %p1441 = pneg %p488
        %p1442 = pneg %p485
        %p1443 = scmp.lt.s32.totalorder %s100, 1
        %s1444 = scalar_select %p1443, %s100, 1
        %s1445 = smul.addr %s1444, 4
        %s1446 = smul.addr %s1445, 4
        %s1447 = scalar_lea.vmem %s33, %s1446
        %p1448 = pneg %p514
        %p1449 = pneg %p511
        %p1450 = scmp.lt.s32.totalorder %s100, 1
        %s1451 = scalar_select %p1450, %s100, 1
        %s1452 = scalar_lea.vmem %s35, %s1451
        %p1453 = pneg %p540
        %p1454 = pneg %p537
        %p1455 = scmp.lt.s32.totalorder %s100, 1
        %s1456 = scalar_select %p1455, %s100, 1
        %s1457 = smul.addr %s1456, 4
        %s1458 = smul.addr %s1457, 4
        %s1459 = scalar_lea.vmem %s37, %s1458
        %p1460 = pneg %p566
        %p1461 = pneg %p563
        %p1462 = scmp.lt.s32.totalorder %s100, 1
        %s1463 = scalar_select %p1462, %s100, 1
        %s1464 = scalar_lea.vmem %s39, %s1463
        %p1465 = pneg %p592
        %p1466 = pneg %p589
        %p1467 = scmp.lt.s32.totalorder %s100, 1
        %s1468 = scalar_select %p1467, %s100, 1
        %s1469 = smul.addr %s1468, 4
        %s1470 = smul.addr %s1469, 4
        %s1471 = scalar_lea.vmem %s41, %s1470
        %p1472 = pneg %p618
        %p1473 = pneg %p615
        %p1474 = scmp.lt.s32.totalorder %s100, 1
        %s1475 = scalar_select %p1474, %s100, 1
        %s1476 = scalar_lea.vmem %s43, %s1475
        %p1477 = pneg %p644
        %p1478 = pneg %p641
        %p1479 = scmp.lt.s32.totalorder %s100, 1
        %s1480 = scalar_select %p1479, %s100, 1
        %s1481 = smul.addr %s1480, 4
        %s1482 = smul.addr %s1481, 4
        %s1483 = scalar_lea.vmem %s45, %s1482
        %p1484 = pneg %p670
        %p1485 = pneg %p667
        %p1486 = scmp.lt.s32.totalorder %s100, 1
        %s1487 = scalar_select %p1486, %s100, 1
        %s1488 = scalar_lea.vmem %s47, %s1487
        %p1489 = pneg %p696
        %p1490 = pneg %p693
        %p1491 = scmp.lt.s32.totalorder %s100, 1
        %s1492 = scalar_select %p1491, %s100, 1
        %s1493 = smul.addr %s1492, 4
        %s1494 = smul.addr %s1493, 4
        %s1495 = scalar_lea.vmem %s49, %s1494
        %p1496 = pneg %p722
        %p1497 = pneg %p719
        %p1498 = scmp.lt.s32.totalorder %s100, 1
        %s1499 = scalar_select %p1498, %s100, 1
        %s1500 = scalar_lea.vmem %s51, %s1499
        %p1501 = pneg %p748
        %p1502 = pneg %p745
        %p1503 = scmp.lt.s32.totalorder %s100, 1
        %s1504 = scalar_select %p1503, %s100, 1
        %s1505 = scalar_lea.vmem %s53, %s1504
        %p1506 = pneg %p774
        %p1507 = pneg %p771
        %p1508 = scmp.lt.s32.totalorder %s100, 1
        %s1509 = scalar_select %p1508, %s100, 1
        %s1510 = scalar_lea.vmem %s55, %s1509
        %p1511 = pneg %p800
        %p1512 = pneg %p797
        %p1513 = scmp.lt.s32.totalorder %s100, 1
        %s1514 = scalar_select %p1513, %s100, 1
        %s1515 = scalar_lea.vmem %s57, %s1514
        %p1516 = pneg %p826
        %p1517 = pneg %p823
        %p1518 = scmp.lt.s32.totalorder %s100, 1
        %s1519 = scalar_select %p1518, %s100, 1
        %s1520 = scalar_lea.vmem %s59, %s1519
        %p1521 = pneg %p852
        %p1522 = pneg %p849
        %p1523 = scmp.lt.s32.totalorder %s100, 1
        %s1524 = scalar_select %p1523, %s100, 1
        %s1525 = smul.addr %s1524, 4
        %s1526 = smul.addr %s1525, 4
        %s1527 = scalar_lea.vmem %s61, %s1526
        %p1528 = pneg %p878
        %p1529 = pneg %p875
        %p1530 = scmp.lt.s32.totalorder %s100, 1
        %s1531 = scalar_select %p1530, %s100, 1
        %s1532 = smul.addr %s1531, 4
        %s1533 = smul.addr %s1532, 4
        %s1534 = scalar_lea.vmem %s63, %s1533
        %p1535 = pneg %p904
        %p1536 = pneg %p901
        %p1537 = scmp.lt.s32.totalorder %s100, 1
        %s1538 = scalar_select %p1537, %s100, 1
        %s1539 = scalar_lea.vmem %s65, %s1538
        %p1540 = pneg %p930
        %p1541 = pneg %p927
        %p1542 = scmp.lt.s32.totalorder %s100, 1
        %s1543 = scalar_select %p1542, %s100, 1
        %s1544 = smul.addr %s1543, 8
        %s1545 = smul.addr %s1544, 4
        %s1546 = scalar_lea.vmem %s67, %s1545
        %p1547 = pneg %p956
        %p1548 = pneg %p953
        %p1549 = scmp.lt.s32.totalorder %s100, 1
        %s1550 = scalar_select %p1549, %s100, 1
        %s1551 = scalar_lea.vmem %s69, %s1550
        %p1552 = pneg %p982
        %p1553 = pneg %p979
        %p1554 = pneg %p1003
        %p1555 = pneg %p1000
        %p1556 = pneg %p1024
        %p1557 = pneg %p1021
        %p1558 = pneg %p1045
        %p1559 = pneg %p1042
        %p1560 = pneg %p1066
        %p1561 = pneg %p1063
        %p1562 = pneg %p1092
        %p1563 = pneg %p1089
        %s1564 = sand.u32 %s1079, 1
        %s1565 = scalar_lea.sflag [#allocation4], %s1564
        %s1566 = sand.u32 %s1079, 1
        %s1567 = scalar_lea.vmem [#allocation8], %s1566
        %p1568 = scmp.lt.s32.totalorder %s99, 1
        %s1569 = scalar_select %p1568, %s99, 1
        %s1570 = smul.addr %s1569, 8
        %s1571 = scalar_lea.vmem %s1, %s1570
        %p1572 = scmp.lt.s32.totalorder %s99, 1
        %s1573 = scalar_select %p1572, %s99, 1
        %s1574 = smul.addr %s1573, 12
        %s1575 = smul.addr %s1574, 4
        %s1576 = scalar_lea.vmem %s3, %s1575
        %p1577 = scmp.lt.s32.totalorder %s100, 1
        %s1578 = scalar_select %p1577, %s100, 1
        %s1579 = scalar_lea.vmem %s17, %s1578
        %p1580 = scmp.lt.s32.totalorder %s100, 1
        %s1581 = scalar_select %p1580, %s100, 1
        %s1582 = scalar_lea.vmem %s19, %s1581
        %p1583 = scmp.lt.s32.totalorder %s100, 1
        %s1584 = scalar_select %p1583, %s100, 1
        %s1585 = smul.addr %s1584, 4
        %s1586 = smul.addr %s1585, 4
        %s1587 = scalar_lea.vmem %s21, %s1586
        %p1588 = scmp.lt.s32.totalorder %s100, 1
        %s1589 = scalar_select %p1588, %s100, 1
        %s1590 = scalar_lea.vmem %s23, %s1589
        %p1591 = scmp.lt.s32.totalorder %s100, 1
        %s1592 = scalar_select %p1591, %s100, 1
        %s1593 = smul.addr %s1592, 4
        %s1594 = smul.addr %s1593, 4
        %s1595 = scalar_lea.vmem %s25, %s1594
        %p1596 = scmp.lt.s32.totalorder %s100, 1
        %s1597 = scalar_select %p1596, %s100, 1
        %s1598 = scalar_lea.vmem %s27, %s1597
        %p1599 = scmp.lt.s32.totalorder %s100, 1
        %s1600 = scalar_select %p1599, %s100, 1
        %s1601 = smul.addr %s1600, 4
        %s1602 = smul.addr %s1601, 4
        %s1603 = scalar_lea.vmem %s29, %s1602
        %p1604 = scmp.lt.s32.totalorder %s100, 1
        %s1605 = scalar_select %p1604, %s100, 1
        %s1606 = scalar_lea.vmem %s31, %s1605
        %p1607 = scmp.lt.s32.totalorder %s100, 1
        %s1608 = scalar_select %p1607, %s100, 1
        %s1609 = smul.addr %s1608, 4
        %s1610 = smul.addr %s1609, 4
        %s1611 = scalar_lea.vmem %s33, %s1610
        %p1612 = scmp.lt.s32.totalorder %s100, 1
        %s1613 = scalar_select %p1612, %s100, 1
        %s1614 = scalar_lea.vmem %s35, %s1613
        %p1615 = scmp.lt.s32.totalorder %s100, 1
        %s1616 = scalar_select %p1615, %s100, 1
        %s1617 = smul.addr %s1616, 4
        %s1618 = smul.addr %s1617, 4
        %s1619 = scalar_lea.vmem %s37, %s1618
        %p1620 = scmp.lt.s32.totalorder %s100, 1
        %s1621 = scalar_select %p1620, %s100, 1
        %s1622 = scalar_lea.vmem %s39, %s1621
        %p1623 = scmp.lt.s32.totalorder %s100, 1
        %s1624 = scalar_select %p1623, %s100, 1
        %s1625 = smul.addr %s1624, 4
        %s1626 = smul.addr %s1625, 4
        %s1627 = scalar_lea.vmem %s41, %s1626
        %p1628 = scmp.lt.s32.totalorder %s100, 1
        %s1629 = scalar_select %p1628, %s100, 1
        %s1630 = scalar_lea.vmem %s43, %s1629
        %p1631 = scmp.lt.s32.totalorder %s100, 1
        %s1632 = scalar_select %p1631, %s100, 1
        %s1633 = smul.addr %s1632, 4
        %s1634 = smul.addr %s1633, 4
        %s1635 = scalar_lea.vmem %s45, %s1634
        %p1636 = scmp.lt.s32.totalorder %s100, 1
        %s1637 = scalar_select %p1636, %s100, 1
        %s1638 = scalar_lea.vmem %s47, %s1637
        %p1639 = scmp.lt.s32.totalorder %s100, 1
        %s1640 = scalar_select %p1639, %s100, 1
        %s1641 = smul.addr %s1640, 4
        %s1642 = smul.addr %s1641, 4
        %s1643 = scalar_lea.vmem %s49, %s1642
        %p1644 = scmp.lt.s32.totalorder %s100, 1
        %s1645 = scalar_select %p1644, %s100, 1
        %s1646 = scalar_lea.vmem %s51, %s1645
        %p1647 = scmp.lt.s32.totalorder %s100, 1
        %s1648 = scalar_select %p1647, %s100, 1
        %s1649 = scalar_lea.vmem %s53, %s1648
        %p1650 = scmp.lt.s32.totalorder %s100, 1
        %s1651 = scalar_select %p1650, %s100, 1
        %s1652 = scalar_lea.vmem %s55, %s1651
        %p1653 = scmp.lt.s32.totalorder %s100, 1
        %s1654 = scalar_select %p1653, %s100, 1
        %s1655 = scalar_lea.vmem %s57, %s1654
        %p1656 = scmp.lt.s32.totalorder %s100, 1
        %s1657 = scalar_select %p1656, %s100, 1
        %s1658 = scalar_lea.vmem %s59, %s1657
        %p1659 = scmp.lt.s32.totalorder %s100, 1
        %s1660 = scalar_select %p1659, %s100, 1
        %s1661 = smul.addr %s1660, 4
        %s1662 = smul.addr %s1661, 4
        %s1663 = scalar_lea.vmem %s61, %s1662
        %p1664 = scmp.lt.s32.totalorder %s100, 1
        %s1665 = scalar_select %p1664, %s100, 1
        %s1666 = smul.addr %s1665, 4
        %s1667 = smul.addr %s1666, 4
        %s1668 = scalar_lea.vmem %s63, %s1667
        %p1669 = scmp.lt.s32.totalorder %s100, 1
        %s1670 = scalar_select %p1669, %s100, 1
        %s1671 = scalar_lea.vmem %s65, %s1670
        %p1672 = scmp.lt.s32.totalorder %s100, 1
        %s1673 = scalar_select %p1672, %s100, 1
        %s1674 = smul.addr %s1673, 8
        %s1675 = smul.addr %s1674, 4
        %s1676 = scalar_lea.vmem %s67, %s1675
        %p1677 = scmp.lt.s32.totalorder %s100, 1
        %s1678 = scalar_select %p1677, %s100, 1
        %s1679 = scalar_lea.vmem %s69, %s1678
        %p1681 = scmp.eq.s32.totalorder %s100, 0
        // Predicated region
        $region185: #{gt_forward.1} parent=175 // pred_check
          %p1682 = pneg %p1681
        $region186: #{gt_forward.1} parent=175 // pred_check_branch
          %1684 = sbr.rel (%p1682) target = $region188
        $region187: #{gt_forward.1} parent=175 // pred_region
          %v1685 = vld [vmem:[%s1571] sm:$0xff]
          %v1686 = vpack.c.bf16 %v1685, %v1685
          %v1687 = vld [vmem:[%s11] sm:$0xf]
          %v1688 = vld [vmem:[%s11 + $0x4] sm:$0xf]
          %v1689 = vld [vmem:[%s13] sm:$0x1]
          %v1691 = vlaneseq
          %v1692 = vshrl.u32 %v1691, 7
          %v1693 = vsub.s32 0, %v1692
          %v1694 = vrot.slane %v1689, %v1693
          %v1698 = vunpack.c.l.b16 %v1687
          %v1699 = vunpack.c.l.b16 %v1688
          %v1700 = vpack.c.b16 %v1699, %v1698
          %vm1702 = vcmask 130048
          %v1704 = vsel %vm1702, %v1686, 0
          %1706 = vmatprep.subr.bf16.mxu0 0
          %1707 = vmatpush1.bf16.msra.mxu0 %v1700
          %1708 = vmatprep.subr.bf16.mxu0 0
          %1709 = vmatpush1.bf16.msra.mxu0 0
          %1710 = vmatprep.subr.bf16.mxu0 0
          %1711 = vmatpush1.bf16.msra.mxu0 0
          %1712 = vmatprep.subr.bf16.mxu0 0
          %1713 = vmatpush1.bf16.msra.mxu0 0
          %1714 = vmatprep.subr.bf16.mxu0 0
          %1715 = vmatpush1.bf16.msra.mxu0 0
          %1716 = vmatprep.subr.bf16.mxu0 0
          %1717 = vmatpush1.bf16.msra.mxu0 0
          %1718 = vmatprep.subr.bf16.mxu0 0
          %1719 = vmatpush1.bf16.msra.mxu0 0
          %1720 = vmatprep.subr.bf16.mxu0 0
          %1721 = vmatpush1.bf16.msra.mxu0 0
          %1722 = vmatprep.subr.bf16.mxu0 0
          %1723 = vmatpush1.bf16.msra.mxu0 0
          %1724 = vmatprep.subr.bf16.mxu0 0
          %1725 = vmatpush1.bf16.msra.mxu0 0
          %1726 = vmatprep.subr.bf16.mxu0 0
          %1727 = vmatpush1.bf16.msra.mxu0 0
          %1728 = vmatprep.subr.bf16.mxu0 0
          %1729 = vmatpush1.bf16.msra.mxu0 0
          %1730 = vmatprep.subr.bf16.mxu0 0
          %1731 = vmatpush1.bf16.msra.mxu0 0
          %1732 = vmatprep.subr.bf16.mxu0 0
          %1733 = vmatpush1.bf16.msra.mxu0 0
          %1734 = vmatprep.subr.bf16.mxu0 0
          %1735 = vmatpush1.bf16.msra.mxu0 0
          %1736 = vmatprep.subr.bf16.mxu0 0
          %1737 = vmatpush1.bf16.msra.mxu0 0
          %1738 = vmatprep.mubr.bf16.mxu0 0
          %1739 = vmatmul.mubr.bf16.gmra.mrb[0].mxu0 %v1704
          %v1740 = vpop.f32.mrb[0].mxu0
          %v1741 = vadd.f32 %v1694, %v1740
          %v1742 = vpop.f32.mrb[0].mxu0
          %v1743 = vpop.f32.mrb[0].mxu0
          %v1744 = vpop.f32.mrb[0].mxu0
          %1745 = vdwg.mxu0
          %vm1746 = vcmask 261120
          %1747 = vst.msk [vmem:[#allocation2] sm:$0xff] %vm1746, %v1741
          %v1748 = vld [vmem:[%s15] sm:$0x1]
          %vm1749 = vcmask 253952
          %1750 = vst.msk [vmem:[#allocation2 + $0x8] sm:$0x1] %vm1749, %v1748
        $region188: #{gt_forward.1} parent=175 // pred_fallthru
          _
        %v1751 = vld [vmem:[#allocation2] sm:$0xff]
        %v1752 = vld [vmem:[#allocation2 + $0x8] sm:$0x1]
        %v1753 = vld [vmem:[%s1579] sm:$0x1]
        %v1754 = vld [vmem:[%s1582] sm:$0x1]
        %vm1755 = vcmask 261120
        %v1756 = vsel %vm1755, %v1751, 0.0
        %1757 = vadd.xlane.f32.xlu0 %v1756
        %v1758 = vpop.xlane.xlu0 %1757
        %vm1759 = vcmask 253952
        %v1760 = vsel %vm1759, %v1752, 0.0
        %1761 = vadd.xlane.f32.xlu0 %v1760
        %v1762 = vpop.xlane.xlu0 %1761
        %v1763 = vrcp.pop 32.0
        %v1764 = vmul.f32 %v1758, %v1763
        %v1765 = vmul.f32 %v1762, %v1763
        %v1766 = vsub.f32 %v1751, %v1764
        %v1767 = vsub.f32 %v1752, %v1765
        %v1768 = vmul.f32 %v1766, %v1766
        %v1769 = vmul.f32 %v1767, %v1767
        %v1770 = vsel %vm1755, %v1768, 0.0
        %1771 = vadd.xlane.f32.xlu0 %v1770
        %v1772 = vpop.xlane.xlu0 %1771
        %v1773 = vsel %vm1759, %v1769, 0.0
        %1774 = vadd.xlane.f32.xlu0 %v1773
        %v1775 = vpop.xlane.xlu0 %1774
        %v1776 = vmul.f32 %v1772, %v1763
        %v1777 = vmul.f32 %v1775, %v1763
        %v1778 = vadd.f32 %v1776, 1e-05
        %v1779 = vadd.f32 %v1777, 1e-05
        %v1780 = vrsqrt.pop %v1778
        %v1781 = vrsqrt.pop %v1779
        %v1782 = vmul.f32 %v1766, %v1780
        %v1783 = vmul.f32 %v1767, %v1781
        %v1785 = vlaneseq
        %v1786 = vshrl.u32 %v1785, 7
        %v1787 = vsub.s32 0, %v1786
        %v1788 = vrot.slane %v1753, %v1787
        %v1790 = vmul.f32 %v1782, %v1788
        %v1791 = vmul.f32 %v1783, %v1788
        %v1793 = vlaneseq
        %v1794 = vshrl.u32 %v1793, 7
        %v1795 = vsub.s32 0, %v1794
        %v1796 = vrot.slane %v1754, %v1795
        %v1798 = vadd.f32 %v1790, %v1796
        %v1799 = vadd.f32 %v1791, %v1796
        %v1800 = vpack.c.bf16 %v1799, %v1798
        %v1801 = vld [vmem:[%s1587] sm:$0xf]
        %v1802 = vld [vmem:[%s1587 + $0x4] sm:$0xf]
        %v1803 = vld [vmem:[%s1587 + $0x8] sm:$0xf]
        %v1804 = vld [vmem:[%s1587 + $0xc] sm:$0xf]
        %v1805 = vld [vmem:[%s1590] sm:$0x1]
        %v1806 = vld [vmem:[%s1595] sm:$0xf]
        %v1807 = vld [vmem:[%s1595 + $0x4] sm:$0xf]
        %v1808 = vld [vmem:[%s1595 + $0x8] sm:$0xf]
        %v1809 = vld [vmem:[%s1595 + $0xc] sm:$0xf]
        %v1810 = vld [vmem:[%s1598] sm:$0x1]
        %v1811 = vld [vmem:[%s1603] sm:$0xf]
        %v1812 = vld [vmem:[%s1603 + $0x4] sm:$0xf]
        %v1813 = vld [vmem:[%s1603 + $0x8] sm:$0xf]
        %v1814 = vld [vmem:[%s1603 + $0xc] sm:$0xf]
        %v1815 = vld [vmem:[%s1606] sm:$0x1]
        %v1816 = vld [vmem:[%s1611] sm:$0xf]
        %v1817 = vld [vmem:[%s1611 + $0x4] sm:$0xf]
        %v1818 = vld [vmem:[%s1611 + $0x8] sm:$0xf]
        %v1819 = vld [vmem:[%s1611 + $0xc] sm:$0xf]
        %v1820 = vld [vmem:[%s1614] sm:$0x1]
        %v1822 = vlaneseq
        %v1823 = vshrl.u32 %v1822, 7
        %v1824 = vsub.s32 0, %v1823
        %v1825 = vrot.slane %v1805, %v1824
        %v1831 = vunpack.c.l.b16 %v1801
        %v1832 = vunpack.c.l.b16 %v1802
        %v1833 = vunpack.c.l.b16 %v1803
        %v1834 = vunpack.c.l.b16 %v1804
        %v1835 = vpack.c.b16 %v1832, %v1831
        %v1836 = vpack.c.b16 %v1834, %v1833
        %v1840 = vsel %vm1755, %v1800, 0
        %1842 = vmatprep.subr.bf16.mxu0 0
        %1843 = vmatpush1.bf16.msra.mxu0 %v1835
        %1844 = vmatprep.subr.bf16.mxu0 0
        %1845 = vmatpush1.bf16.msra.mxu0 %v1836
        %1846 = vmatprep.subr.bf16.mxu0 0
        %1847 = vmatpush1.bf16.msra.mxu0 0
        %1848 = vmatprep.subr.bf16.mxu0 0
        %1849 = vmatpush1.bf16.msra.mxu0 0
        %1850 = vmatprep.subr.bf16.mxu0 0
        %1851 = vmatpush1.bf16.msra.mxu0 0
        %1852 = vmatprep.subr.bf16.mxu0 0
        %1853 = vmatpush1.bf16.msra.mxu0 0
        %1854 = vmatprep.subr.bf16.mxu0 0
        %1855 = vmatpush1.bf16.msra.mxu0 0
        %1856 = vmatprep.subr.bf16.mxu0 0
        %1857 = vmatpush1.bf16.msra.mxu0 0
        %1858 = vmatprep.subr.bf16.mxu0 0
        %1859 = vmatpush1.bf16.msra.mxu0 0
        %1860 = vmatprep.subr.bf16.mxu0 0
        %1861 = vmatpush1.bf16.msra.mxu0 0
        %1862 = vmatprep.subr.bf16.mxu0 0
        %1863 = vmatpush1.bf16.msra.mxu0 0
        %1864 = vmatprep.subr.bf16.mxu0 0
        %1865 = vmatpush1.bf16.msra.mxu0 0
        %1866 = vmatprep.subr.bf16.mxu0 0
        %1867 = vmatpush1.bf16.msra.mxu0 0
        %1868 = vmatprep.subr.bf16.mxu0 0
        %1869 = vmatpush1.bf16.msra.mxu0 0
        %1870 = vmatprep.subr.bf16.mxu0 0
        %1871 = vmatpush1.bf16.msra.mxu0 0
        %1872 = vmatprep.subr.bf16.mxu0 0
        %1873 = vmatpush1.bf16.msra.mxu0 0
        %1874 = vmatprep.mubr.bf16.mxu0 0
        %1875 = vmatmul.mubr.bf16.gmra.mrb[0].mxu0 %v1840
        %v1876 = vpop.f32.mrb[0].mxu0
        %v1877 = vadd.f32 %v1825, %v1876
        %v1878 = vpop.f32.mrb[0].mxu0
        %v1879 = vpop.f32.mrb[0].mxu0
        %v1880 = vadd.f32 %v1825, %v1879
        %v1881 = vpop.f32.mrb[0].mxu0
        %1882 = vdwg.mxu0
        %v1884 = vlaneseq
        %v1885 = vshrl.u32 %v1884, 7
        %v1886 = vsub.s32 0, %v1885
        %v1887 = vrot.slane %v1810, %v1886
        %v1893 = vunpack.c.l.b16 %v1806
        %v1894 = vunpack.c.l.b16 %v1807
        %v1895 = vunpack.c.l.b16 %v1808
        %v1896 = vunpack.c.l.b16 %v1809
        %v1897 = vpack.c.b16 %v1894, %v1893
        %v1898 = vpack.c.b16 %v1896, %v1895
        %1901 = vmatprep.subr.bf16.mxu0 0
        %1902 = vmatpush1.bf16.msra.mxu0 %v1897
        %1903 = vmatprep.subr.bf16.mxu0 0
        %1904 = vmatpush1.bf16.msra.mxu0 %v1898
        %1905 = vmatprep.subr.bf16.mxu0 0
        %1906 = vmatpush1.bf16.msra.mxu0 0
        %1907 = vmatprep.subr.bf16.mxu0 0
        %1908 = vmatpush1.bf16.msra.mxu0 0
        %1909 = vmatprep.subr.bf16.mxu0 0
        %1910 = vmatpush1.bf16.msra.mxu0 0
        %1911 = vmatprep.subr.bf16.mxu0 0
        %1912 = vmatpush1.bf16.msra.mxu0 0
        %1913 = vmatprep.subr.bf16.mxu0 0
        %1914 = vmatpush1.bf16.msra.mxu0 0
        %1915 = vmatprep.subr.bf16.mxu0 0
        %1916 = vmatpush1.bf16.msra.mxu0 0
        %1917 = vmatprep.subr.bf16.mxu0 0
        %1918 = vmatpush1.bf16.msra.mxu0 0
        %1919 = vmatprep.subr.bf16.mxu0 0
        %1920 = vmatpush1.bf16.msra.mxu0 0
        %1921 = vmatprep.subr.bf16.mxu0 0
        %1922 = vmatpush1.bf16.msra.mxu0 0
        %1923 = vmatprep.subr.bf16.mxu0 0
        %1924 = vmatpush1.bf16.msra.mxu0 0
        %1925 = vmatprep.subr.bf16.mxu0 0
        %1926 = vmatpush1.bf16.msra.mxu0 0
        %1927 = vmatprep.subr.bf16.mxu0 0
        %1928 = vmatpush1.bf16.msra.mxu0 0
        %1929 = vmatprep.subr.bf16.mxu0 0
        %1930 = vmatpush1.bf16.msra.mxu0 0
        %1931 = vmatprep.subr.bf16.mxu0 0
        %1932 = vmatpush1.bf16.msra.mxu0 0
        %1933 = vmatprep.mubr.bf16.mxu0 0
        %1934 = vmatmul.mubr.bf16.gmra.mrb[0].mxu0 %v1840
        %v1935 = vpop.f32.mrb[0].mxu0
        %v1936 = vadd.f32 %v1887, %v1935
        %v1937 = vpop.f32.mrb[0].mxu0
        %v1938 = vpop.f32.mrb[0].mxu0
        %v1939 = vadd.f32 %v1887, %v1938
        %v1940 = vpop.f32.mrb[0].mxu0
        %1941 = vdwg.mxu0
        %v1943 = vlaneseq
        %v1944 = vshrl.u32 %v1943, 7
        %v1945 = vsub.s32 0, %v1944
        %v1946 = vrot.slane %v1815, %v1945
        %v1952 = vunpack.c.l.b16 %v1811
        %v1953 = vunpack.c.l.b16 %v1812
        %v1954 = vunpack.c.l.b16 %v1813
        %v1955 = vunpack.c.l.b16 %v1814
        %v1956 = vpack.c.b16 %v1953, %v1952
        %v1957 = vpack.c.b16 %v1955, %v1954
        %1960 = vmatprep.subr.bf16.mxu0 0
        %1961 = vmatpush1.bf16.msra.mxu0 %v1956
        %1962 = vmatprep.subr.bf16.mxu0 0
        %1963 = vmatpush1.bf16.msra.mxu0 %v1957
        %1964 = vmatprep.subr.bf16.mxu0 0
        %1965 = vmatpush1.bf16.msra.mxu0 0
        %1966 = vmatprep.subr.bf16.mxu0 0
        %1967 = vmatpush1.bf16.msra.mxu0 0
        %1968 = vmatprep.subr.bf16.mxu0 0
        %1969 = vmatpush1.bf16.msra.mxu0 0
        %1970 = vmatprep.subr.bf16.mxu0 0
        %1971 = vmatpush1.bf16.msra.mxu0 0
        %1972 = vmatprep.subr.bf16.mxu0 0
        %1973 = vmatpush1.bf16.msra.mxu0 0
        %1974 = vmatprep.subr.bf16.mxu0 0
        %1975 = vmatpush1.bf16.msra.mxu0 0
        %1976 = vmatprep.subr.bf16.mxu0 0
        %1977 = vmatpush1.bf16.msra.mxu0 0
        %1978 = vmatprep.subr.bf16.mxu0 0
        %1979 = vmatpush1.bf16.msra.mxu0 0
        %1980 = vmatprep.subr.bf16.mxu0 0
        %1981 = vmatpush1.bf16.msra.mxu0 0
        %1982 = vmatprep.subr.bf16.mxu0 0
        %1983 = vmatpush1.bf16.msra.mxu0 0
        %1984 = vmatprep.subr.bf16.mxu0 0
        %1985 = vmatpush1.bf16.msra.mxu0 0
        %1986 = vmatprep.subr.bf16.mxu0 0
        %1987 = vmatpush1.bf16.msra.mxu0 0
        %1988 = vmatprep.subr.bf16.mxu0 0
        %1989 = vmatpush1.bf16.msra.mxu0 0
        %1990 = vmatprep.subr.bf16.mxu0 0
        %1991 = vmatpush1.bf16.msra.mxu0 0
        %1992 = vmatprep.mubr.bf16.mxu0 0
        %1993 = vmatmul.mubr.bf16.gmra.mrb[0].mxu0 %v1840
        %v1994 = vpop.f32.mrb[0].mxu0
        %v1995 = vadd.f32 %v1946, %v1994
        %v1996 = vpop.f32.mrb[0].mxu0
        %v1997 = vpop.f32.mrb[0].mxu0
        %v1998 = vadd.f32 %v1946, %v1997
        %v1999 = vpop.f32.mrb[0].mxu0
        %2000 = vdwg.mxu0
        %v2001 = vmul.f32 %v1877, 0.35355338
        %v2002 = vmul.f32 %v1880, 0.35355338
        %v2003 = vpack.c.bf16 %v2002, %v2001
        %v2004 = vpack.c.bf16 %v1939, %v1936
        %v2005 = vpack.c.bf16 %v1998, %v1995
        %s2006 = smul.u32 %s100, 24
        %s2007 = sld [smem:[#allocation3 + %s2006]]
        %v2008 = vld [vmem:[%s1576] sm:$0xf]
        %v2009 = vld [vmem:[%s1576 + $0x4] sm:$0x1]
        %v2010 = vunpack.c.l.bf16 %v2008
        %v2011 = vunpack.c.l.bf16 %v2009
        %v2012 = vstv %s2007
        %v2013 = vmul.f32 %v2012, %v2010
        %v2014 = vmul.f32 %v2012, %v2011
        %s2015 = smul.u32 %s100, 6
        %s2016 = sadd.s32 %s2015, 1
        %s2017 = smul.u32 %s2016, 4
        %s2018 = sld [smem:[#allocation3 + %s2017]]
        %s2019 = scalar_lea.vmem %s1576, 8
        %v2020 = vld [vmem:[%s2019] sm:$0xf]
        %v2021 = vld [vmem:[%s2019 + $0x4] sm:$0x1]
        %v2022 = vunpack.c.l.bf16 %v2020
        %v2023 = vunpack.c.l.bf16 %v2021
        %v2024 = vstv %s2018
        %v2025 = vmul.f32 %v2024, %v2022
        %v2026 = vmul.f32 %v2024, %v2023
        %v2027 = vadd.f32 %v2013, %v2025
        %v2028 = vadd.f32 %v2014, %v2026
        %s2029 = sadd.s32 %s2015, 2
        %s2030 = smul.u32 %s2029, 4
        %s2031 = sld [smem:[#allocation3 + %s2030]]
        %s2032 = scalar_lea.vmem %s1576, 16
        %v2033 = vld [vmem:[%s2032] sm:$0xf]
        %v2034 = vld [vmem:[%s2032 + $0x4] sm:$0x1]
        %v2035 = vunpack.c.l.bf16 %v2033
        %v2036 = vunpack.c.l.bf16 %v2034
        %v2037 = vstv %s2031
        %v2038 = vmul.f32 %v2037, %v2035
        %v2039 = vmul.f32 %v2037, %v2036
        %v2040 = vadd.f32 %v2027, %v2038
        %v2041 = vadd.f32 %v2028, %v2039
        %s2042 = sadd.s32 %s2015, 3
        %s2043 = smul.u32 %s2042, 4
        %s2044 = sld [smem:[#allocation3 + %s2043]]
        %s2045 = scalar_lea.vmem %s1576, 24
        %v2046 = vld [vmem:[%s2045] sm:$0xf]
        %v2047 = vld [vmem:[%s2045 + $0x4] sm:$0x1]
        %v2048 = vunpack.c.l.bf16 %v2046
        %v2049 = vunpack.c.l.bf16 %v2047
        %v2050 = vstv %s2044
        %v2051 = vmul.f32 %v2050, %v2048
        %v2052 = vmul.f32 %v2050, %v2049
        %v2053 = vadd.f32 %v2040, %v2051
        %v2054 = vadd.f32 %v2041, %v2052
        %s2055 = sadd.s32 %s2015, 4
        %s2056 = smul.u32 %s2055, 4
        %s2057 = sld [smem:[#allocation3 + %s2056]]
        %s2058 = scalar_lea.vmem %s1576, 32
        %v2059 = vld [vmem:[%s2058] sm:$0xf]
        %v2060 = vld [vmem:[%s2058 + $0x4] sm:$0x1]
        %v2061 = vunpack.c.l.bf16 %v2059
        %v2062 = vunpack.c.l.bf16 %v2060
        %v2063 = vstv %s2057
        %v2064 = vmul.f32 %v2063, %v2061
        %v2065 = vmul.f32 %v2063, %v2062
        %v2066 = vadd.f32 %v2053, %v2064
        %v2067 = vadd.f32 %v2054, %v2065
        %s2068 = sadd.s32 %s2015, 5
        %s2069 = smul.u32 %s2068, 4
        %s2070 = sld [smem:[#allocation3 + %s2069]]
        %s2071 = scalar_lea.vmem %s1576, 40
        %v2072 = vld [vmem:[%s2071] sm:$0xf]
        %v2073 = vld [vmem:[%s2071 + $0x4] sm:$0x1]
        %v2074 = vunpack.c.l.bf16 %v2072
        %v2075 = vunpack.c.l.bf16 %v2073
        %v2076 = vstv %s2070
        %v2077 = vmul.f32 %v2076, %v2074
        %v2078 = vmul.f32 %v2076, %v2075
        %v2079 = vadd.f32 %v2066, %v2077
        %v2080 = vadd.f32 %v2067, %v2078
        %s2081 = smul.u32 %s100, 4
        %s2082 = sld [smem:[#allocation6 + %s2081]]
        %v2083 = vstv %s2082
        %v2084 = vadd.f32 %v2079, %v2083
        %v2085 = vadd.f32 %v2080, %v2083
        %vm2086 = vcmask 64512
        %v2088 = vsel %vm2086, %v2003, 0
        %v2091 = vsel %vm2086, %v2004, 0
        %2093 = vmatprep.subr.bf16.mxu0 0
        %2094 = vmatpush1.bf16.xpose.msra.mxu0 %v2091
        %2095 = vmatprep.subr.bf16.mxu0 0
        %2096 = vmatpush1.bf16.xpose.msra.mxu0 0
        %2097 = vmatprep.subr.bf16.mxu0 0
        %2098 = vmatpush1.bf16.xpose.msra.mxu0 0
        %2099 = vmatprep.subr.bf16.mxu0 0
        %2100 = vmatpush1.bf16.xpose.msra.mxu0 0
        %2101 = vmatprep.subr.bf16.mxu0 0
        %2102 = vmatpush1.bf16.xpose.msra.mxu0 0
        %2103 = vmatprep.subr.bf16.mxu0 0
        %2104 = vmatpush1.bf16.xpose.msra.mxu0 0
        %2105 = vmatprep.subr.bf16.mxu0 0
        %2106 = vmatpush1.bf16.xpose.msra.mxu0 0
        %2107 = vmatprep.subr.bf16.mxu0 0
        %2108 = vmatpush1.bf16.xpose.msra.mxu0 0
        %2109 = vmatprep.subr.bf16.mxu0 0
        %2110 = vmatpush1.bf16.xpose.msra.mxu0 0
        %2111 = vmatprep.subr.bf16.mxu0 0
        %2112 = vmatpush1.bf16.xpose.msra.mxu0 0
        %2113 = vmatprep.subr.bf16.mxu0 0
        %2114 = vmatpush1.bf16.xpose.msra.mxu0 0
        %2115 = vmatprep.subr.bf16.mxu0 0
        %2116 = vmatpush1.bf16.xpose.msra.mxu0 0
        %2117 = vmatprep.subr.bf16.mxu0 0
        %2118 = vmatpush1.bf16.xpose.msra.mxu0 0
        %2119 = vmatprep.subr.bf16.mxu0 0
        %2120 = vmatpush1.bf16.xpose.msra.mxu0 0
        %2121 = vmatprep.subr.bf16.mxu0 0
        %2122 = vmatpush1.bf16.xpose.msra.mxu0 0
        %2123 = vmatprep.subr.bf16.mxu0 0
        %2124 = vmatpush1.bf16.xpose.msra.mxu0 0
        %2125 = vmatprep.mubr.bf16.mxu0 0
        %2126 = vmatmul.mubr.bf16.gmra.mrb[0].mxu0 %v2088
        %v2127 = vpop.f32.mrb[0].mxu0
        %v2128 = vadd.f32 %v2084, %v2127
        %v2129 = vpop.f32.mrb[0].mxu0
        %v2130 = vpop.f32.mrb[0].mxu0
        %v2131 = vadd.f32 %v2085, %v2130
        %v2132 = vpop.f32.mrb[0].mxu0
        %2133 = vdwg.mxu0
        %vm2134 = vcmask 72704
        %v2135 = vsel %vm2134, %v2128, -inf
        %2136 = vmax.xlane.f32.xlu0 %v2135
        %v2137 = vpop.xlane.xlu0 %2136
        %vm2138 = vcmask 65536
        %v2139 = vsel %vm2138, %v2131, -inf
        %2140 = vmax.xlane.f32.xlu0 %v2139
        %v2141 = vpop.xlane.xlu0 %2140
        %v2142 = vsub.f32 %v2128, %v2137
        %v2143 = vsub.f32 %v2131, %v2141
        %v2144 = vmul.f32 %v2142, 1.442695
        %v2145 = vpow.pop %v2144
        %v2146 = vmul.f32 %v2143, 1.442695
        %v2147 = vpow.pop %v2146
        %v2148 = vsel %vm2134, %v2145, 0.0
        %2149 = vadd.xlane.f32.xlu0 %v2148
        %v2150 = vpop.xlane.xlu0 %2149
        %v2151 = vsel %vm2138, %v2147, 0.0
        %2152 = vadd.xlane.f32.xlu0 %v2151
        %v2153 = vpop.xlane.xlu0 %2152
        %v2154 = vrcp.pop %v2150
        %v2155 = vrcp.pop %v2153
        %v2156 = vmul.f32 %v2145, %v2154
        %v2157 = vmul.f32 %v2147, %v2155
        %v2158 = vpack.c.bf16 %v2157, %v2156
        %v2160 = vsel %vm2134, %v2158, 0
        %vm2162 = vcmask 1043456
        %vm2163 = vcmask 1044480
        %v2164 = vsel %vm2162, 4294967295, 65535
        %v2165 = vsel %vm2163, %v2164, 0
        %v2167 = vand.u32 %v2005, %v2165
        %2169 = vmatprep.subr.bf16.mxu0 0
        %2170 = vmatpush1.bf16.msra.mxu0 %v2167
        %2171 = vmatprep.subr.bf16.mxu0 0
        %2172 = vmatpush1.bf16.msra.mxu0 0
        %2173 = vmatprep.subr.bf16.mxu0 0
        %2174 = vmatpush1.bf16.msra.mxu0 0
        %2175 = vmatprep.subr.bf16.mxu0 0
        %2176 = vmatpush1.bf16.msra.mxu0 0
        %2177 = vmatprep.subr.bf16.mxu0 0
        %2178 = vmatpush1.bf16.msra.mxu0 0
        %2179 = vmatprep.subr.bf16.mxu0 0
        %2180 = vmatpush1.bf16.msra.mxu0 0
        %2181 = vmatprep.subr.bf16.mxu0 0
        %2182 = vmatpush1.bf16.msra.mxu0 0
        %2183 = vmatprep.subr.bf16.mxu0 0
        %2184 = vmatpush1.bf16.msra.mxu0 0
        %2185 = vmatprep.subr.bf16.mxu0 0
        %2186 = vmatpush1.bf16.msra.mxu0 0
        %2187 = vmatprep.subr.bf16.mxu0 0
        %2188 = vmatpush1.bf16.msra.mxu0 0
        %2189 = vmatprep.subr.bf16.mxu0 0
        %2190 = vmatpush1.bf16.msra.mxu0 0
        %2191 = vmatprep.subr.bf16.mxu0 0
        %2192 = vmatpush1.bf16.msra.mxu0 0
        %2193 = vmatprep.subr.bf16.mxu0 0
        %2194 = vmatpush1.bf16.msra.mxu0 0
        %2195 = vmatprep.subr.bf16.mxu0 0
        %2196 = vmatpush1.bf16.msra.mxu0 0
        %2197 = vmatprep.subr.bf16.mxu0 0
        %2198 = vmatpush1.bf16.msra.mxu0 0
        %2199 = vmatprep.subr.bf16.mxu0 0
        %2200 = vmatpush1.bf16.msra.mxu0 0
        %2201 = vmatprep.mubr.bf16.mxu0 0
        %2202 = vmatmul.mubr.bf16.gmra.mrb[0].mxu0 %v2160
        %v2203 = vpop.f32.mrb[0].mxu0
        %v2204 = vadd.f32 0.0, %v2203
        %v2205 = vpop.f32.mrb[0].mxu0
        %v2206 = vpop.f32.mrb[0].mxu0
        %v2207 = vadd.f32 0.0, %v2206
        %v2208 = vpop.f32.mrb[0].mxu0
        %2209 = vdwg.mxu0
        %s2210 = sadd.s32 %s2006, 1
        %s2211 = sld [smem:[#allocation3 + %s2210]]
        %v2212 = vstv %s2211
        %v2213 = vmul.f32 %v2212, %v2010
        %v2214 = vmul.f32 %v2212, %v2011
        %s2215 = sadd.s32 %s2017, 1
        %s2216 = sld [smem:[#allocation3 + %s2215]]
        %v2217 = vstv %s2216
        %v2218 = vmul.f32 %v2217, %v2022
        %v2219 = vmul.f32 %v2217, %v2023
        %v2220 = vadd.f32 %v2213, %v2218
        %v2221 = vadd.f32 %v2214, %v2219
        %s2222 = sadd.s32 %s2030, 1
        %s2223 = sld [smem:[#allocation3 + %s2222]]
        %v2224 = vstv %s2223
        %v2225 = vmul.f32 %v2224, %v2035
        %v2226 = vmul.f32 %v2224, %v2036
        %v2227 = vadd.f32 %v2220, %v2225
        %v2228 = vadd.f32 %v2221, %v2226
        %s2229 = sadd.s32 %s2043, 1
        %s2230 = sld [smem:[#allocation3 + %s2229]]
        %v2231 = vstv %s2230
        %v2232 = vmul.f32 %v2231, %v2048
        %v2233 = vmul.f32 %v2231, %v2049
        %v2234 = vadd.f32 %v2227, %v2232
        %v2235 = vadd.f32 %v2228, %v2233
        %s2236 = sadd.s32 %s2056, 1
        %s2237 = sld [smem:[#allocation3 + %s2236]]
        %v2238 = vstv %s2237
        %v2239 = vmul.f32 %v2238, %v2061
        %v2240 = vmul.f32 %v2238, %v2062
        %v2241 = vadd.f32 %v2234, %v2239
        %v2242 = vadd.f32 %v2235, %v2240
        %s2243 = sadd.s32 %s2069, 1
        %s2244 = sld [smem:[#allocation3 + %s2243]]
        %v2245 = vstv %s2244
        %v2246 = vmul.f32 %v2245, %v2074
        %v2247 = vmul.f32 %v2245, %v2075
        %v2248 = vadd.f32 %v2241, %v2246
        %v2249 = vadd.f32 %v2242, %v2247
        %s2250 = sadd.s32 %s2081, 1
        %s2251 = sld [smem:[#allocation6 + %s2250]]
        %v2252 = vstv %s2251
        %v2253 = vadd.f32 %v2248, %v2252
        %v2254 = vadd.f32 %v2249, %v2252
        %2256 = vrot.lane.b32.xlu0 %v2003, 120
        %v2257 = vpop.permute.xlu0 %2256
        %2259 = vrot.lane.b32.xlu0 %v2004, 120
        %v2260 = vpop.permute.xlu0 %2259
        %v2262 = vsel %vm2086, %v2257, 0
        %v2265 = vsel %vm2086, %v2260, 0
        %2267 = vmatprep.subr.bf16.mxu0 0
        %2268 = vmatpush1.bf16.xpose.msra.mxu0 %v2265
        %2269 = vmatprep.subr.bf16.mxu0 0
        %2270 = vmatpush1.bf16.xpose.msra.mxu0 0
        %2271 = vmatprep.subr.bf16.mxu0 0
        %2272 = vmatpush1.bf16.xpose.msra.mxu0 0
        %2273 = vmatprep.subr.bf16.mxu0 0
        %2274 = vmatpush1.bf16.xpose.msra.mxu0 0
        %2275 = vmatprep.subr.bf16.mxu0 0
        %2276 = vmatpush1.bf16.xpose.msra.mxu0 0
        %2277 = vmatprep.subr.bf16.mxu0 0
        %2278 = vmatpush1.bf16.xpose.msra.mxu0 0
        %2279 = vmatprep.subr.bf16.mxu0 0
        %2280 = vmatpush1.bf16.xpose.msra.mxu0 0
        %2281 = vmatprep.subr.bf16.mxu0 0
        %2282 = vmatpush1.bf16.xpose.msra.mxu0 0
        %2283 = vmatprep.subr.bf16.mxu0 0
        %2284 = vmatpush1.bf16.xpose.msra.mxu0 0
        %2285 = vmatprep.subr.bf16.mxu0 0
        %2286 = vmatpush1.bf16.xpose.msra.mxu0 0
        %2287 = vmatprep.subr.bf16.mxu0 0
        %2288 = vmatpush1.bf16.xpose.msra.mxu0 0
        %2289 = vmatprep.subr.bf16.mxu0 0
        %2290 = vmatpush1.bf16.xpose.msra.mxu0 0
        %2291 = vmatprep.subr.bf16.mxu0 0
        %2292 = vmatpush1.bf16.xpose.msra.mxu0 0
        %2293 = vmatprep.subr.bf16.mxu0 0
        %2294 = vmatpush1.bf16.xpose.msra.mxu0 0
        %2295 = vmatprep.subr.bf16.mxu0 0
        %2296 = vmatpush1.bf16.xpose.msra.mxu0 0
        %2297 = vmatprep.subr.bf16.mxu0 0
        %2298 = vmatpush1.bf16.xpose.msra.mxu0 0
        %2299 = vmatprep.mubr.bf16.mxu0 0
        %2300 = vmatmul.mubr.bf16.gmra.mrb[0].mxu0 %v2262
        %v2301 = vpop.f32.mrb[0].mxu0
        %v2302 = vadd.f32 %v2253, %v2301
        %v2303 = vpop.f32.mrb[0].mxu0
        %v2304 = vpop.f32.mrb[0].mxu0
        %v2305 = vadd.f32 %v2254, %v2304
        %v2306 = vpop.f32.mrb[0].mxu0
        %2307 = vdwg.mxu0
        %v2308 = vsel %vm2134, %v2302, -inf
        %2309 = vmax.xlane.f32.xlu0 %v2308
        %v2310 = vpop.xlane.xlu0 %2309
        %v2311 = vsel %vm2138, %v2305, -inf
        %2312 = vmax.xlane.f32.xlu0 %v2311
        %v2313 = vpop.xlane.xlu0 %2312
        %v2314 = vsub.f32 %v2302, %v2310
        %v2315 = vsub.f32 %v2305, %v2313
        %v2316 = vmul.f32 %v2314, 1.442695
        %v2317 = vpow.pop %v2316
        %v2318 = vmul.f32 %v2315, 1.442695
        %v2319 = vpow.pop %v2318
        %v2320 = vsel %vm2134, %v2317, 0.0
        %2321 = vadd.xlane.f32.xlu0 %v2320
        %v2322 = vpop.xlane.xlu0 %2321
        %v2323 = vsel %vm2138, %v2319, 0.0
        %2324 = vadd.xlane.f32.xlu0 %v2323
        %v2325 = vpop.xlane.xlu0 %2324
        %v2326 = vrcp.pop %v2322
        %v2327 = vrcp.pop %v2325
        %v2328 = vmul.f32 %v2317, %v2326
        %v2329 = vmul.f32 %v2319, %v2327
        %v2330 = vpack.c.bf16 %v2329, %v2328
        %2332 = vrot.lane.b32.xlu0 %v2005, 120
        %v2333 = vpop.permute.xlu0 %2332
        %v2335 = vsel %vm2134, %v2330, 0
        %v2338 = vand.u32 %v2333, %v2165
        %2340 = vmatprep.subr.bf16.mxu0 0
        %2341 = vmatpush1.bf16.msra.mxu0 %v2338
        %2342 = vmatprep.subr.bf16.mxu0 0
        %2343 = vmatpush1.bf16.msra.mxu0 0
        %2344 = vmatprep.subr.bf16.mxu0 0
        %2345 = vmatpush1.bf16.msra.mxu0 0
        %2346 = vmatprep.subr.bf16.mxu0 0
        %2347 = vmatpush1.bf16.msra.mxu0 0
        %2348 = vmatprep.subr.bf16.mxu0 0
        %2349 = vmatpush1.bf16.msra.mxu0 0
        %2350 = vmatprep.subr.bf16.mxu0 0
        %2351 = vmatpush1.bf16.msra.mxu0 0
        %2352 = vmatprep.subr.bf16.mxu0 0
        %2353 = vmatpush1.bf16.msra.mxu0 0
        %2354 = vmatprep.subr.bf16.mxu0 0
        %2355 = vmatpush1.bf16.msra.mxu0 0
        %2356 = vmatprep.subr.bf16.mxu0 0
        %2357 = vmatpush1.bf16.msra.mxu0 0
        %2358 = vmatprep.subr.bf16.mxu0 0
        %2359 = vmatpush1.bf16.msra.mxu0 0
        %2360 = vmatprep.subr.bf16.mxu0 0
        %2361 = vmatpush1.bf16.msra.mxu0 0
        %2362 = vmatprep.subr.bf16.mxu0 0
        %2363 = vmatpush1.bf16.msra.mxu0 0
        %2364 = vmatprep.subr.bf16.mxu0 0
        %2365 = vmatpush1.bf16.msra.mxu0 0
        %2366 = vmatprep.subr.bf16.mxu0 0
        %2367 = vmatpush1.bf16.msra.mxu0 0
        %2368 = vmatprep.subr.bf16.mxu0 0
        %2369 = vmatpush1.bf16.msra.mxu0 0
        %2370 = vmatprep.subr.bf16.mxu0 0
        %2371 = vmatpush1.bf16.msra.mxu0 0
        %2372 = vmatprep.mubr.bf16.mxu0 0
        %2373 = vmatmul.mubr.bf16.gmra.mrb[0].mxu0 %v2335
        %v2374 = vpop.f32.mrb[0].mxu0
        %v2375 = vadd.f32 0.0, %v2374
        %v2376 = vpop.f32.mrb[0].mxu0
        %v2377 = vpop.f32.mrb[0].mxu0
        %v2378 = vadd.f32 0.0, %v2377
        %v2379 = vpop.f32.mrb[0].mxu0
        %2380 = vdwg.mxu0
        %s2381 = sadd.s32 %s2006, 2
        %s2382 = sld [smem:[#allocation3 + %s2381]]
        %v2383 = vstv %s2382
        %v2384 = vmul.f32 %v2383, %v2010
        %v2385 = vmul.f32 %v2383, %v2011
        %s2386 = sadd.s32 %s2017, 2
        %s2387 = sld [smem:[#allocation3 + %s2386]]
        %v2388 = vstv %s2387
        %v2389 = vmul.f32 %v2388, %v2022
        %v2390 = vmul.f32 %v2388, %v2023
        %v2391 = vadd.f32 %v2384, %v2389
        %v2392 = vadd.f32 %v2385, %v2390
        %s2393 = sadd.s32 %s2030, 2
        %s2394 = sld [smem:[#allocation3 + %s2393]]
        %v2395 = vstv %s2394
        %v2396 = vmul.f32 %v2395, %v2035
        %v2397 = vmul.f32 %v2395, %v2036
        %v2398 = vadd.f32 %v2391, %v2396
        %v2399 = vadd.f32 %v2392, %v2397
        %s2400 = sadd.s32 %s2043, 2
        %s2401 = sld [smem:[#allocation3 + %s2400]]
        %v2402 = vstv %s2401
        %v2403 = vmul.f32 %v2402, %v2048
        %v2404 = vmul.f32 %v2402, %v2049
        %v2405 = vadd.f32 %v2398, %v2403
        %v2406 = vadd.f32 %v2399, %v2404
        %s2407 = sadd.s32 %s2056, 2
        %s2408 = sld [smem:[#allocation3 + %s2407]]
        %v2409 = vstv %s2408
        %v2410 = vmul.f32 %v2409, %v2061
        %v2411 = vmul.f32 %v2409, %v2062
        %v2412 = vadd.f32 %v2405, %v2410
        %v2413 = vadd.f32 %v2406, %v2411
        %s2414 = sadd.s32 %s2069, 2
        %s2415 = sld [smem:[#allocation3 + %s2414]]
        %v2416 = vstv %s2415
        %v2417 = vmul.f32 %v2416, %v2074
        %v2418 = vmul.f32 %v2416, %v2075
        %v2419 = vadd.f32 %v2412, %v2417
        %v2420 = vadd.f32 %v2413, %v2418
        %s2421 = sadd.s32 %s2081, 2
        %s2422 = sld [smem:[#allocation6 + %s2421]]
        %v2423 = vstv %s2422
        %v2424 = vadd.f32 %v2419, %v2423
        %v2425 = vadd.f32 %v2420, %v2423
        %2426 = vrot.lane.b32.xlu0 %v2003, 112
        %v2427 = vpop.permute.xlu0 %2426
        %2428 = vrot.lane.b32.xlu0 %v2004, 112
        %v2429 = vpop.permute.xlu0 %2428
        %v2431 = vsel %vm2086, %v2427, 0
        %v2434 = vsel %vm2086, %v2429, 0
        %2436 = vmatprep.subr.bf16.mxu0 0
        %2437 = vmatpush1.bf16.xpose.msra.mxu0 %v2434
        %2438 = vmatprep.subr.bf16.mxu0 0
        %2439 = vmatpush1.bf16.xpose.msra.mxu0 0
        %2440 = vmatprep.subr.bf16.mxu0 0
        %2441 = vmatpush1.bf16.xpose.msra.mxu0 0
        %2442 = vmatprep.subr.bf16.mxu0 0
        %2443 = vmatpush1.bf16.xpose.msra.mxu0 0
        %2444 = vmatprep.subr.bf16.mxu0 0
        %2445 = vmatpush1.bf16.xpose.msra.mxu0 0
        %2446 = vmatprep.subr.bf16.mxu0 0
        %2447 = vmatpush1.bf16.xpose.msra.mxu0 0
        %2448 = vmatprep.subr.bf16.mxu0 0
        %2449 = vmatpush1.bf16.xpose.msra.mxu0 0
        %2450 = vmatprep.subr.bf16.mxu0 0
        %2451 = vmatpush1.bf16.xpose.msra.mxu0 0
        %2452 = vmatprep.subr.bf16.mxu0 0
        %2453 = vmatpush1.bf16.xpose.msra.mxu0 0
        %2454 = vmatprep.subr.bf16.mxu0 0
        %2455 = vmatpush1.bf16.xpose.msra.mxu0 0
        %2456 = vmatprep.subr.bf16.mxu0 0
        %2457 = vmatpush1.bf16.xpose.msra.mxu0 0
        %2458 = vmatprep.subr.bf16.mxu0 0
        %2459 = vmatpush1.bf16.xpose.msra.mxu0 0
        %2460 = vmatprep.subr.bf16.mxu0 0
        %2461 = vmatpush1.bf16.xpose.msra.mxu0 0
        %2462 = vmatprep.subr.bf16.mxu0 0
        %2463 = vmatpush1.bf16.xpose.msra.mxu0 0
        %2464 = vmatprep.subr.bf16.mxu0 0
        %2465 = vmatpush1.bf16.xpose.msra.mxu0 0
        %2466 = vmatprep.subr.bf16.mxu0 0
        %2467 = vmatpush1.bf16.xpose.msra.mxu0 0
        %2468 = vmatprep.mubr.bf16.mxu0 0
        %2469 = vmatmul.mubr.bf16.gmra.mrb[0].mxu0 %v2431
        %v2470 = vpop.f32.mrb[0].mxu0
        %v2471 = vadd.f32 %v2424, %v2470
        %v2472 = vpop.f32.mrb[0].mxu0
        %v2473 = vpop.f32.mrb[0].mxu0
        %v2474 = vadd.f32 %v2425, %v2473
        %v2475 = vpop.f32.mrb[0].mxu0
        %2476 = vdwg.mxu0
        %v2477 = vsel %vm2134, %v2471, -inf
        %2478 = vmax.xlane.f32.xlu0 %v2477
        %v2479 = vpop.xlane.xlu0 %2478
        %v2480 = vsel %vm2138, %v2474, -inf
        %2481 = vmax.xlane.f32.xlu0 %v2480
        %v2482 = vpop.xlane.xlu0 %2481
        %v2483 = vsub.f32 %v2471, %v2479
        %v2484 = vsub.f32 %v2474, %v2482
        %v2485 = vmul.f32 %v2483, 1.442695
        %v2486 = vpow.pop %v2485
        %v2487 = vmul.f32 %v2484, 1.442695
        %v2488 = vpow.pop %v2487
        %v2489 = vsel %vm2134, %v2486, 0.0
        %2490 = vadd.xlane.f32.xlu0 %v2489
        %v2491 = vpop.xlane.xlu0 %2490
        %v2492 = vsel %vm2138, %v2488, 0.0
        %2493 = vadd.xlane.f32.xlu0 %v2492
        %v2494 = vpop.xlane.xlu0 %2493
        %v2495 = vrcp.pop %v2491
        %v2496 = vrcp.pop %v2494
        %v2497 = vmul.f32 %v2486, %v2495
        %v2498 = vmul.f32 %v2488, %v2496
        %v2499 = vpack.c.bf16 %v2498, %v2497
        %2500 = vrot.lane.b32.xlu0 %v2005, 112
        %v2501 = vpop.permute.xlu0 %2500
        %v2503 = vsel %vm2134, %v2499, 0
        %v2506 = vand.u32 %v2501, %v2165
        %2508 = vmatprep.subr.bf16.mxu0 0
        %2509 = vmatpush1.bf16.msra.mxu0 %v2506
        %2510 = vmatprep.subr.bf16.mxu0 0
        %2511 = vmatpush1.bf16.msra.mxu0 0
        %2512 = vmatprep.subr.bf16.mxu0 0
        %2513 = vmatpush1.bf16.msra.mxu0 0
        %2514 = vmatprep.subr.bf16.mxu0 0
        %2515 = vmatpush1.bf16.msra.mxu0 0
        %2516 = vmatprep.subr.bf16.mxu0 0
        %2517 = vmatpush1.bf16.msra.mxu0 0
        %2518 = vmatprep.subr.bf16.mxu0 0
        %2519 = vmatpush1.bf16.msra.mxu0 0
        %2520 = vmatprep.subr.bf16.mxu0 0
        %2521 = vmatpush1.bf16.msra.mxu0 0
        %2522 = vmatprep.subr.bf16.mxu0 0
        %2523 = vmatpush1.bf16.msra.mxu0 0
        %2524 = vmatprep.subr.bf16.mxu0 0
        %2525 = vmatpush1.bf16.msra.mxu0 0
        %2526 = vmatprep.subr.bf16.mxu0 0
        %2527 = vmatpush1.bf16.msra.mxu0 0
        %2528 = vmatprep.subr.bf16.mxu0 0
        %2529 = vmatpush1.bf16.msra.mxu0 0
        %2530 = vmatprep.subr.bf16.mxu0 0
        %2531 = vmatpush1.bf16.msra.mxu0 0
        %2532 = vmatprep.subr.bf16.mxu0 0
        %2533 = vmatpush1.bf16.msra.mxu0 0
        %2534 = vmatprep.subr.bf16.mxu0 0
        %2535 = vmatpush1.bf16.msra.mxu0 0
        %2536 = vmatprep.subr.bf16.mxu0 0
        %2537 = vmatpush1.bf16.msra.mxu0 0
        %2538 = vmatprep.subr.bf16.mxu0 0
        %2539 = vmatpush1.bf16.msra.mxu0 0
        %2540 = vmatprep.mubr.bf16.mxu0 0
        %2541 = vmatmul.mubr.bf16.gmra.mrb[0].mxu0 %v2503
        %v2542 = vpop.f32.mrb[0].mxu0
        %v2543 = vadd.f32 0.0, %v2542
        %v2544 = vpop.f32.mrb[0].mxu0
        %v2545 = vpop.f32.mrb[0].mxu0
        %v2546 = vadd.f32 0.0, %v2545
        %v2547 = vpop.f32.mrb[0].mxu0
        %2548 = vdwg.mxu0
        %s2549 = sadd.s32 %s2006, 3
        %s2550 = sld [smem:[#allocation3 + %s2549]]
        %v2551 = vstv %s2550
        %v2552 = vmul.f32 %v2551, %v2010
        %v2553 = vmul.f32 %v2551, %v2011
        %s2554 = sadd.s32 %s2017, 3
        %s2555 = sld [smem:[#allocation3 + %s2554]]
        %v2556 = vstv %s2555
        %v2557 = vmul.f32 %v2556, %v2022
        %v2558 = vmul.f32 %v2556, %v2023
        %v2559 = vadd.f32 %v2552, %v2557
        %v2560 = vadd.f32 %v2553, %v2558
        %s2561 = sadd.s32 %s2030, 3
        %s2562 = sld [smem:[#allocation3 + %s2561]]
        %v2563 = vstv %s2562
        %v2564 = vmul.f32 %v2563, %v2035
        %v2565 = vmul.f32 %v2563, %v2036
        %v2566 = vadd.f32 %v2559, %v2564
        %v2567 = vadd.f32 %v2560, %v2565
        %s2568 = sadd.s32 %s2043, 3
        %s2569 = sld [smem:[#allocation3 + %s2568]]
        %v2570 = vstv %s2569
        %v2571 = vmul.f32 %v2570, %v2048
        %v2572 = vmul.f32 %v2570, %v2049
        %v2573 = vadd.f32 %v2566, %v2571
        %v2574 = vadd.f32 %v2567, %v2572
        %s2575 = sadd.s32 %s2056, 3
        %s2576 = sld [smem:[#allocation3 + %s2575]]
        %v2577 = vstv %s2576
        %v2578 = vmul.f32 %v2577, %v2061
        %v2579 = vmul.f32 %v2577, %v2062
        %v2580 = vadd.f32 %v2573, %v2578
        %v2581 = vadd.f32 %v2574, %v2579
        %s2582 = sadd.s32 %s2069, 3
        %s2583 = sld [smem:[#allocation3 + %s2582]]
        %v2584 = vstv %s2583
        %v2585 = vmul.f32 %v2584, %v2074
        %v2586 = vmul.f32 %v2584, %v2075
        %v2587 = vadd.f32 %v2580, %v2585
        %v2588 = vadd.f32 %v2581, %v2586
        %s2589 = sadd.s32 %s2081, 3
        %s2590 = sld [smem:[#allocation6 + %s2589]]
        %v2591 = vstv %s2590
        %v2592 = vadd.f32 %v2587, %v2591
        %v2593 = vadd.f32 %v2588, %v2591
        %2594 = vrot.lane.b32.xlu0 %v2003, 104
        %v2595 = vpop.permute.xlu0 %2594
        %2596 = vrot.lane.b32.xlu0 %v2004, 104
        %v2597 = vpop.permute.xlu0 %2596
        %v2599 = vsel %vm2086, %v2595, 0
        %v2602 = vsel %vm2086, %v2597, 0
        %2604 = vmatprep.subr.bf16.mxu0 0
        %2605 = vmatpush1.bf16.xpose.msra.mxu0 %v2602
        %2606 = vmatprep.subr.bf16.mxu0 0
        %2607 = vmatpush1.bf16.xpose.msra.mxu0 0
        %2608 = vmatprep.subr.bf16.mxu0 0
        %2609 = vmatpush1.bf16.xpose.msra.mxu0 0
        %2610 = vmatprep.subr.bf16.mxu0 0
        %2611 = vmatpush1.bf16.xpose.msra.mxu0 0
        %2612 = vmatprep.subr.bf16.mxu0 0
        %2613 = vmatpush1.bf16.xpose.msra.mxu0 0
        %2614 = vmatprep.subr.bf16.mxu0 0
        %2615 = vmatpush1.bf16.xpose.msra.mxu0 0
        %2616 = vmatprep.subr.bf16.mxu0 0
        %2617 = vmatpush1.bf16.xpose.msra.mxu0 0
        %2618 = vmatprep.subr.bf16.mxu0 0
        %2619 = vmatpush1.bf16.xpose.msra.mxu0 0
        %2620 = vmatprep.subr.bf16.mxu0 0
        %2621 = vmatpush1.bf16.xpose.msra.mxu0 0
        %2622 = vmatprep.subr.bf16.mxu0 0
        %2623 = vmatpush1.bf16.xpose.msra.mxu0 0
        %2624 = vmatprep.subr.bf16.mxu0 0
        %2625 = vmatpush1.bf16.xpose.msra.mxu0 0
        %2626 = vmatprep.subr.bf16.mxu0 0
        %2627 = vmatpush1.bf16.xpose.msra.mxu0 0
        %2628 = vmatprep.subr.bf16.mxu0 0
        %2629 = vmatpush1.bf16.xpose.msra.mxu0 0
        %2630 = vmatprep.subr.bf16.mxu0 0
        %2631 = vmatpush1.bf16.xpose.msra.mxu0 0
        %2632 = vmatprep.subr.bf16.mxu0 0
        %2633 = vmatpush1.bf16.xpose.msra.mxu0 0
        %2634 = vmatprep.subr.bf16.mxu0 0
        %2635 = vmatpush1.bf16.xpose.msra.mxu0 0
        %2636 = vmatprep.mubr.bf16.mxu0 0
        %2637 = vmatmul.mubr.bf16.gmra.mrb[0].mxu0 %v2599
        %v2638 = vpop.f32.mrb[0].mxu0
        %v2639 = vadd.f32 %v2592, %v2638
        %v2640 = vpop.f32.mrb[0].mxu0
        %v2641 = vpop.f32.mrb[0].mxu0
        %v2642 = vadd.f32 %v2593, %v2641
        %v2643 = vpop.f32.mrb[0].mxu0
        %2644 = vdwg.mxu0
        %v2645 = vsel %vm2134, %v2639, -inf
        %2646 = vmax.xlane.f32.xlu0 %v2645
        %v2647 = vpop.xlane.xlu0 %2646
        %v2648 = vsel %vm2138, %v2642, -inf
        %2649 = vmax.xlane.f32.xlu0 %v2648
        %v2650 = vpop.xlane.xlu0 %2649
        %v2651 = vsub.f32 %v2639, %v2647
        %v2652 = vsub.f32 %v2642, %v2650
        %v2653 = vmul.f32 %v2651, 1.442695
        %v2654 = vpow.pop %v2653
        %v2655 = vmul.f32 %v2652, 1.442695
        %v2656 = vpow.pop %v2655
        %v2657 = vsel %vm2134, %v2654, 0.0
        %2658 = vadd.xlane.f32.xlu0 %v2657
        %v2659 = vpop.xlane.xlu0 %2658
        %v2660 = vsel %vm2138, %v2656, 0.0
        %2661 = vadd.xlane.f32.xlu0 %v2660
        %v2662 = vpop.xlane.xlu0 %2661
        %v2663 = vrcp.pop %v2659
        %v2664 = vrcp.pop %v2662
        %v2665 = vmul.f32 %v2654, %v2663
        %v2666 = vmul.f32 %v2656, %v2664
        %v2667 = vpack.c.bf16 %v2666, %v2665
        %2668 = vrot.lane.b32.xlu0 %v2005, 104
        %v2669 = vpop.permute.xlu0 %2668
        %v2671 = vsel %vm2134, %v2667, 0
        %v2674 = vand.u32 %v2669, %v2165
        %2676 = vmatprep.subr.bf16.mxu0 0
        %2677 = vmatpush1.bf16.msra.mxu0 %v2674
        %2678 = vmatprep.subr.bf16.mxu0 0
        %2679 = vmatpush1.bf16.msra.mxu0 0
        %2680 = vmatprep.subr.bf16.mxu0 0
        %2681 = vmatpush1.bf16.msra.mxu0 0
        %2682 = vmatprep.subr.bf16.mxu0 0
        %2683 = vmatpush1.bf16.msra.mxu0 0
        %2684 = vmatprep.subr.bf16.mxu0 0
        %2685 = vmatpush1.bf16.msra.mxu0 0
        %2686 = vmatprep.subr.bf16.mxu0 0
        %2687 = vmatpush1.bf16.msra.mxu0 0
        %2688 = vmatprep.subr.bf16.mxu0 0
        %2689 = vmatpush1.bf16.msra.mxu0 0
        %2690 = vmatprep.subr.bf16.mxu0 0
        %2691 = vmatpush1.bf16.msra.mxu0 0
        %2692 = vmatprep.subr.bf16.mxu0 0
        %2693 = vmatpush1.bf16.msra.mxu0 0
        %2694 = vmatprep.subr.bf16.mxu0 0
        %2695 = vmatpush1.bf16.msra.mxu0 0
        %2696 = vmatprep.subr.bf16.mxu0 0
        %2697 = vmatpush1.bf16.msra.mxu0 0
        %2698 = vmatprep.subr.bf16.mxu0 0
        %2699 = vmatpush1.bf16.msra.mxu0 0
        %2700 = vmatprep.subr.bf16.mxu0 0
        %2701 = vmatpush1.bf16.msra.mxu0 0
        %2702 = vmatprep.subr.bf16.mxu0 0
        %2703 = vmatpush1.bf16.msra.mxu0 0
        %2704 = vmatprep.subr.bf16.mxu0 0
        %2705 = vmatpush1.bf16.msra.mxu0 0
        %2706 = vmatprep.subr.bf16.mxu0 0
        %2707 = vmatpush1.bf16.msra.mxu0 0
        %2708 = vmatprep.mubr.bf16.mxu0 0
        %2709 = vmatmul.mubr.bf16.gmra.mrb[0].mxu0 %v2671
        %v2710 = vpop.f32.mrb[0].mxu0
        %v2711 = vadd.f32 0.0, %v2710
        %v2712 = vpop.f32.mrb[0].mxu0
        %v2713 = vpop.f32.mrb[0].mxu0
        %v2714 = vadd.f32 0.0, %v2713
        %v2715 = vpop.f32.mrb[0].mxu0
        %2716 = vdwg.mxu0
        %2719 = vrot.lane.b32.xlu0 %v2375, 8
        %v2720 = vpop.permute.xlu0 %2719
        %2721 = vrot.lane.b32.xlu0 %v2378, 8
        %v2722 = vpop.permute.xlu0 %2721
        %2727 = vrot.lane.b32.xlu0 %v2543, 16
        %v2728 = vpop.permute.xlu0 %2727
        %2729 = vrot.lane.b32.xlu0 %v2546, 16
        %v2730 = vpop.permute.xlu0 %2729
        %2735 = vrot.lane.b32.xlu0 %v2711, 24
        %v2736 = vpop.permute.xlu0 %2735
        %2737 = vrot.lane.b32.xlu0 %v2714, 24
        %v2738 = vpop.permute.xlu0 %2737
        %v2741 = vsel %vm2086, %v2204, %v2720
        %v2742 = vsel %vm2086, %v2207, %v2722
        %vm2743 = vcmask 130048
        %v2744 = vsel %vm2743, %v2741, %v2728
        %v2745 = vsel %vm2743, %v2742, %v2730
        %vm2746 = vcmask 195584
        %v2747 = vsel %vm2746, %v2744, %v2736
        %v2748 = vsel %vm2746, %v2745, %v2738
        %v2749 = vpack.c.bf16 %v2748, %v2747
        %v2751 = vlaneseq
        %v2752 = vshrl.u32 %v2751, 7
        %v2753 = vsub.s32 0, %v2752
        %v2754 = vrot.slane %v1820, %v2753
        %v2760 = vunpack.c.l.b16 %v1816
        %v2761 = vunpack.c.l.b16 %v1817
        %v2762 = vunpack.c.l.b16 %v1818
        %v2763 = vunpack.c.l.b16 %v1819
        %v2764 = vpack.c.b16 %v2761, %v2760
        %v2765 = vpack.c.b16 %v2763, %v2762
        %v2769 = vsel %vm1755, %v2749, 0
        %2771 = vmatprep.subr.bf16.mxu0 0
        %2772 = vmatpush1.bf16.msra.mxu0 %v2764
        %2773 = vmatprep.subr.bf16.mxu0 0
        %2774 = vmatpush1.bf16.msra.mxu0 %v2765
        %2775 = vmatprep.subr.bf16.mxu0 0
        %2776 = vmatpush1.bf16.msra.mxu0 0
        %2777 = vmatprep.subr.bf16.mxu0 0
        %2778 = vmatpush1.bf16.msra.mxu0 0
        %2779 = vmatprep.subr.bf16.mxu0 0
        %2780 = vmatpush1.bf16.msra.mxu0 0
        %2781 = vmatprep.subr.bf16.mxu0 0
        %2782 = vmatpush1.bf16.msra.mxu0 0
        %2783 = vmatprep.subr.bf16.mxu0 0
        %2784 = vmatpush1.bf16.msra.mxu0 0
        %2785 = vmatprep.subr.bf16.mxu0 0
        %2786 = vmatpush1.bf16.msra.mxu0 0
        %2787 = vmatprep.subr.bf16.mxu0 0
        %2788 = vmatpush1.bf16.msra.mxu0 0
        %2789 = vmatprep.subr.bf16.mxu0 0
        %2790 = vmatpush1.bf16.msra.mxu0 0
        %2791 = vmatprep.subr.bf16.mxu0 0
        %2792 = vmatpush1.bf16.msra.mxu0 0
        %2793 = vmatprep.subr.bf16.mxu0 0
        %2794 = vmatpush1.bf16.msra.mxu0 0
        %2795 = vmatprep.subr.bf16.mxu0 0
        %2796 = vmatpush1.bf16.msra.mxu0 0
        %2797 = vmatprep.subr.bf16.mxu0 0
        %2798 = vmatpush1.bf16.msra.mxu0 0
        %2799 = vmatprep.subr.bf16.mxu0 0
        %2800 = vmatpush1.bf16.msra.mxu0 0
        %2801 = vmatprep.subr.bf16.mxu0 0
        %2802 = vmatpush1.bf16.msra.mxu0 0
        %2803 = vmatprep.mubr.bf16.mxu0 0
        %2804 = vmatmul.mubr.bf16.gmra.mrb[0].mxu0 %v2769
        %v2805 = vpop.f32.mrb[0].mxu0
        %v2806 = vadd.f32 %v2754, %v2805
        %v2807 = vpop.f32.mrb[0].mxu0
        %v2808 = vpop.f32.mrb[0].mxu0
        %v2809 = vadd.f32 %v2754, %v2808
        %v2810 = vpop.f32.mrb[0].mxu0
        %2811 = vdwg.mxu0
        %v2812 = vadd.f32 %v1751, %v2806
        %v2813 = vadd.f32 %v1752, %v2809
        %v2814 = vpack.c.bf16 %v2809, %v2806
        %v2815 = vld [vmem:[%s5] sm:$0xf]
        %v2816 = vld [vmem:[%s1619] sm:$0xf]
        %v2817 = vld [vmem:[%s1619 + $0x4] sm:$0xf]
        %v2818 = vld [vmem:[%s1619 + $0x8] sm:$0xf]
        %v2819 = vld [vmem:[%s1619 + $0xc] sm:$0xf]
        %v2820 = vld [vmem:[%s1622] sm:$0x1]
        %v2821 = vld [vmem:[%s1627] sm:$0xf]
        %v2822 = vld [vmem:[%s1627 + $0x4] sm:$0xf]
        %v2823 = vld [vmem:[%s1627 + $0x8] sm:$0xf]
        %v2824 = vld [vmem:[%s1627 + $0xc] sm:$0xf]
        %v2825 = vld [vmem:[%s1630] sm:$0x1]
        %v2826 = vld [vmem:[%s1635] sm:$0xf]
        %v2827 = vld [vmem:[%s1635 + $0x4] sm:$0xf]
        %v2828 = vld [vmem:[%s1635 + $0x8] sm:$0xf]
        %v2829 = vld [vmem:[%s1635 + $0xc] sm:$0xf]
        %v2830 = vld [vmem:[%s1638] sm:$0x1]
        %v2831 = vld [vmem:[%s1643] sm:$0xf]
        %v2832 = vld [vmem:[%s1643 + $0x4] sm:$0xf]
        %v2833 = vld [vmem:[%s1643 + $0x8] sm:$0xf]
        %v2834 = vld [vmem:[%s1643 + $0xc] sm:$0xf]
        %v2835 = vld [vmem:[%s1646] sm:$0x1]
        %v2837 = vlaneseq
        %v2838 = vshrl.u32 %v2837, 7
        %v2839 = vsub.s32 0, %v2838
        %v2840 = vrot.slane %v2820, %v2839
        %v2846 = vunpack.c.l.b16 %v2816
        %v2847 = vunpack.c.l.b16 %v2817
        %v2848 = vunpack.c.l.b16 %v2818
        %v2849 = vunpack.c.l.b16 %v2819
        %v2850 = vpack.c.b16 %v2847, %v2846
        %v2851 = vpack.c.b16 %v2849, %v2848
        %v2855 = vsel %vm1755, %v2814, 0
        %2857 = vmatprep.subr.bf16.mxu0 0
        %2858 = vmatpush1.bf16.msra.mxu0 %v2850
        %2859 = vmatprep.subr.bf16.mxu0 0
        %2860 = vmatpush1.bf16.msra.mxu0 %v2851
        %2861 = vmatprep.subr.bf16.mxu0 0
        %2862 = vmatpush1.bf16.msra.mxu0 0
        %2863 = vmatprep.subr.bf16.mxu0 0
        %2864 = vmatpush1.bf16.msra.mxu0 0
        %2865 = vmatprep.subr.bf16.mxu0 0
        %2866 = vmatpush1.bf16.msra.mxu0 0
        %2867 = vmatprep.subr.bf16.mxu0 0
        %2868 = vmatpush1.bf16.msra.mxu0 0
        %2869 = vmatprep.subr.bf16.mxu0 0
        %2870 = vmatpush1.bf16.msra.mxu0 0
        %2871 = vmatprep.subr.bf16.mxu0 0
        %2872 = vmatpush1.bf16.msra.mxu0 0
        %2873 = vmatprep.subr.bf16.mxu0 0
        %2874 = vmatpush1.bf16.msra.mxu0 0
        %2875 = vmatprep.subr.bf16.mxu0 0
        %2876 = vmatpush1.bf16.msra.mxu0 0
        %2877 = vmatprep.subr.bf16.mxu0 0
        %2878 = vmatpush1.bf16.msra.mxu0 0
        %2879 = vmatprep.subr.bf16.mxu0 0
        %2880 = vmatpush1.bf16.msra.mxu0 0
        %2881 = vmatprep.subr.bf16.mxu0 0
        %2882 = vmatpush1.bf16.msra.mxu0 0
        %2883 = vmatprep.subr.bf16.mxu0 0
        %2884 = vmatpush1.bf16.msra.mxu0 0
        %2885 = vmatprep.subr.bf16.mxu0 0
        %2886 = vmatpush1.bf16.msra.mxu0 0
        %2887 = vmatprep.subr.bf16.mxu0 0
        %2888 = vmatpush1.bf16.msra.mxu0 0
        %2889 = vmatprep.mubr.bf16.mxu0 0
        %2890 = vmatmul.mubr.bf16.gmra.mrb[0].mxu0 %v2855
        %v2891 = vpop.f32.mrb[0].mxu0
        %v2892 = vadd.f32 %v2840, %v2891
        %v2893 = vpop.f32.mrb[0].mxu0
        %v2894 = vpop.f32.mrb[0].mxu0
        %v2895 = vadd.f32 %v2840, %v2894
        %v2896 = vpop.f32.mrb[0].mxu0
        %2897 = vdwg.mxu0
        %v2899 = vlaneseq
        %v2900 = vshrl.u32 %v2899, 7
        %v2901 = vsub.s32 0, %v2900
        %v2902 = vrot.slane %v2825, %v2901
        %v2908 = vunpack.c.l.b16 %v2821
        %v2909 = vunpack.c.l.b16 %v2822
        %v2910 = vunpack.c.l.b16 %v2823
        %v2911 = vunpack.c.l.b16 %v2824
        %v2912 = vpack.c.b16 %v2909, %v2908
        %v2913 = vpack.c.b16 %v2911, %v2910
        %v2917 = vsel %vm1755, %v2815, 0
        %2919 = vmatprep.subr.bf16.mxu0 0
        %2920 = vmatpush1.bf16.msra.mxu0 %v2912
        %2921 = vmatprep.subr.bf16.mxu0 0
        %2922 = vmatpush1.bf16.msra.mxu0 %v2913
        %2923 = vmatprep.subr.bf16.mxu0 0
        %2924 = vmatpush1.bf16.msra.mxu0 0
        %2925 = vmatprep.subr.bf16.mxu0 0
        %2926 = vmatpush1.bf16.msra.mxu0 0
        %2927 = vmatprep.subr.bf16.mxu0 0
        %2928 = vmatpush1.bf16.msra.mxu0 0
        %2929 = vmatprep.subr.bf16.mxu0 0
        %2930 = vmatpush1.bf16.msra.mxu0 0
        %2931 = vmatprep.subr.bf16.mxu0 0
        %2932 = vmatpush1.bf16.msra.mxu0 0
        %2933 = vmatprep.subr.bf16.mxu0 0
        %2934 = vmatpush1.bf16.msra.mxu0 0
        %2935 = vmatprep.subr.bf16.mxu0 0
        %2936 = vmatpush1.bf16.msra.mxu0 0
        %2937 = vmatprep.subr.bf16.mxu0 0
        %2938 = vmatpush1.bf16.msra.mxu0 0
        %2939 = vmatprep.subr.bf16.mxu0 0
        %2940 = vmatpush1.bf16.msra.mxu0 0
        %2941 = vmatprep.subr.bf16.mxu0 0
        %2942 = vmatpush1.bf16.msra.mxu0 0
        %2943 = vmatprep.subr.bf16.mxu0 0
        %2944 = vmatpush1.bf16.msra.mxu0 0
        %2945 = vmatprep.subr.bf16.mxu0 0
        %2946 = vmatpush1.bf16.msra.mxu0 0
        %2947 = vmatprep.subr.bf16.mxu0 0
        %2948 = vmatpush1.bf16.msra.mxu0 0
        %2949 = vmatprep.subr.bf16.mxu0 0
        %2950 = vmatpush1.bf16.msra.mxu0 0
        %2951 = vmatprep.mubr.bf16.mxu0 0
        %2952 = vmatmul.mubr.bf16.gmra.mrb[0].mxu0 %v2917
        %v2953 = vpop.f32.mrb[0].mxu0
        %v2954 = vadd.f32 %v2902, %v2953
        %v2955 = vpop.f32.mrb[0].mxu0
        %v2956 = vpop.f32.mrb[0].mxu0
        %v2957 = vpop.f32.mrb[0].mxu0
        %2958 = vdwg.mxu0
        %v2960 = vlaneseq
        %v2961 = vshrl.u32 %v2960, 7
        %v2962 = vsub.s32 0, %v2961
        %v2963 = vrot.slane %v2830, %v2962
        %v2969 = vunpack.c.l.b16 %v2826
        %v2970 = vunpack.c.l.b16 %v2827
        %v2971 = vunpack.c.l.b16 %v2828
        %v2972 = vunpack.c.l.b16 %v2829
        %v2973 = vpack.c.b16 %v2970, %v2969
        %v2974 = vpack.c.b16 %v2972, %v2971
        %2977 = vmatprep.subr.bf16.mxu0 0
        %2978 = vmatpush1.bf16.msra.mxu0 %v2973
        %2979 = vmatprep.subr.bf16.mxu0 0
        %2980 = vmatpush1.bf16.msra.mxu0 %v2974
        %2981 = vmatprep.subr.bf16.mxu0 0
        %2982 = vmatpush1.bf16.msra.mxu0 0
        %2983 = vmatprep.subr.bf16.mxu0 0
        %2984 = vmatpush1.bf16.msra.mxu0 0
        %2985 = vmatprep.subr.bf16.mxu0 0
        %2986 = vmatpush1.bf16.msra.mxu0 0
        %2987 = vmatprep.subr.bf16.mxu0 0
        %2988 = vmatpush1.bf16.msra.mxu0 0
        %2989 = vmatprep.subr.bf16.mxu0 0
        %2990 = vmatpush1.bf16.msra.mxu0 0
        %2991 = vmatprep.subr.bf16.mxu0 0
        %2992 = vmatpush1.bf16.msra.mxu0 0
        %2993 = vmatprep.subr.bf16.mxu0 0
        %2994 = vmatpush1.bf16.msra.mxu0 0
        %2995 = vmatprep.subr.bf16.mxu0 0
        %2996 = vmatpush1.bf16.msra.mxu0 0
        %2997 = vmatprep.subr.bf16.mxu0 0
        %2998 = vmatpush1.bf16.msra.mxu0 0
        %2999 = vmatprep.subr.bf16.mxu0 0
        %3000 = vmatpush1.bf16.msra.mxu0 0
        %3001 = vmatprep.subr.bf16.mxu0 0
        %3002 = vmatpush1.bf16.msra.mxu0 0
        %3003 = vmatprep.subr.bf16.mxu0 0
        %3004 = vmatpush1.bf16.msra.mxu0 0
        %3005 = vmatprep.subr.bf16.mxu0 0
        %3006 = vmatpush1.bf16.msra.mxu0 0
        %3007 = vmatprep.subr.bf16.mxu0 0
        %3008 = vmatpush1.bf16.msra.mxu0 0
        %3009 = vmatprep.mubr.bf16.mxu0 0
        %3010 = vmatmul.mubr.bf16.gmra.mrb[0].mxu0 %v2917
        %v3011 = vpop.f32.mrb[0].mxu0
        %v3012 = vadd.f32 %v2963, %v3011
        %v3013 = vpop.f32.mrb[0].mxu0
        %v3014 = vpop.f32.mrb[0].mxu0
        %v3015 = vpop.f32.mrb[0].mxu0
        %3016 = vdwg.mxu0
        %v3017 = vmul.f32 %v2892, 0.35355338
        %v3018 = vmul.f32 %v2895, 0.35355338
        %v3019 = vpack.c.bf16 %v3018, %v3017
        %v3020 = vpack.c.bf16 %v2954, %v2954
        %v3021 = vpack.c.bf16 %v3012, %v3012
        %v3023 = vsel %vm2086, %v3019, 0
        %v3026 = vsel %vm2086, %v3020, 0
        %3028 = vmatprep.subr.bf16.mxu0 0
        %3029 = vmatpush1.bf16.xpose.msra.mxu0 %v3026
        %3030 = vmatprep.subr.bf16.mxu0 0
        %3031 = vmatpush1.bf16.xpose.msra.mxu0 0
        %3032 = vmatprep.subr.bf16.mxu0 0
        %3033 = vmatpush1.bf16.xpose.msra.mxu0 0
        %3034 = vmatprep.subr.bf16.mxu0 0
        %3035 = vmatpush1.bf16.xpose.msra.mxu0 0
        %3036 = vmatprep.subr.bf16.mxu0 0
        %3037 = vmatpush1.bf16.xpose.msra.mxu0 0
        %3038 = vmatprep.subr.bf16.mxu0 0
        %3039 = vmatpush1.bf16.xpose.msra.mxu0 0
        %3040 = vmatprep.subr.bf16.mxu0 0
        %3041 = vmatpush1.bf16.xpose.msra.mxu0 0
        %3042 = vmatprep.subr.bf16.mxu0 0
        %3043 = vmatpush1.bf16.xpose.msra.mxu0 0
        %3044 = vmatprep.subr.bf16.mxu0 0
        %3045 = vmatpush1.bf16.xpose.msra.mxu0 0
        %3046 = vmatprep.subr.bf16.mxu0 0
        %3047 = vmatpush1.bf16.xpose.msra.mxu0 0
        %3048 = vmatprep.subr.bf16.mxu0 0
        %3049 = vmatpush1.bf16.xpose.msra.mxu0 0
        %3050 = vmatprep.subr.bf16.mxu0 0
        %3051 = vmatpush1.bf16.xpose.msra.mxu0 0
        %3052 = vmatprep.subr.bf16.mxu0 0
        %3053 = vmatpush1.bf16.xpose.msra.mxu0 0
        %3054 = vmatprep.subr.bf16.mxu0 0
        %3055 = vmatpush1.bf16.xpose.msra.mxu0 0
        %3056 = vmatprep.subr.bf16.mxu0 0
        %3057 = vmatpush1.bf16.xpose.msra.mxu0 0
        %3058 = vmatprep.subr.bf16.mxu0 0
        %3059 = vmatpush1.bf16.xpose.msra.mxu0 0
        %3060 = vmatprep.mubr.bf16.mxu0 0
        %3061 = vmatmul.mubr.bf16.gmra.mrb[0].mxu0 %v3023
        %v3062 = vpop.f32.mrb[0].mxu0
        %v3063 = vadd.f32 0.0, %v3062
        %v3064 = vpop.f32.mrb[0].mxu0
        %v3065 = vpop.f32.mrb[0].mxu0
        %v3066 = vadd.f32 0.0, %v3065
        %v3067 = vpop.f32.mrb[0].mxu0
        %3068 = vdwg.mxu0
        %v3069 = vsel %vm2086, %v3063, -inf
        %3070 = vmax.xlane.f32.xlu0 %v3069
        %v3071 = vpop.xlane.xlu0 %3070
        %vm3072 = vcmask 57344
        %v3073 = vsel %vm3072, %v3066, -inf
        %3074 = vmax.xlane.f32.xlu0 %v3073
        %v3075 = vpop.xlane.xlu0 %3074
        %v3076 = vsub.f32 %v3063, %v3071
        %v3077 = vsub.f32 %v3066, %v3075
        %v3078 = vmul.f32 %v3076, 1.442695
        %v3079 = vpow.pop %v3078
        %v3080 = vmul.f32 %v3077, 1.442695
        %v3081 = vpow.pop %v3080
        %v3082 = vsel %vm2086, %v3079, 0.0
        %3083 = vadd.xlane.f32.xlu0 %v3082
        %v3084 = vpop.xlane.xlu0 %3083
        %v3085 = vsel %vm3072, %v3081, 0.0
        %3086 = vadd.xlane.f32.xlu0 %v3085
        %v3087 = vpop.xlane.xlu0 %3086
        %v3088 = vrcp.pop %v3084
        %v3089 = vrcp.pop %v3087
        %v3090 = vmul.f32 %v3079, %v3088
        %v3091 = vmul.f32 %v3081, %v3089
        %v3092 = vpack.c.bf16 %v3091, %v3090
        %v3094 = vsel %vm2086, %v3092, 0
        %v3097 = vsel %vm2162, %v3021, 0
        %3099 = vmatprep.subr.bf16.mxu0 0
        %3100 = vmatpush1.bf16.msra.mxu0 %v3097
        %3101 = vmatprep.subr.bf16.mxu0 0
        %3102 = vmatpush1.bf16.msra.mxu0 0
        %3103 = vmatprep.subr.bf16.mxu0 0
        %3104 = vmatpush1.bf16.msra.mxu0 0
        %3105 = vmatprep.subr.bf16.mxu0 0
        %3106 = vmatpush1.bf16.msra.mxu0 0
        %3107 = vmatprep.subr.bf16.mxu0 0
        %3108 = vmatpush1.bf16.msra.mxu0 0
        %3109 = vmatprep.subr.bf16.mxu0 0
        %3110 = vmatpush1.bf16.msra.mxu0 0
        %3111 = vmatprep.subr.bf16.mxu0 0
        %3112 = vmatpush1.bf16.msra.mxu0 0
        %3113 = vmatprep.subr.bf16.mxu0 0
        %3114 = vmatpush1.bf16.msra.mxu0 0
        %3115 = vmatprep.subr.bf16.mxu0 0
        %3116 = vmatpush1.bf16.msra.mxu0 0
        %3117 = vmatprep.subr.bf16.mxu0 0
        %3118 = vmatpush1.bf16.msra.mxu0 0
        %3119 = vmatprep.subr.bf16.mxu0 0
        %3120 = vmatpush1.bf16.msra.mxu0 0
        %3121 = vmatprep.subr.bf16.mxu0 0
        %3122 = vmatpush1.bf16.msra.mxu0 0
        %3123 = vmatprep.subr.bf16.mxu0 0
        %3124 = vmatpush1.bf16.msra.mxu0 0
        %3125 = vmatprep.subr.bf16.mxu0 0
        %3126 = vmatpush1.bf16.msra.mxu0 0
        %3127 = vmatprep.subr.bf16.mxu0 0
        %3128 = vmatpush1.bf16.msra.mxu0 0
        %3129 = vmatprep.subr.bf16.mxu0 0
        %3130 = vmatpush1.bf16.msra.mxu0 0
        %3131 = vmatprep.mubr.bf16.mxu0 0
        %3132 = vmatmul.mubr.bf16.gmra.mrb[0].mxu0 %v3094
        %v3133 = vpop.f32.mrb[0].mxu0
        %v3134 = vadd.f32 0.0, %v3133
        %v3135 = vpop.f32.mrb[0].mxu0
        %v3136 = vpop.f32.mrb[0].mxu0
        %v3137 = vadd.f32 0.0, %v3136
        %v3138 = vpop.f32.mrb[0].mxu0
        %3139 = vdwg.mxu0
        %3141 = vrot.lane.b32.xlu0 %v3019, 120
        %v3142 = vpop.permute.xlu0 %3141
        %3144 = vrot.lane.b32.xlu0 %v3020, 120
        %v3145 = vpop.permute.xlu0 %3144
        %v3147 = vsel %vm2086, %v3142, 0
        %v3150 = vsel %vm2086, %v3145, 0
        %3152 = vmatprep.subr.bf16.mxu0 0
        %3153 = vmatpush1.bf16.xpose.msra.mxu0 %v3150
        %3154 = vmatprep.subr.bf16.mxu0 0
        %3155 = vmatpush1.bf16.xpose.msra.mxu0 0
        %3156 = vmatprep.subr.bf16.mxu0 0
        %3157 = vmatpush1.bf16.xpose.msra.mxu0 0
        %3158 = vmatprep.subr.bf16.mxu0 0
        %3159 = vmatpush1.bf16.xpose.msra.mxu0 0
        %3160 = vmatprep.subr.bf16.mxu0 0
        %3161 = vmatpush1.bf16.xpose.msra.mxu0 0
        %3162 = vmatprep.subr.bf16.mxu0 0
        %3163 = vmatpush1.bf16.xpose.msra.mxu0 0
        %3164 = vmatprep.subr.bf16.mxu0 0
        %3165 = vmatpush1.bf16.xpose.msra.mxu0 0
        %3166 = vmatprep.subr.bf16.mxu0 0
        %3167 = vmatpush1.bf16.xpose.msra.mxu0 0
        %3168 = vmatprep.subr.bf16.mxu0 0
        %3169 = vmatpush1.bf16.xpose.msra.mxu0 0
        %3170 = vmatprep.subr.bf16.mxu0 0
        %3171 = vmatpush1.bf16.xpose.msra.mxu0 0
        %3172 = vmatprep.subr.bf16.mxu0 0
        %3173 = vmatpush1.bf16.xpose.msra.mxu0 0
        %3174 = vmatprep.subr.bf16.mxu0 0
        %3175 = vmatpush1.bf16.xpose.msra.mxu0 0
        %3176 = vmatprep.subr.bf16.mxu0 0
        %3177 = vmatpush1.bf16.xpose.msra.mxu0 0
        %3178 = vmatprep.subr.bf16.mxu0 0
        %3179 = vmatpush1.bf16.xpose.msra.mxu0 0
        %3180 = vmatprep.subr.bf16.mxu0 0
        %3181 = vmatpush1.bf16.xpose.msra.mxu0 0
        %3182 = vmatprep.subr.bf16.mxu0 0
        %3183 = vmatpush1.bf16.xpose.msra.mxu0 0
        %3184 = vmatprep.mubr.bf16.mxu0 0
        %3185 = vmatmul.mubr.bf16.gmra.mrb[0].mxu0 %v3147
        %v3186 = vpop.f32.mrb[0].mxu0
        %v3187 = vadd.f32 0.0, %v3186
        %v3188 = vpop.f32.mrb[0].mxu0
        %v3189 = vpop.f32.mrb[0].mxu0
        %v3190 = vadd.f32 0.0, %v3189
        %v3191 = vpop.f32.mrb[0].mxu0
        %3192 = vdwg.mxu0
        %v3193 = vsel %vm2086, %v3187, -inf
        %3194 = vmax.xlane.f32.xlu0 %v3193
        %v3195 = vpop.xlane.xlu0 %3194
        %v3196 = vsel %vm3072, %v3190, -inf
        %3197 = vmax.xlane.f32.xlu0 %v3196
        %v3198 = vpop.xlane.xlu0 %3197
        %v3199 = vsub.f32 %v3187, %v3195
        %v3200 = vsub.f32 %v3190, %v3198
        %v3201 = vmul.f32 %v3199, 1.442695
        %v3202 = vpow.pop %v3201
        %v3203 = vmul.f32 %v3200, 1.442695
        %v3204 = vpow.pop %v3203
        %v3205 = vsel %vm2086, %v3202, 0.0
        %3206 = vadd.xlane.f32.xlu0 %v3205
        %v3207 = vpop.xlane.xlu0 %3206
        %v3208 = vsel %vm3072, %v3204, 0.0
        %3209 = vadd.xlane.f32.xlu0 %v3208
        %v3210 = vpop.xlane.xlu0 %3209
        %v3211 = vrcp.pop %v3207
        %v3212 = vrcp.pop %v3210
        %v3213 = vmul.f32 %v3202, %v3211
        %v3214 = vmul.f32 %v3204, %v3212
        %v3215 = vpack.c.bf16 %v3214, %v3213
        %3217 = vrot.lane.b32.xlu0 %v3021, 120
        %v3218 = vpop.permute.xlu0 %3217
        %v3220 = vsel %vm2086, %v3215, 0
        %v3223 = vsel %vm2162, %v3218, 0
        %3225 = vmatprep.subr.bf16.mxu0 0
        %3226 = vmatpush1.bf16.msra.mxu0 %v3223
        %3227 = vmatprep.subr.bf16.mxu0 0
        %3228 = vmatpush1.bf16.msra.mxu0 0
        %3229 = vmatprep.subr.bf16.mxu0 0
        %3230 = vmatpush1.bf16.msra.mxu0 0
        %3231 = vmatprep.subr.bf16.mxu0 0
        %3232 = vmatpush1.bf16.msra.mxu0 0
        %3233 = vmatprep.subr.bf16.mxu0 0
        %3234 = vmatpush1.bf16.msra.mxu0 0
        %3235 = vmatprep.subr.bf16.mxu0 0
        %3236 = vmatpush1.bf16.msra.mxu0 0
        %3237 = vmatprep.subr.bf16.mxu0 0
        %3238 = vmatpush1.bf16.msra.mxu0 0
        %3239 = vmatprep.subr.bf16.mxu0 0
        %3240 = vmatpush1.bf16.msra.mxu0 0
        %3241 = vmatprep.subr.bf16.mxu0 0
        %3242 = vmatpush1.bf16.msra.mxu0 0
        %3243 = vmatprep.subr.bf16.mxu0 0
        %3244 = vmatpush1.bf16.msra.mxu0 0
        %3245 = vmatprep.subr.bf16.mxu0 0
        %3246 = vmatpush1.bf16.msra.mxu0 0
        %3247 = vmatprep.subr.bf16.mxu0 0
        %3248 = vmatpush1.bf16.msra.mxu0 0
        %3249 = vmatprep.subr.bf16.mxu0 0
        %3250 = vmatpush1.bf16.msra.mxu0 0
        %3251 = vmatprep.subr.bf16.mxu0 0
        %3252 = vmatpush1.bf16.msra.mxu0 0
        %3253 = vmatprep.subr.bf16.mxu0 0
        %3254 = vmatpush1.bf16.msra.mxu0 0
        %3255 = vmatprep.subr.bf16.mxu0 0
        %3256 = vmatpush1.bf16.msra.mxu0 0
        %3257 = vmatprep.mubr.bf16.mxu0 0
        %3258 = vmatmul.mubr.bf16.gmra.mrb[0].mxu0 %v3220
        %v3259 = vpop.f32.mrb[0].mxu0
        %v3260 = vadd.f32 0.0, %v3259
        %v3261 = vpop.f32.mrb[0].mxu0
        %v3262 = vpop.f32.mrb[0].mxu0
        %v3263 = vadd.f32 0.0, %v3262
        %v3264 = vpop.f32.mrb[0].mxu0
        %3265 = vdwg.mxu0
        %3266 = vrot.lane.b32.xlu0 %v3019, 112
        %v3267 = vpop.permute.xlu0 %3266
        %3268 = vrot.lane.b32.xlu0 %v3020, 112
        %v3269 = vpop.permute.xlu0 %3268
        %v3271 = vsel %vm2086, %v3267, 0
        %v3274 = vsel %vm2086, %v3269, 0
        %3276 = vmatprep.subr.bf16.mxu0 0
        %3277 = vmatpush1.bf16.xpose.msra.mxu0 %v3274
        %3278 = vmatprep.subr.bf16.mxu0 0
        %3279 = vmatpush1.bf16.xpose.msra.mxu0 0
        %3280 = vmatprep.subr.bf16.mxu0 0
        %3281 = vmatpush1.bf16.xpose.msra.mxu0 0
        %3282 = vmatprep.subr.bf16.mxu0 0
        %3283 = vmatpush1.bf16.xpose.msra.mxu0 0
        %3284 = vmatprep.subr.bf16.mxu0 0
        %3285 = vmatpush1.bf16.xpose.msra.mxu0 0
        %3286 = vmatprep.subr.bf16.mxu0 0
        %3287 = vmatpush1.bf16.xpose.msra.mxu0 0
        %3288 = vmatprep.subr.bf16.mxu0 0
        %3289 = vmatpush1.bf16.xpose.msra.mxu0 0
        %3290 = vmatprep.subr.bf16.mxu0 0
        %3291 = vmatpush1.bf16.xpose.msra.mxu0 0
        %3292 = vmatprep.subr.bf16.mxu0 0
        %3293 = vmatpush1.bf16.xpose.msra.mxu0 0
        %3294 = vmatprep.subr.bf16.mxu0 0
        %3295 = vmatpush1.bf16.xpose.msra.mxu0 0
        %3296 = vmatprep.subr.bf16.mxu0 0
        %3297 = vmatpush1.bf16.xpose.msra.mxu0 0
        %3298 = vmatprep.subr.bf16.mxu0 0
        %3299 = vmatpush1.bf16.xpose.msra.mxu0 0
        %3300 = vmatprep.subr.bf16.mxu0 0
        %3301 = vmatpush1.bf16.xpose.msra.mxu0 0
        %3302 = vmatprep.subr.bf16.mxu0 0
        %3303 = vmatpush1.bf16.xpose.msra.mxu0 0
        %3304 = vmatprep.subr.bf16.mxu0 0
        %3305 = vmatpush1.bf16.xpose.msra.mxu0 0
        %3306 = vmatprep.subr.bf16.mxu0 0
        %3307 = vmatpush1.bf16.xpose.msra.mxu0 0
        %3308 = vmatprep.mubr.bf16.mxu0 0
        %3309 = vmatmul.mubr.bf16.gmra.mrb[0].mxu0 %v3271
        %v3310 = vpop.f32.mrb[0].mxu0
        %v3311 = vadd.f32 0.0, %v3310
        %v3312 = vpop.f32.mrb[0].mxu0
        %v3313 = vpop.f32.mrb[0].mxu0
        %v3314 = vadd.f32 0.0, %v3313
        %v3315 = vpop.f32.mrb[0].mxu0
        %3316 = vdwg.mxu0
        %v3317 = vsel %vm2086, %v3311, -inf
        %3318 = vmax.xlane.f32.xlu0 %v3317
        %v3319 = vpop.xlane.xlu0 %3318
        %v3320 = vsel %vm3072, %v3314, -inf
        %3321 = vmax.xlane.f32.xlu0 %v3320
        %v3322 = vpop.xlane.xlu0 %3321
        %v3323 = vsub.f32 %v3311, %v3319
        %v3324 = vsub.f32 %v3314, %v3322
        %v3325 = vmul.f32 %v3323, 1.442695
        %v3326 = vpow.pop %v3325
        %v3327 = vmul.f32 %v3324, 1.442695
        %v3328 = vpow.pop %v3327
        %v3329 = vsel %vm2086, %v3326, 0.0
        %3330 = vadd.xlane.f32.xlu0 %v3329
        %v3331 = vpop.xlane.xlu0 %3330
        %v3332 = vsel %vm3072, %v3328, 0.0
        %3333 = vadd.xlane.f32.xlu0 %v3332
        %v3334 = vpop.xlane.xlu0 %3333
        %v3335 = vrcp.pop %v3331
        %v3336 = vrcp.pop %v3334
        %v3337 = vmul.f32 %v3326, %v3335
        %v3338 = vmul.f32 %v3328, %v3336
        %v3339 = vpack.c.bf16 %v3338, %v3337
        %3340 = vrot.lane.b32.xlu0 %v3021, 112
        %v3341 = vpop.permute.xlu0 %3340
        %v3343 = vsel %vm2086, %v3339, 0
        %v3346 = vsel %vm2162, %v3341, 0
        %3348 = vmatprep.subr.bf16.mxu0 0
        %3349 = vmatpush1.bf16.msra.mxu0 %v3346
        %3350 = vmatprep.subr.bf16.mxu0 0
        %3351 = vmatpush1.bf16.msra.mxu0 0
        %3352 = vmatprep.subr.bf16.mxu0 0
        %3353 = vmatpush1.bf16.msra.mxu0 0
        %3354 = vmatprep.subr.bf16.mxu0 0
        %3355 = vmatpush1.bf16.msra.mxu0 0
        %3356 = vmatprep.subr.bf16.mxu0 0
        %3357 = vmatpush1.bf16.msra.mxu0 0
        %3358 = vmatprep.subr.bf16.mxu0 0
        %3359 = vmatpush1.bf16.msra.mxu0 0
        %3360 = vmatprep.subr.bf16.mxu0 0
        %3361 = vmatpush1.bf16.msra.mxu0 0
        %3362 = vmatprep.subr.bf16.mxu0 0
        %3363 = vmatpush1.bf16.msra.mxu0 0
        %3364 = vmatprep.subr.bf16.mxu0 0
        %3365 = vmatpush1.bf16.msra.mxu0 0
        %3366 = vmatprep.subr.bf16.mxu0 0
        %3367 = vmatpush1.bf16.msra.mxu0 0
        %3368 = vmatprep.subr.bf16.mxu0 0
        %3369 = vmatpush1.bf16.msra.mxu0 0
        %3370 = vmatprep.subr.bf16.mxu0 0
        %3371 = vmatpush1.bf16.msra.mxu0 0
        %3372 = vmatprep.subr.bf16.mxu0 0
        %3373 = vmatpush1.bf16.msra.mxu0 0
        %3374 = vmatprep.subr.bf16.mxu0 0
        %3375 = vmatpush1.bf16.msra.mxu0 0
        %3376 = vmatprep.subr.bf16.mxu0 0
        %3377 = vmatpush1.bf16.msra.mxu0 0
        %3378 = vmatprep.subr.bf16.mxu0 0
        %3379 = vmatpush1.bf16.msra.mxu0 0
        %3380 = vmatprep.mubr.bf16.mxu0 0
        %3381 = vmatmul.mubr.bf16.gmra.mrb[0].mxu0 %v3343
        %v3382 = vpop.f32.mrb[0].mxu0
        %v3383 = vadd.f32 0.0, %v3382
        %v3384 = vpop.f32.mrb[0].mxu0
        %v3385 = vpop.f32.mrb[0].mxu0
        %v3386 = vadd.f32 0.0, %v3385
        %v3387 = vpop.f32.mrb[0].mxu0
        %3388 = vdwg.mxu0
        %3389 = vrot.lane.b32.xlu0 %v3019, 104
        %v3390 = vpop.permute.xlu0 %3389
        %3391 = vrot.lane.b32.xlu0 %v3020, 104
        %v3392 = vpop.permute.xlu0 %3391
        %v3394 = vsel %vm2086, %v3390, 0
        %v3397 = vsel %vm2086, %v3392, 0
        %3399 = vmatprep.subr.bf16.mxu0 0
        %3400 = vmatpush1.bf16.xpose.msra.mxu0 %v3397
        %3401 = vmatprep.subr.bf16.mxu0 0
        %3402 = vmatpush1.bf16.xpose.msra.mxu0 0
        %3403 = vmatprep.subr.bf16.mxu0 0
        %3404 = vmatpush1.bf16.xpose.msra.mxu0 0
        %3405 = vmatprep.subr.bf16.mxu0 0
        %3406 = vmatpush1.bf16.xpose.msra.mxu0 0
        %3407 = vmatprep.subr.bf16.mxu0 0
        %3408 = vmatpush1.bf16.xpose.msra.mxu0 0
        %3409 = vmatprep.subr.bf16.mxu0 0
        %3410 = vmatpush1.bf16.xpose.msra.mxu0 0
        %3411 = vmatprep.subr.bf16.mxu0 0
        %3412 = vmatpush1.bf16.xpose.msra.mxu0 0
        %3413 = vmatprep.subr.bf16.mxu0 0
        %3414 = vmatpush1.bf16.xpose.msra.mxu0 0
        %3415 = vmatprep.subr.bf16.mxu0 0
        %3416 = vmatpush1.bf16.xpose.msra.mxu0 0
        %3417 = vmatprep.subr.bf16.mxu0 0
        %3418 = vmatpush1.bf16.xpose.msra.mxu0 0
        %3419 = vmatprep.subr.bf16.mxu0 0
        %3420 = vmatpush1.bf16.xpose.msra.mxu0 0
        %3421 = vmatprep.subr.bf16.mxu0 0
        %3422 = vmatpush1.bf16.xpose.msra.mxu0 0
        %3423 = vmatprep.subr.bf16.mxu0 0
        %3424 = vmatpush1.bf16.xpose.msra.mxu0 0
        %3425 = vmatprep.subr.bf16.mxu0 0
        %3426 = vmatpush1.bf16.xpose.msra.mxu0 0
        %3427 = vmatprep.subr.bf16.mxu0 0
        %3428 = vmatpush1.bf16.xpose.msra.mxu0 0
        %3429 = vmatprep.subr.bf16.mxu0 0
        %3430 = vmatpush1.bf16.xpose.msra.mxu0 0
        %3431 = vmatprep.mubr.bf16.mxu0 0
        %3432 = vmatmul.mubr.bf16.gmra.mrb[0].mxu0 %v3394
        %v3433 = vpop.f32.mrb[0].mxu0
        %v3434 = vadd.f32 0.0, %v3433
        %v3435 = vpop.f32.mrb[0].mxu0
        %v3436 = vpop.f32.mrb[0].mxu0
        %v3437 = vadd.f32 0.0, %v3436
        %v3438 = vpop.f32.mrb[0].mxu0
        %3439 = vdwg.mxu0
        %v3440 = vsel %vm2086, %v3434, -inf
        %3441 = vmax.xlane.f32.xlu0 %v3440
        %v3442 = vpop.xlane.xlu0 %3441
        %v3443 = vsel %vm3072, %v3437, -inf
        %3444 = vmax.xlane.f32.xlu0 %v3443
        %v3445 = vpop.xlane.xlu0 %3444
        %v3446 = vsub.f32 %v3434, %v3442
        %v3447 = vsub.f32 %v3437, %v3445
        %v3448 = vmul.f32 %v3446, 1.442695
        %v3449 = vpow.pop %v3448
        %v3450 = vmul.f32 %v3447, 1.442695
        %v3451 = vpow.pop %v3450
        %v3452 = vsel %vm2086, %v3449, 0.0
        %3453 = vadd.xlane.f32.xlu0 %v3452
        %v3454 = vpop.xlane.xlu0 %3453
        %v3455 = vsel %vm3072, %v3451, 0.0
        %3456 = vadd.xlane.f32.xlu0 %v3455
        %v3457 = vpop.xlane.xlu0 %3456
        %v3458 = vrcp.pop %v3454
        %v3459 = vrcp.pop %v3457
        %v3460 = vmul.f32 %v3449, %v3458
        %v3461 = vmul.f32 %v3451, %v3459
        %v3462 = vpack.c.bf16 %v3461, %v3460
        %3463 = vrot.lane.b32.xlu0 %v3021, 104
        %v3464 = vpop.permute.xlu0 %3463
        %v3466 = vsel %vm2086, %v3462, 0
        %v3469 = vsel %vm2162, %v3464, 0
        %3471 = vmatprep.subr.bf16.mxu0 0
        %3472 = vmatpush1.bf16.msra.mxu0 %v3469
        %3473 = vmatprep.subr.bf16.mxu0 0
        %3474 = vmatpush1.bf16.msra.mxu0 0
        %3475 = vmatprep.subr.bf16.mxu0 0
        %3476 = vmatpush1.bf16.msra.mxu0 0
        %3477 = vmatprep.subr.bf16.mxu0 0
        %3478 = vmatpush1.bf16.msra.mxu0 0
        %3479 = vmatprep.subr.bf16.mxu0 0
        %3480 = vmatpush1.bf16.msra.mxu0 0
        %3481 = vmatprep.subr.bf16.mxu0 0
        %3482 = vmatpush1.bf16.msra.mxu0 0
        %3483 = vmatprep.subr.bf16.mxu0 0
        %3484 = vmatpush1.bf16.msra.mxu0 0
        %3485 = vmatprep.subr.bf16.mxu0 0
        %3486 = vmatpush1.bf16.msra.mxu0 0
        %3487 = vmatprep.subr.bf16.mxu0 0
        %3488 = vmatpush1.bf16.msra.mxu0 0
        %3489 = vmatprep.subr.bf16.mxu0 0
        %3490 = vmatpush1.bf16.msra.mxu0 0
        %3491 = vmatprep.subr.bf16.mxu0 0
        %3492 = vmatpush1.bf16.msra.mxu0 0
        %3493 = vmatprep.subr.bf16.mxu0 0
        %3494 = vmatpush1.bf16.msra.mxu0 0
        %3495 = vmatprep.subr.bf16.mxu0 0
        %3496 = vmatpush1.bf16.msra.mxu0 0
        %3497 = vmatprep.subr.bf16.mxu0 0
        %3498 = vmatpush1.bf16.msra.mxu0 0
        %3499 = vmatprep.subr.bf16.mxu0 0
        %3500 = vmatpush1.bf16.msra.mxu0 0
        %3501 = vmatprep.subr.bf16.mxu0 0
        %3502 = vmatpush1.bf16.msra.mxu0 0
        %3503 = vmatprep.mubr.bf16.mxu0 0
        %3504 = vmatmul.mubr.bf16.gmra.mrb[0].mxu0 %v3466
        %v3505 = vpop.f32.mrb[0].mxu0
        %v3506 = vadd.f32 0.0, %v3505
        %v3507 = vpop.f32.mrb[0].mxu0
        %v3508 = vpop.f32.mrb[0].mxu0
        %v3509 = vadd.f32 0.0, %v3508
        %v3510 = vpop.f32.mrb[0].mxu0
        %3511 = vdwg.mxu0
        %3514 = vrot.lane.b32.xlu0 %v3260, 8
        %v3515 = vpop.permute.xlu0 %3514
        %3516 = vrot.lane.b32.xlu0 %v3263, 8
        %v3517 = vpop.permute.xlu0 %3516
        %3522 = vrot.lane.b32.xlu0 %v3383, 16
        %v3523 = vpop.permute.xlu0 %3522
        %3524 = vrot.lane.b32.xlu0 %v3386, 16
        %v3525 = vpop.permute.xlu0 %3524
        %3530 = vrot.lane.b32.xlu0 %v3506, 24
        %v3531 = vpop.permute.xlu0 %3530
        %3532 = vrot.lane.b32.xlu0 %v3509, 24
        %v3533 = vpop.permute.xlu0 %3532
        %v3536 = vsel %vm2086, %v3134, %v3515
        %v3537 = vsel %vm2086, %v3137, %v3517
        %v3538 = vsel %vm2743, %v3536, %v3523
        %v3539 = vsel %vm2743, %v3537, %v3525
        %v3540 = vsel %vm2746, %v3538, %v3531
        %v3541 = vsel %vm2746, %v3539, %v3533
        %v3542 = vpack.c.bf16 %v3541, %v3540
        %v3544 = vlaneseq
        %v3545 = vshrl.u32 %v3544, 7
        %v3546 = vsub.s32 0, %v3545
        %v3547 = vrot.slane %v2835, %v3546
        %v3553 = vunpack.c.l.b16 %v2831
        %v3554 = vunpack.c.l.b16 %v2832
        %v3555 = vunpack.c.l.b16 %v2833
        %v3556 = vunpack.c.l.b16 %v2834
        %v3557 = vpack.c.b16 %v3554, %v3553
        %v3558 = vpack.c.b16 %v3556, %v3555
        %v3562 = vsel %vm1755, %v3542, 0
        %3564 = vmatprep.subr.bf16.mxu0 0
        %3565 = vmatpush1.bf16.msra.mxu0 %v3557
        %3566 = vmatprep.subr.bf16.mxu0 0
        %3567 = vmatpush1.bf16.msra.mxu0 %v3558
        %3568 = vmatprep.subr.bf16.mxu0 0
        %3569 = vmatpush1.bf16.msra.mxu0 0
        %3570 = vmatprep.subr.bf16.mxu0 0
        %3571 = vmatpush1.bf16.msra.mxu0 0
        %3572 = vmatprep.subr.bf16.mxu0 0
        %3573 = vmatpush1.bf16.msra.mxu0 0
        %3574 = vmatprep.subr.bf16.mxu0 0
        %3575 = vmatpush1.bf16.msra.mxu0 0
        %3576 = vmatprep.subr.bf16.mxu0 0
        %3577 = vmatpush1.bf16.msra.mxu0 0
        %3578 = vmatprep.subr.bf16.mxu0 0
        %3579 = vmatpush1.bf16.msra.mxu0 0
        %3580 = vmatprep.subr.bf16.mxu0 0
        %3581 = vmatpush1.bf16.msra.mxu0 0
        %3582 = vmatprep.subr.bf16.mxu0 0
        %3583 = vmatpush1.bf16.msra.mxu0 0
        %3584 = vmatprep.subr.bf16.mxu0 0
        %3585 = vmatpush1.bf16.msra.mxu0 0
        %3586 = vmatprep.subr.bf16.mxu0 0
        %3587 = vmatpush1.bf16.msra.mxu0 0
        %3588 = vmatprep.subr.bf16.mxu0 0
        %3589 = vmatpush1.bf16.msra.mxu0 0
        %3590 = vmatprep.subr.bf16.mxu0 0
        %3591 = vmatpush1.bf16.msra.mxu0 0
        %3592 = vmatprep.subr.bf16.mxu0 0
        %3593 = vmatpush1.bf16.msra.mxu0 0
        %3594 = vmatprep.subr.bf16.mxu0 0
        %3595 = vmatpush1.bf16.msra.mxu0 0
        %3596 = vmatprep.mubr.bf16.mxu0 0
        %3597 = vmatmul.mubr.bf16.gmra.mrb[0].mxu0 %v3562
        %v3598 = vpop.f32.mrb[0].mxu0
        %v3599 = vadd.f32 %v3547, %v3598
        %v3600 = vpop.f32.mrb[0].mxu0
        %v3601 = vpop.f32.mrb[0].mxu0
        %v3602 = vadd.f32 %v3547, %v3601
        %v3603 = vpop.f32.mrb[0].mxu0
        %3604 = vdwg.mxu0
        %v3605 = vadd.f32 %v2812, %v3599
        %v3606 = vadd.f32 %v2813, %v3602
        %v3607 = vsel %vm1755, %v2812, 0.0
        %3608 = vadd.xlane.f32.xlu0 %v3607
        %v3609 = vpop.xlane.xlu0 %3608
        %v3610 = vsel %vm1759, %v2813, 0.0
        %3611 = vadd.xlane.f32.xlu0 %v3610
        %v3612 = vpop.xlane.xlu0 %3611
        %v3613 = vsel %vm1755, %v3605, 0.0
        %3614 = vadd.xlane.f32.xlu0 %v3613
        %v3615 = vpop.xlane.xlu0 %3614
        %v3616 = vsel %vm1759, %v3606, 0.0
        %3617 = vadd.xlane.f32.xlu0 %v3616
        %v3618 = vpop.xlane.xlu0 %3617
        %v3619 = vadd.f32 %v3609, %v3615
        %v3620 = vadd.f32 %v3612, %v3618
        %v3621 = vmul.f32 %v3619, 0.015625
        %v3622 = vmul.f32 %v3620, 0.015625
        %v3623 = vsub.f32 %v2812, %v3621
        %v3624 = vsub.f32 %v2813, %v3622
        %v3625 = vsub.f32 %v3605, %v3621
        %v3626 = vsub.f32 %v3606, %v3622
        %v3627 = vmul.f32 %v3623, %v3623
        %v3628 = vmul.f32 %v3624, %v3624
        %v3629 = vsel %vm1755, %v3627, 0.0
        %3630 = vadd.xlane.f32.xlu0 %v3629
        %v3631 = vpop.xlane.xlu0 %3630
        %v3632 = vsel %vm1759, %v3628, 0.0
        %3633 = vadd.xlane.f32.xlu0 %v3632
        %v3634 = vpop.xlane.xlu0 %3633
        %v3635 = vmul.f32 %v3625, %v3625
        %v3636 = vmul.f32 %v3626, %v3626
        %v3637 = vsel %vm1755, %v3635, 0.0
        %3638 = vadd.xlane.f32.xlu0 %v3637
        %v3639 = vpop.xlane.xlu0 %3638
        %v3640 = vsel %vm1759, %v3636, 0.0
        %3641 = vadd.xlane.f32.xlu0 %v3640
        %v3642 = vpop.xlane.xlu0 %3641
        %v3643 = vadd.f32 %v3631, %v3639
        %v3644 = vadd.f32 %v3634, %v3642
        %v3645 = vmul.f32 %v3643, 0.015625
        %v3646 = vmul.f32 %v3644, 0.015625
        %v3647 = vadd.f32 %v3645, 1e-05
        %v3648 = vadd.f32 %v3646, 1e-05
        %v3649 = vrsqrt.pop %v3647
        %v3650 = vrsqrt.pop %v3648
        %v3651 = vmul.f32 %v3623, %v3649
        %v3652 = vmul.f32 %v3624, %v3650
        %v3653 = vld [vmem:[%s1649] sm:$0x1]
        %v3655 = vlaneseq
        %v3656 = vshrl.u32 %v3655, 7
        %v3657 = vsub.s32 0, %v3656
        %v3658 = vrot.slane %v3653, %v3657
        %v3660 = vmul.f32 %v3651, %v3658
        %v3661 = vmul.f32 %v3652, %v3658
        %v3662 = vld [vmem:[%s1652] sm:$0x1]
        %v3664 = vlaneseq
        %v3665 = vshrl.u32 %v3664, 7
        %v3666 = vsub.s32 0, %v3665
        %v3667 = vrot.slane %v3662, %v3666
        %v3669 = vadd.f32 %v3660, %v3667
        %v3670 = vadd.f32 %v3661, %v3667
        %v3671 = vpack.c.bf16 %v3670, %v3669
        %v3672 = vmul.f32 %v3625, %v3649
        %v3673 = vmul.f32 %v3626, %v3650
        %v3674 = vld [vmem:[%s1655] sm:$0x1]
        %v3676 = vlaneseq
        %v3677 = vshrl.u32 %v3676, 7
        %v3678 = vsub.s32 0, %v3677
        %v3679 = vrot.slane %v3674, %v3678
        %v3681 = vmul.f32 %v3672, %v3679
        %v3682 = vmul.f32 %v3673, %v3679
        %v3683 = vld [vmem:[%s1658] sm:$0x1]
        %v3685 = vlaneseq
        %v3686 = vshrl.u32 %v3685, 7
        %v3687 = vsub.s32 0, %v3686
        %v3688 = vrot.slane %v3683, %v3687
        %v3690 = vadd.f32 %v3681, %v3688
        %v3691 = vadd.f32 %v3682, %v3688
        %v3692 = vpack.c.bf16 %v3691, %v3690
        %v3693 = vld [vmem:[%s1663] sm:$0xf]
        %v3694 = vld [vmem:[%s1663 + $0x4] sm:$0xf]
        %v3695 = vld [vmem:[%s1663 + $0x8] sm:$0xf]
        %v3696 = vld [vmem:[%s1663 + $0xc] sm:$0xf]
        %v3697 = vld [vmem:[%s1668] sm:$0xf]
        %v3698 = vld [vmem:[%s1668 + $0x4] sm:$0xf]
        %v3699 = vld [vmem:[%s1668 + $0x8] sm:$0xf]
        %v3700 = vld [vmem:[%s1668 + $0xc] sm:$0xf]
        %v3705 = vunpack.c.l.b16 %v3697
        %v3706 = vunpack.c.l.b16 %v3698
        %v3707 = vunpack.c.l.b16 %v3699
        %v3708 = vunpack.c.l.b16 %v3700
        %v3709 = vpack.c.b16 %v3706, %v3705
        %v3710 = vpack.c.b16 %v3708, %v3707
        %v3714 = vsel %vm1755, %v3692, 0
        %3716 = vmatprep.subr.bf16.mxu0 0
        %3717 = vmatpush1.bf16.msra.mxu0 %v3709
        %3718 = vmatprep.subr.bf16.mxu0 0
        %3719 = vmatpush1.bf16.msra.mxu0 %v3710
        %3720 = vmatprep.subr.bf16.mxu0 0
        %3721 = vmatpush1.bf16.msra.mxu0 0
        %3722 = vmatprep.subr.bf16.mxu0 0
        %3723 = vmatpush1.bf16.msra.mxu0 0
        %3724 = vmatprep.subr.bf16.mxu0 0
        %3725 = vmatpush1.bf16.msra.mxu0 0
        %3726 = vmatprep.subr.bf16.mxu0 0
        %3727 = vmatpush1.bf16.msra.mxu0 0
        %3728 = vmatprep.subr.bf16.mxu0 0
        %3729 = vmatpush1.bf16.msra.mxu0 0
        %3730 = vmatprep.subr.bf16.mxu0 0
        %3731 = vmatpush1.bf16.msra.mxu0 0
        %3732 = vmatprep.subr.bf16.mxu0 0
        %3733 = vmatpush1.bf16.msra.mxu0 0
        %3734 = vmatprep.subr.bf16.mxu0 0
        %3735 = vmatpush1.bf16.msra.mxu0 0
        %3736 = vmatprep.subr.bf16.mxu0 0
        %3737 = vmatpush1.bf16.msra.mxu0 0
        %3738 = vmatprep.subr.bf16.mxu0 0
        %3739 = vmatpush1.bf16.msra.mxu0 0
        %3740 = vmatprep.subr.bf16.mxu0 0
        %3741 = vmatpush1.bf16.msra.mxu0 0
        %3742 = vmatprep.subr.bf16.mxu0 0
        %3743 = vmatpush1.bf16.msra.mxu0 0
        %3744 = vmatprep.subr.bf16.mxu0 0
        %3745 = vmatpush1.bf16.msra.mxu0 0
        %3746 = vmatprep.subr.bf16.mxu0 0
        %3747 = vmatpush1.bf16.msra.mxu0 0
        %3748 = vmatprep.mubr.bf16.mxu0 0
        %3749 = vmatmul.mubr.bf16.gmra.mrb[0].mxu0 %v3714
        %v3750 = vpop.f32.mrb[0].mxu0
        %v3751 = vadd.f32 0.0, %v3750
        %v3752 = vpop.f32.mrb[0].mxu0
        %v3753 = vpop.f32.mrb[0].mxu0
        %v3754 = vadd.f32 0.0, %v3753
        %v3755 = vpop.f32.mrb[0].mxu0
        %3756 = vdwg.mxu0
        %v3761 = vunpack.c.l.b16 %v3693
        %v3762 = vunpack.c.l.b16 %v3694
        %v3763 = vunpack.c.l.b16 %v3695
        %v3764 = vunpack.c.l.b16 %v3696
        %v3765 = vpack.c.b16 %v3762, %v3761
        %v3766 = vpack.c.b16 %v3764, %v3763
        %v3770 = vsel %vm1755, %v3671, 0
        %3772 = vmatprep.subr.bf16.mxu0 0
        %3773 = vmatpush1.bf16.msra.mxu0 %v3765
        %3774 = vmatprep.subr.bf16.mxu0 0
        %3775 = vmatpush1.bf16.msra.mxu0 %v3766
        %3776 = vmatprep.subr.bf16.mxu0 0
        %3777 = vmatpush1.bf16.msra.mxu0 0
        %3778 = vmatprep.subr.bf16.mxu0 0
        %3779 = vmatpush1.bf16.msra.mxu0 0
        %3780 = vmatprep.subr.bf16.mxu0 0
        %3781 = vmatpush1.bf16.msra.mxu0 0
        %3782 = vmatprep.subr.bf16.mxu0 0
        %3783 = vmatpush1.bf16.msra.mxu0 0
        %3784 = vmatprep.subr.bf16.mxu0 0
        %3785 = vmatpush1.bf16.msra.mxu0 0
        %3786 = vmatprep.subr.bf16.mxu0 0
        %3787 = vmatpush1.bf16.msra.mxu0 0
        %3788 = vmatprep.subr.bf16.mxu0 0
        %3789 = vmatpush1.bf16.msra.mxu0 0
        %3790 = vmatprep.subr.bf16.mxu0 0
        %3791 = vmatpush1.bf16.msra.mxu0 0
        %3792 = vmatprep.subr.bf16.mxu0 0
        %3793 = vmatpush1.bf16.msra.mxu0 0
        %3794 = vmatprep.subr.bf16.mxu0 0
        %3795 = vmatpush1.bf16.msra.mxu0 0
        %3796 = vmatprep.subr.bf16.mxu0 0
        %3797 = vmatpush1.bf16.msra.mxu0 0
        %3798 = vmatprep.subr.bf16.mxu0 0
        %3799 = vmatpush1.bf16.msra.mxu0 0
        %3800 = vmatprep.subr.bf16.mxu0 0
        %3801 = vmatpush1.bf16.msra.mxu0 0
        %3802 = vmatprep.subr.bf16.mxu0 0
        %3803 = vmatpush1.bf16.msra.mxu0 0
        %3804 = vmatprep.mubr.bf16.mxu0 0
        %3805 = vmatmul.mubr.bf16.gmra.mrb[0].mxu0 %v3770
        %v3806 = vpop.f32.mrb[0].mxu0
        %v3807 = vadd.f32 %v3751, %v3806
        %v3808 = vpop.f32.mrb[0].mxu0
        %v3809 = vpop.f32.mrb[0].mxu0
        %v3810 = vadd.f32 %v3754, %v3809
        %v3811 = vpop.f32.mrb[0].mxu0
        %3812 = vdwg.mxu0
        %v3813 = vld [vmem:[%s1671] sm:$0x1]
        %v3815 = vlaneseq
        %v3816 = vshrl.u32 %v3815, 7
        %v3817 = vsub.s32 0, %v3816
        %v3818 = vrot.slane %v3813, %v3817
        %v3820 = vadd.f32 %v3807, %v3818
        %v3821 = vadd.f32 %v3810, %v3818
        %v3822 = vmul.f32 %v3820, 0.5
        %v3823 = vmul.f32 %v3821, 0.5
        %v3824 = vmul.f32 %v3820, 0.70710677
        %v3825 = vmul.f32 %v3821, 0.70710677
        %v3826 = vand.u32 2147483647, %v3824
        %v3827 = vand.u32 2147483647, %v3825
        %v3828 = vmul.f32 %v3826, 0.3275911
        %v3829 = vmul.f32 %v3827, 0.3275911
        %v3830 = vadd.f32 %v3828, 1.0
        %v3831 = vadd.f32 %v3829, 1.0
        %v3832 = vrcp.pop %v3830
        %v3833 = vmul.f32 1.0, %v3832
        %v3834 = vrcp.pop %v3831
        %v3835 = vmul.f32 1.0, %v3834
        %v3836 = vmul.f32 %v3833, 1.0614054
        %v3837 = vmul.f32 %v3835, 1.0614054
        %v3838 = vadd.f32 %v3836, -1.4531521
        %v3839 = vadd.f32 %v3837, -1.4531521
        %v3840 = vmul.f32 %v3838, %v3833
        %v3841 = vmul.f32 %v3839, %v3835
        %v3842 = vadd.f32 %v3840, 1.4214138
        %v3843 = vadd.f32 %v3841, 1.4214138
        %v3844 = vmul.f32 %v3842, %v3833
        %v3845 = vmul.f32 %v3843, %v3835
        %v3846 = vadd.f32 %v3844, -0.28449672
        %v3847 = vadd.f32 %v3845, -0.28449672
        %v3848 = vmul.f32 %v3846, %v3833
        %v3849 = vmul.f32 %v3847, %v3835
        %v3850 = vadd.f32 %v3848, 0.2548296
        %v3851 = vadd.f32 %v3849, 0.2548296
        %v3852 = vmul.f32 %v3850, %v3833
        %v3853 = vmul.f32 %v3851, %v3835
        %v3854 = vsub.f32 0.0, %v3826
        %v3855 = vsub.f32 0.0, %v3827
        %v3856 = vmul.f32 %v3854, %v3826
        %v3857 = vmul.f32 %v3855, %v3827
        %v3858 = vmul.f32 %v3856, 1.442695
        %v3859 = vpow.pop %v3858
        %v3860 = vmul.f32 %v3857, 1.442695
        %v3861 = vpow.pop %v3860
        %v3862 = vmul.f32 %v3852, %v3859
        %v3863 = vmul.f32 %v3853, %v3861
        %v3864 = vsub.f32 1.0, %v3862
        %v3865 = vsub.f32 1.0, %v3863
        %vm3866 = vcmp.ge.f32.partialorder %v3824, 0.0
        %vm3867 = vcmp.ge.f32.partialorder %v3825, 0.0
        %v3868 = vsub.f32 0.0, %v3864
        %v3869 = vsub.f32 0.0, %v3865
        %v3870 = vsel %vm3866, %v3864, %v3868
        %v3871 = vsel %vm3867, %v3865, %v3869
        %v3872 = vadd.f32 %v3870, 1.0
        %v3873 = vadd.f32 %v3871, 1.0
        %v3874 = vmul.f32 %v3822, %v3872
        %v3875 = vmul.f32 %v3823, %v3873
        %v3876 = vpack.c.bf16 %v3875, %v3874
        %v3877 = vld [vmem:[%s1676] sm:$0xf]
        %v3878 = vld [vmem:[%s1676 + $0x4] sm:$0xf]
        %v3879 = vld [vmem:[%s1676 + $0x8] sm:$0xf]
        %v3880 = vld [vmem:[%s1676 + $0xc] sm:$0xf]
        %v3881 = vld [vmem:[%s1676 + $0x10] sm:$0xf]
        %v3882 = vld [vmem:[%s1676 + $0x14] sm:$0xf]
        %v3883 = vld [vmem:[%s1676 + $0x18] sm:$0xf]
        %v3884 = vld [vmem:[%s1676 + $0x1c] sm:$0xf]
        %v3885 = vld [vmem:[%s1679] sm:$0x1]
        %v3887 = vlaneseq
        %v3888 = vshrl.u32 %v3887, 7
        %v3889 = vsub.s32 0, %v3888
        %v3890 = vrot.slane %v3885, %v3889
        %v3900 = vunpack.c.l.b16 %v3877
        %v3901 = vunpack.c.l.b16 %v3878
        %v3902 = vunpack.c.l.b16 %v3879
        %v3903 = vunpack.c.l.b16 %v3880
        %v3904 = vunpack.c.l.b16 %v3881
        %v3905 = vunpack.c.l.b16 %v3882
        %v3906 = vunpack.c.l.b16 %v3883
        %v3907 = vunpack.c.l.b16 %v3884
        %v3908 = vpack.c.b16 %v3901, %v3900
        %v3909 = vpack.c.b16 %v3903, %v3902
        %v3910 = vpack.c.b16 %v3905, %v3904
        %v3911 = vpack.c.b16 %v3907, %v3906
        %vm3916 = vcmask 523264
        %v3918 = vsel %vm3916, %v3876, 0
        %3920 = vmatprep.subr.bf16.mxu0 0
        %3921 = vmatpush1.bf16.msra.mxu0 %v3908
        %3922 = vmatprep.subr.bf16.mxu0 0
        %3923 = vmatpush1.bf16.msra.mxu0 %v3909
        %3924 = vmatprep.subr.bf16.mxu0 0
        %3925 = vmatpush1.bf16.msra.mxu0 %v3910
        %3926 = vmatprep.subr.bf16.mxu0 0
        %3927 = vmatpush1.bf16.msra.mxu0 %v3911
        %3928 = vmatprep.subr.bf16.mxu0 0
        %3929 = vmatpush1.bf16.msra.mxu0 0
        %3930 = vmatprep.subr.bf16.mxu0 0
        %3931 = vmatpush1.bf16.msra.mxu0 0
        %3932 = vmatprep.subr.bf16.mxu0 0
        %3933 = vmatpush1.bf16.msra.mxu0 0
        %3934 = vmatprep.subr.bf16.mxu0 0
        %3935 = vmatpush1.bf16.msra.mxu0 0
        %3936 = vmatprep.subr.bf16.mxu0 0
        %3937 = vmatpush1.bf16.msra.mxu0 0
        %3938 = vmatprep.subr.bf16.mxu0 0
        %3939 = vmatpush1.bf16.msra.mxu0 0
        %3940 = vmatprep.subr.bf16.mxu0 0
        %3941 = vmatpush1.bf16.msra.mxu0 0
        %3942 = vmatprep.subr.bf16.mxu0 0
        %3943 = vmatpush1.bf16.msra.mxu0 0
        %3944 = vmatprep.subr.bf16.mxu0 0
        %3945 = vmatpush1.bf16.msra.mxu0 0
        %3946 = vmatprep.subr.bf16.mxu0 0
        %3947 = vmatpush1.bf16.msra.mxu0 0
        %3948 = vmatprep.subr.bf16.mxu0 0
        %3949 = vmatpush1.bf16.msra.mxu0 0
        %3950 = vmatprep.subr.bf16.mxu0 0
        %3951 = vmatpush1.bf16.msra.mxu0 0
        %3952 = vmatprep.mubr.bf16.mxu0 0
        %3953 = vmatmul.mubr.bf16.gmra.mrb[0].mxu0 %v3918
        %v3954 = vpop.f32.mrb[0].mxu0
        %v3955 = vadd.f32 %v3890, %v3954
        %v3956 = vpop.f32.mrb[0].mxu0
        %v3957 = vpop.f32.mrb[0].mxu0
        %v3958 = vadd.f32 %v3890, %v3957
        %v3959 = vpop.f32.mrb[0].mxu0
        %3960 = vdwg.mxu0
        %v3961 = vadd.f32 %v2812, %v3955
        %v3962 = vadd.f32 %v2813, %v3958
        %3963 = vst.msk [vmem:[#allocation2] sm:$0xff] %vm1755, %v3961
        %3964 = vst.msk [vmem:[#allocation2 + $0x8] sm:$0x1] %vm1759, %v3962
        %p3965 = scmp.eq.s32.totalorder %s100, 1
        // Predicated region
        $region189: #{gt_forward.1} parent=175 // pred_check
          %p3966 = pneg %p3965
        $region190: #{gt_forward.1} parent=175 // pred_check_branch
          %3968 = sbr.rel (%p3966) target = $region192
        $region191: #{gt_forward.1} parent=175 // pred_region
          %v3969 = vld [vmem:[%s71] sm:$0x1]
          %v3970 = vld [vmem:[%s73] sm:$0x1]
          %v3971 = vsel %vm1759, %v3961, 0.0
          %3972 = vadd.xlane.f32.xlu0 %v3971
          %v3973 = vpop.xlane.xlu0 %3972
          %v3974 = vmul.f32 %v3973, %v1763
          %v3975 = vsub.f32 %v3961, %v3974
          %v3976 = vmul.f32 %v3975, %v3975
          %v3977 = vsel %vm1759, %v3976, 0.0
          %3978 = vadd.xlane.f32.xlu0 %v3977
          %v3979 = vpop.xlane.xlu0 %3978
          %v3980 = vmul.f32 %v3979, %v1763
          %v3981 = vadd.f32 %v3980, 1e-05
          %v3982 = vrsqrt.pop %v3981
          %v3983 = vmul.f32 %v3975, %v3982
          %v3984 = vmul.f32 %v3983, %v3969
          %v3985 = vadd.f32 %v3984, %v3970
          %v3986 = vpack.c.bf16 %v3985, %v3985
          %v3987 = vld [vmem:[%s75] sm:$0xf]
          %v3988 = vld [vmem:[%s75 + $0x4] sm:$0xf]
          %v3989 = vld [vmem:[%s75 + $0x8] sm:$0xf]
          %v3990 = vld [vmem:[%s75 + $0xc] sm:$0xf]
          %v3991 = vld [vmem:[%s77] sm:$0x1]
          %v3996 = vunpack.c.l.b16 %v3987
          %v3997 = vunpack.c.l.b16 %v3988
          %v3998 = vunpack.c.l.b16 %v3989
          %v3999 = vunpack.c.l.b16 %v3990
          %v4000 = vpack.c.b16 %v3997, %v3996
          %v4001 = vpack.c.b16 %v3999, %v3998
          %v4005 = vsel %vm1755, %v3986, 0
          %4007 = vmatprep.subr.bf16.mxu0 0
          %4008 = vmatpush1.bf16.msra.mxu0 %v4000
          %4009 = vmatprep.subr.bf16.mxu0 0
          %4010 = vmatpush1.bf16.msra.mxu0 %v4001
          %4011 = vmatprep.subr.bf16.mxu0 0
          %4012 = vmatpush1.bf16.msra.mxu0 0
          %4013 = vmatprep.subr.bf16.mxu0 0
          %4014 = vmatpush1.bf16.msra.mxu0 0
          %4015 = vmatprep.subr.bf16.mxu0 0
          %4016 = vmatpush1.bf16.msra.mxu0 0
          %4017 = vmatprep.subr.bf16.mxu0 0
          %4018 = vmatpush1.bf16.msra.mxu0 0
          %4019 = vmatprep.subr.bf16.mxu0 0
          %4020 = vmatpush1.bf16.msra.mxu0 0
          %4021 = vmatprep.subr.bf16.mxu0 0
          %4022 = vmatpush1.bf16.msra.mxu0 0
          %4023 = vmatprep.subr.bf16.mxu0 0
          %4024 = vmatpush1.bf16.msra.mxu0 0
          %4025 = vmatprep.subr.bf16.mxu0 0
          %4026 = vmatpush1.bf16.msra.mxu0 0
          %4027 = vmatprep.subr.bf16.mxu0 0
          %4028 = vmatpush1.bf16.msra.mxu0 0
          %4029 = vmatprep.subr.bf16.mxu0 0
          %4030 = vmatpush1.bf16.msra.mxu0 0
          %4031 = vmatprep.subr.bf16.mxu0 0
          %4032 = vmatpush1.bf16.msra.mxu0 0
          %4033 = vmatprep.subr.bf16.mxu0 0
          %4034 = vmatpush1.bf16.msra.mxu0 0
          %4035 = vmatprep.subr.bf16.mxu0 0
          %4036 = vmatpush1.bf16.msra.mxu0 0
          %4037 = vmatprep.subr.bf16.mxu0 0
          %4038 = vmatpush1.bf16.msra.mxu0 0
          %4039 = vmatprep.mubr.bf16.mxu0 0
          %4040 = vmatmul.mubr.bf16.gmra.mrb[0].mxu0 %v4005
          %v4041 = vpop.f32.mrb[0].mxu0
          %v4042 = vadd.f32 %v3991, %v4041
          %v4043 = vpop.f32.mrb[0].mxu0
          %v4044 = vpop.f32.mrb[0].mxu0
          %v4045 = vpop.f32.mrb[0].mxu0
          %4046 = vdwg.mxu0
          %vm4047 = vcmask 1040384
          %v4048 = vsel %vm4047, %v4042, -inf
          %4049 = vmax.xlane.f32.xlu0 %v4048
          %v4050 = vpop.xlane.xlu0 %4049
          %v4051 = vsub.f32 %v4042, %v4050
          %v4052 = vmul.f32 %v4051, 1.442695
          %v4053 = vpow.pop %v4052
          %v4054 = vsel %vm4047, %v4053, 0.0
          %4055 = vadd.xlane.f32.xlu0 %v4054
          %v4056 = vpop.xlane.xlu0 %4055
          %v4057 = vlog2.pop %v4056
          %v4058 = vmul.f32 %v4057, 0.6931472
          %v4059 = vsub.f32 %v4051, %v4058
          %4060 = vst [vmem:[%s1567] sm:$0x1] %v4059
        $region192: #{gt_forward.1} parent=175 // pred_fallthru
          _
        %s4061 = sand.u32 %s1079, 1
        %s4062 = scalar_lea.sflag [#allocation4], %s4061
        %s4063 = sand.u32 %s1079, 1
        %s4064 = scalar_lea.vmem [#allocation8], %s4063
        // Predicated region
        $region193: #{gt_forward.1} parent=175 // pred_check
          %p4065 = pneg %p1089
        $region194: #{gt_forward.1} parent=175 // pred_check_branch
          %4067 = sbr.rel (%p4065) target = $region196
        $region195: #{gt_forward.1} parent=175 // pred_region
          %s4069 = ssub.s32 16, 16
          %4070 = vsyncadd %s4062, %s4069
          %s4071 = smul.addr %s99, 16
          %s4072 = scalar_lea.hbm %s79, %s4071
          %s4074 = sshll.u32 %s4064, 4
          %s4075 = int_to_ptr.vmem [resolvable:$true] %s4074
          %4077 = dma.vmem_to_hbm [thread:$0]  %s4075, 16, %s4072, %s4062
        $region196: #{gt_forward.1} parent=175 // pred_fallthru
          _
      $region176: #{gt_forward.1} parent=5 // pred_fallthru
        _
      %p4078 = scmp.le.s32.totalorder 2, %s90
      // Predicated region
      $region197: #{gt_forward.1} parent=5 // pred_check
        %p4079 = pneg %p4078
      $region198: #{gt_forward.1} parent=5 // pred_check_branch
        %4081 = sbr.rel (%p4079) target = $region200
      $region199: #{gt_forward.1} parent=5 // pred_region
        %s4082 = ssub.s32 %s90, 2
        // Predicated region
        $region201: #{gt_forward.1} parent=199 // pred_check
          %p4083 = pneg %p1095
        $region202: #{gt_forward.1} parent=199 // pred_check_branch
          %4085 = sbr.rel (%p4083) target = $region204
        $region203: #{gt_forward.1} parent=199 // pred_region
          %s4086 = sand.u32 %s1080, 1
          %s4087 = scalar_lea.sflag [#allocation4], %s4086
          %s4088 = sand.u32 %s1080, 1
          %s4089 = scalar_lea.vmem [#allocation8], %s4088
          %4090 = dma.done %s4087, 16
        $region204: #{gt_forward.1} parent=199 // pred_fallthru
          _
      $region200: #{gt_forward.1} parent=5 // pred_fallthru
        _
    $region6: #{gt_forward.1} parent=1 // loop_footer
      %s94 = sadd.s32 1, %s90
    $region7: #{gt_forward.1} parent=1 // loop_footer_branch
      %89 = sbr.rel target = $region3
    $region8: #{gt_forward.1} parent=1 // loop_exit
      _
    %4091 = vsyncpa [#allocation4], 1
    %s4092 = scalar_lea.sflag [#allocation4], 1
    %4093 = vsyncpa %s4092, 1
    %4094 = vsyncpa [#allocation5], 1
    %s4095 = scalar_lea.sflag [#allocation5], 1
    %4096 = vsyncpa %s4095, 1
    %4097 = vsyncpa [#allocation7], 1

</llo_original>
